<compile_context>
chip_gen: v7x
topology: tpu7x:2x2x1
jax: 0.10.0
libtpu: 0.0.40
codegen_flags: <defaults>
</compile_context>

<pallas_src>
import functools

import jax
import jax.numpy as jnp
from jax import lax
from jax.experimental import pallas as pl
from jax.experimental.pallas import tpu as pltpu


def _fire_kernel(x_ref, ws_ref, bs_ref, we_ref, bc_ref, o_ref, s_scr, a_scr,
                 *, TH, W, S):
    """Fused squeeze(1x1)+ReLU -> [expand1x1 | expand3x3] for one row block.

    x_ref  : (1, (H+2)*(W+2), Cin) bf16   zero-halo'd input, spatially flat
    ws_ref : (Cin, S)              bf16   squeeze weight
    bs_ref : (1, S)                f32    squeeze bias
    we_ref : (9*S, E1+E3p)         bf16   combined expand weight (tap-major)
    bc_ref : (1, E1+E3p)           f32    concatenated [b1 | b3] bias
    o_ref  : (1, TH*W, E1+E3p)            output block, spatially flat
    s_scr  : (TH+2, W+2, S)        bf16   halo'd squeeze tile
    a_scr  : (TH, W, 9*S)          bf16   lane-packed im2col LHS
    """
    hb = pl.program_id(1)
    WP = W + 2
    n_win = (TH + 2) * WP
    r0 = pl.multiple_of(hb * (TH * WP), TH * WP)  # first flat padded-input row

    # ---- squeeze 1x1 + ReLU over the halo'd row window (flat spatial) ------
    a_sq = x_ref[0, pl.ds(r0, n_win), :]                      # (n_win, Cin) bf16
    s = jnp.dot(a_sq, ws_ref[...], preferred_element_type=jnp.float32)
    s = jnp.maximum(s + bs_ref[...], 0.0)
    s_scr[...] = s.reshape(TH + 2, WP, S).astype(s_scr.dtype)

    # ---- zero the squeeze-output halo (ReLU(bias) at input-pad positions) --
    zcol = jnp.zeros((TH + 2, 1, S), s_scr.dtype)
    s_scr[:, 0:1, :] = zcol
    s_scr[:, W + 1:W + 2, :] = zcol

    @pl.when(hb == 0)
    def _():
        s_scr[0:1, :, :] = jnp.zeros((1, WP, S), s_scr.dtype)

    @pl.when(hb == pl.num_programs(1) - 1)
    def _():
        s_scr[TH + 1:TH + 2, :, :] = jnp.zeros((1, WP, S), s_scr.dtype)

    # ---- lane-packed im2col: tap t=(di,dj) -> lane slab [t*S, (t+1)*S) ------
    for t in range(9):
        di, dj = divmod(t, 3)
        a_scr[:, :, t * S:(t + 1) * S] = s_scr[di:di + TH, dj:dj + W, :]

    # ---- one fused matmul emits the concatenated [e1x1 | e3x3] block -------
    a = a_scr[...].reshape(TH * W, 9 * S)
    acc = jnp.dot(a, we_ref[...], preferred_element_type=jnp.float32)
    o_ref[0] = (acc + bc_ref[...]).astype(o_ref.dtype)


def fire_module_pallas(x, ws, bs, w1, b1, w3, b3, *, tile_h=None,
                       out_dtype=None, max_rows=2048):
    """FireModule forward.  x: NCHW (f32); weights in PyTorch OIHW layout."""
    B, C_in, H, W = x.shape
    S = ws.shape[0]
    E1 = w1.shape[0]
    E3 = w3.shape[0]
    out_dtype = x.dtype if out_dtype is None else out_dtype

    # NHWC + one-pixel zero halo, bf16 operands, spatially flattened.
    x_nhwc = jnp.transpose(x, (0, 2, 3, 1))
    x_pad = jnp.pad(x_nhwc, ((0, 0), (1, 1), (1, 1), (0, 0))).astype(jnp.bfloat16)
    x_flat = x_pad.reshape(B, (H + 2) * (W + 2), C_in)

    # Squeeze weight / bias as matmul matrices.
    ws_m = ws.reshape(S, C_in).T.astype(jnp.bfloat16)                  # (Cin, S)
    bs_m = bs.reshape(1, S).astype(jnp.float32)

    # Combined expand weight: rows tap-major (9*S), columns [e1x1 | e3x3_pad].
    n_total = E1 + E3
    n_pad = (-n_total) % 128                       # lane-dense output width
    E3p = E3 + n_pad
    n_out = E1 + E3p
    w3_t = jnp.transpose(w3, (2, 3, 1, 0)).reshape(9, S, E3)           # (tap,S,E3)
    w_exp = jnp.zeros((9, S, n_out), jnp.float32)
    w_exp = w_exp.at[4, :, :E1].set(w1.reshape(E1, S).T)               # center tap
    w_exp = w_exp.at[:, :, E1:E1 + E3].set(w3_t)
    w_exp = w_exp.reshape(9 * S, n_out).astype(jnp.bfloat16)
    b_cat = jnp.concatenate(
        [b1, b3, jnp.zeros((n_pad,), b3.dtype)]).reshape(1, n_out).astype(jnp.float32)

    # Row tile: largest divisor of H with TH*W <= max_rows and a sublane-legal
    # flattened block (TH*W % 8 == 0, or the full image).
    if tile_h is None:
        cands = [d for d in range(1, H + 1)
                 if H % d == 0 and ((d * W) % 8 == 0 or d == H)]
        fits = [d for d in cands if d * W <= max_rows]
        tile_h = max(fits) if fits else min(cands)
    TH = tile_h
    if H % TH != 0 or not ((TH * W) % 8 == 0 or TH == H):
        raise ValueError(f"tile_h={TH} must divide H={H} with TH*W % 8 == 0")
    grid = (B, H // TH)

    kernel = functools.partial(_fire_kernel, TH=TH, W=W, S=S)

    # Rough VMEM budget (double-buffered blocks + scratches) -> scoped limit.
    def _nbytes(shape, dt):
        n = 1
        for d in shape:
            n *= d
        return n * jnp.dtype(dt).itemsize

    vmem_est = (
        2 * _nbytes((1, (H + 2) * (W + 2), C_in), jnp.bfloat16)
        + 2 * (_nbytes((C_in, S), jnp.bfloat16) + _nbytes((1, S), jnp.float32)
               + _nbytes((9 * S, n_out), jnp.bfloat16)
               + _nbytes((1, n_out), jnp.float32))
        + 2 * _nbytes((1, TH * W, n_out), out_dtype)
        + _nbytes((TH + 2, W + 2, S), jnp.bfloat16)
        + _nbytes((TH, W, 9 * S), jnp.bfloat16)
        + (4 << 20))
    vmem_limit = int(min(max(vmem_est, 32 << 20), 64 << 20))

    flops = 2 * B * ((H + 2) * (W + 2) * C_in * S + H * W * 9 * S * n_out)
    bytes_accessed = (x_flat.size * 2 + ws_m.size * 2 + w_exp.size * 2
                      + (bs_m.size + b_cat.size) * 4
                      + B * H * W * n_out * jnp.dtype(out_dtype).itemsize)

    out = pl.pallas_call(
        kernel,
        out_shape=jax.ShapeDtypeStruct((B, H * W, n_out), out_dtype),
        grid_spec=pltpu.PrefetchScalarGridSpec(
            num_scalar_prefetch=0,
            grid=grid,
            in_specs=[
                # Full padded image of one batch element (block index constant
                # along the row-block axis -> re-DMA'd only when b changes).
                pl.BlockSpec((1, (H + 2) * (W + 2), C_in),
                             lambda b, h: (b, 0, 0)),
                pl.BlockSpec((C_in, S), lambda b, h: (0, 0)),
                pl.BlockSpec((1, S), lambda b, h: (0, 0)),
                pl.BlockSpec((9 * S, n_out), lambda b, h: (0, 0)),
                pl.BlockSpec((1, n_out), lambda b, h: (0, 0)),
            ],
            out_specs=pl.BlockSpec((1, TH * W, n_out), lambda b, h: (b, h, 0)),
            scratch_shapes=[
                pltpu.VMEM((TH + 2, W + 2, S), jnp.bfloat16),
                pltpu.VMEM((TH, W, 9 * S), jnp.bfloat16),
            ],
        ),
        compiler_params=pltpu.CompilerParams(
            dimension_semantics=("parallel", "parallel"),
            vmem_limit_bytes=vmem_limit),
        cost_estimate=pl.CostEstimate(
            flops=int(flops), transcendentals=0,
            bytes_accessed=int(bytes_accessed)),
    )(x_flat, ws_m, bs_m, w_exp, b_cat)

    # Drop lane padding, restore NCHW (kept only to match PyTorch semantics).
    if n_pad:
        out = out[..., :n_total]
    out = out.reshape(B, H, W, n_total)
    return jnp.transpose(out, (0, 3, 1, 2))


def _reference_fire(x, ws, bs, w1, b1, w3, b3):
    def conv(v, w, b, pad):
        o = lax.conv_general_dilated(
            v, w, window_strides=(1, 1),
            padding=((pad, pad), (pad, pad)),
            dimension_numbers=("NCHW", "OIHW", "NCHW"))
        return o + b.reshape(1, -1, 1, 1)

    s = jnp.maximum(conv(x, ws, bs, 0), 0.0)       # squeeze1x1 + ReLU
    o1 = conv(s, w1, b1, 0)                        # expand1x1 (no act)
    o2 = conv(s, w3, b3, 1)                        # expand3x3 (no act)
    return jnp.concatenate([o1, o2], axis=1)       # cat on channel dim


if __name__ == "__main__":
    # FireModule(in_channels=16, s1x1=8, e1x1=64, e3x3=64) on a small input.
    B, C_in, H, W = 2, 16, 16, 16
    S, E1, E3 = 8, 64, 64

    key = jax.random.PRNGKey(0)
    kx, k1, k2, k3, k4, k5, k6 = jax.random.split(key, 7)
    x = jax.random.normal(kx, (B, C_in, H, W), dtype=jnp.float32)
    ws = jax.random.normal(k1, (S, C_in, 1, 1), dtype=jnp.float32) * 0.1
    bs = jax.random.normal(k2, (S,), dtype=jnp.float32) * 0.1
    w1 = jax.random.normal(k3, (E1, S, 1, 1), dtype=jnp.float32) * 0.1
    b1 = jax.random.normal(k4, (E1,), dtype=jnp.float32) * 0.1
    w3 = jax.random.normal(k5, (E3, S, 3, 3), dtype=jnp.float32) * 0.1
    b3 = jax.random.normal(k6, (E3,), dtype=jnp.float32) * 0.1

    out = fire_module_pallas(x, ws, bs, w1, b1, w3, b3)
    out = jax.block_until_ready(out)

    ref = _reference_fire(x, ws, bs, w1, b1, w3, b3)
    assert out.shape == ref.shape == (B, E1 + E3, H, W)
    # bf16 MXU operands with f32 accumulation -> slightly looser tolerance.
    assert jnp.allclose(out, ref, atol=2e-2, rtol=2e-2)

    print("KERNEL_OK")
</pallas_src>

<mosaic_0001>
module attributes {stable_mosaic.version = 11 : i64} {
  func.func @_fire_kernel(%arg0: i32, %arg1: i32, %arg2: memref<1x324x16xbf16, #tpu.memory_space<vmem>>, %arg3: memref<16x8xbf16, #tpu.memory_space<vmem>>, %arg4: memref<1x8xf32, #tpu.memory_space<vmem>>, %arg5: memref<72x128xbf16, #tpu.memory_space<vmem>>, %arg6: memref<1x128xf32, #tpu.memory_space<vmem>>, %arg7: memref<1x256x128xf32, #tpu.memory_space<vmem>>, %arg8: memref<18x18x8xbf16, #tpu.memory_space<vmem>>, %arg9: memref<16x16x72xbf16, #tpu.memory_space<vmem>>) attributes {dimension_semantics = [#tpu.dimension_semantics<parallel>, #tpu.dimension_semantics<parallel>], iteration_bounds = array<i64: 2, 1>, scalar_prefetch = 0 : i64, scratch_operands = 2 : i64, tpu.core_type = #tpu.core_type<tc>, window_params = [{transform_indices = @transform_0, window_bounds = array<i64: 1, 324, 16>}, {pipeline_mode = #tpu.pipeline_mode<synchronous>, transform_indices = @transform_1, window_bounds = array<i64: 16, 8>}, {pipeline_mode = #tpu.pipeline_mode<synchronous>, transform_indices = @transform_2, window_bounds = array<i64: 1, 8>}, {pipeline_mode = #tpu.pipeline_mode<synchronous>, transform_indices = @transform_3, window_bounds = array<i64: 72, 128>}, {pipeline_mode = #tpu.pipeline_mode<synchronous>, transform_indices = @transform_4, window_bounds = array<i64: 1, 128>}, {transform_indices = @transform_5, window_bounds = array<i64: 1, 256, 128>}]} {
    %c288_i32 = arith.constant 288 : i32
    %0 = arith.muli %arg1, %c288_i32 : i32
    %1 = tpu.assume_multiple %0, 288 : i32
    %c0 = arith.constant 0 : index
    %2 = arith.index_cast %1 : i32 to index
    %c0_0 = arith.constant 0 : index
    %3 = vector.load %arg2[%c0, %2, %c0_0] : memref<1x324x16xbf16, #tpu.memory_space<vmem>>, vector<1x324x16xbf16>
    %4 = vector.shape_cast %3 : vector<1x324x16xbf16> to vector<324x16xbf16>
    %c0_1 = arith.constant 0 : index
    %c0_2 = arith.constant 0 : index
    %5 = vector.load %arg3[%c0_1, %c0_2] : memref<16x8xbf16, #tpu.memory_space<vmem>>, vector<16x8xbf16>
    %cst = arith.constant dense<0.000000e+00> : vector<324x8xf32>
    %6 = tpu.matmul %4, %5, %cst {dimension_numbers = #tpu.dot_dimension_numbers<[1], [0], [0], [1], [0, 0, 1, 1], [], []>} : vector<324x16xbf16>, vector<16x8xbf16>, vector<324x8xf32> -> vector<324x8xf32>
    %c0_3 = arith.constant 0 : index
    %c0_4 = arith.constant 0 : index
    %7 = vector.load %arg4[%c0_3, %c0_4] : memref<1x8xf32, #tpu.memory_space<vmem>>, vector<1x8xf32>
    %8 = vector.broadcast %7 : vector<1x8xf32> to vector<324x8xf32>
    %9 = arith.addf %6, %8 : vector<324x8xf32>
    %cst_5 = arith.constant 0.000000e+00 : f32
    %10 = vector.broadcast %cst_5 : f32 to vector<324x8xf32>
    %11 = arith.maximumf %9, %10 : vector<324x8xf32>
    %12 = vector.shape_cast %11 : vector<324x8xf32> to vector<18x18x8xf32>
    %13 = arith.truncf %12 : vector<18x18x8xf32> to vector<18x18x8xbf16>
    %c0_6 = arith.constant 0 : index
    %c0_7 = arith.constant 0 : index
    %c0_8 = arith.constant 0 : index
    %14 = vector.load %arg8[%c0_6, %c0_7, %c0_8] : memref<18x18x8xbf16, #tpu.memory_space<vmem>>, vector<18x18x8xbf16>
    tpu.vector_store %arg8[%c0_6, %c0_7, %c0_8], %13 {strides = array<i32>} : memref<18x18x8xbf16, #tpu.memory_space<vmem>>, vector<18x18x8xbf16>,
    %cst_9 = arith.constant 0.000000e+00 : bf16
    %15 = vector.broadcast %cst_9 : bf16 to vector<18x1x8xbf16>
    %c0_10 = arith.constant 0 : index
    %c0_11 = arith.constant 0 : index
    %c0_12 = arith.constant 0 : index
    %16 = vector.load %arg8[%c0_10, %c0_11, %c0_12] : memref<18x18x8xbf16, #tpu.memory_space<vmem>>, vector<18x1x8xbf16>
    tpu.vector_store %arg8[%c0_10, %c0_11, %c0_12], %15 {strides = array<i32>} : memref<18x18x8xbf16, #tpu.memory_space<vmem>>, vector<18x1x8xbf16>,
    %c0_13 = arith.constant 0 : index
    %c17 = arith.constant 17 : index
    %c0_14 = arith.constant 0 : index
    %17 = vector.load %arg8[%c0_13, %c17, %c0_14] : memref<18x18x8xbf16, #tpu.memory_space<vmem>>, vector<18x1x8xbf16>
    tpu.vector_store %arg8[%c0_13, %c17, %c0_14], %15 {strides = array<i32>} : memref<18x18x8xbf16, #tpu.memory_space<vmem>>, vector<18x1x8xbf16>,
    %c0_i32 = arith.constant 0 : i32
    %18 = arith.cmpi eq, %arg1, %c0_i32 : i32
    %19 = arith.extui %18 : i1 to i32
    %c0_i32_15 = arith.constant 0 : i32
    %20 = arith.cmpi ne, %19, %c0_i32_15 : i32
    scf.if %20 {
      %cst_73 = arith.constant 0.000000e+00 : bf16
      %52 = vector.broadcast %cst_73 : bf16 to vector<1x18x8xbf16>
      %c0_74 = arith.constant 0 : index
      %c0_75 = arith.constant 0 : index
      %c0_76 = arith.constant 0 : index
      %53 = vector.load %arg8[%c0_74, %c0_75, %c0_76] : memref<18x18x8xbf16, #tpu.memory_space<vmem>>, vector<1x18x8xbf16>
      tpu.vector_store %arg8[%c0_74, %c0_75, %c0_76], %52 {strides = array<i32>} : memref<18x18x8xbf16, #tpu.memory_space<vmem>>, vector<1x18x8xbf16>,
    } else {
    }
    %c0_i32_16 = arith.constant 0 : i32
    %21 = arith.cmpi eq, %arg1, %c0_i32_16 : i32
    %22 = arith.extui %21 : i1 to i32
    %c0_i32_17 = arith.constant 0 : i32
    %23 = arith.cmpi ne, %22, %c0_i32_17 : i32
    scf.if %23 {
      %cst_73 = arith.constant 0.000000e+00 : bf16
      %52 = vector.broadcast %cst_73 : bf16 to vector<1x18x8xbf16>
      %c17_74 = arith.constant 17 : index
      %c0_75 = arith.constant 0 : index
      %c0_76 = arith.constant 0 : index
      %53 = vector.load %arg8[%c17_74, %c0_75, %c0_76] : memref<18x18x8xbf16, #tpu.memory_space<vmem>>, vector<1x18x8xbf16>
      tpu.vector_store %arg8[%c17_74, %c0_75, %c0_76], %52 {strides = array<i32>} : memref<18x18x8xbf16, #tpu.memory_space<vmem>>, vector<1x18x8xbf16>,
    } else {
    }
    %c0_18 = arith.constant 0 : index
    %c0_19 = arith.constant 0 : index
    %c0_20 = arith.constant 0 : index
    %24 = vector.load %arg8[%c0_18, %c0_19, %c0_20] : memref<18x18x8xbf16, #tpu.memory_space<vmem>>, vector<16x16x8xbf16>
    %c0_21 = arith.constant 0 : index
    %c0_22 = arith.constant 0 : index
    %c0_23 = arith.constant 0 : index
    %25 = vector.load %arg9[%c0_21, %c0_22, %c0_23] : memref<16x16x72xbf16, #tpu.memory_space<vmem>>, vector<16x16x8xbf16>
    tpu.vector_store %arg9[%c0_21, %c0_22, %c0_23], %24 {strides = array<i32>} : memref<16x16x72xbf16, #tpu.memory_space<vmem>>, vector<16x16x8xbf16>,
    %c0_24 = arith.constant 0 : index
    %c1 = arith.constant 1 : index
    %c0_25 = arith.constant 0 : index
    %26 = vector.load %arg8[%c0_24, %c1, %c0_25] : memref<18x18x8xbf16, #tpu.memory_space<vmem>>, vector<16x16x8xbf16>
    %c0_26 = arith.constant 0 : index
    %c0_27 = arith.constant 0 : index
    %c8 = arith.constant 8 : index
    %27 = vector.load %arg9[%c0_26, %c0_27, %c8] : memref<16x16x72xbf16, #tpu.memory_space<vmem>>, vector<16x16x8xbf16>
    tpu.vector_store %arg9[%c0_26, %c0_27, %c8], %26 {strides = array<i32>} : memref<16x16x72xbf16, #tpu.memory_space<vmem>>, vector<16x16x8xbf16>,
    %c0_28 = arith.constant 0 : index
    %c2 = arith.constant 2 : index
    %c0_29 = arith.constant 0 : index
    %28 = vector.load %arg8[%c0_28, %c2, %c0_29] : memref<18x18x8xbf16, #tpu.memory_space<vmem>>, vector<16x16x8xbf16>
    %c0_30 = arith.constant 0 : index
    %c0_31 = arith.constant 0 : index
    %c16 = arith.constant 16 : index
    %29 = vector.load %arg9[%c0_30, %c0_31, %c16] : memref<16x16x72xbf16, #tpu.memory_space<vmem>>, vector<16x16x8xbf16>
    tpu.vector_store %arg9[%c0_30, %c0_31, %c16], %28 {strides = array<i32>} : memref<16x16x72xbf16, #tpu.memory_space<vmem>>, vector<16x16x8xbf16>,
    %c1_32 = arith.constant 1 : index
    %c0_33 = arith.constant 0 : index
    %c0_34 = arith.constant 0 : index
    %30 = vector.load %arg8[%c1_32, %c0_33, %c0_34] : memref<18x18x8xbf16, #tpu.memory_space<vmem>>, vector<16x16x8xbf16>
    %c0_35 = arith.constant 0 : index
    %c0_36 = arith.constant 0 : index
    %c24 = arith.constant 24 : index
    %31 = vector.load %arg9[%c0_35, %c0_36, %c24] : memref<16x16x72xbf16, #tpu.memory_space<vmem>>, vector<16x16x8xbf16>
    tpu.vector_store %arg9[%c0_35, %c0_36, %c24], %30 {strides = array<i32>} : memref<16x16x72xbf16, #tpu.memory_space<vmem>>, vector<16x16x8xbf16>,
    %c1_37 = arith.constant 1 : index
    %c1_38 = arith.constant 1 : index
    %c0_39 = arith.constant 0 : index
    %32 = vector.load %arg8[%c1_37, %c1_38, %c0_39] : memref<18x18x8xbf16, #tpu.memory_space<vmem>>, vector<16x16x8xbf16>
    %c0_40 = arith.constant 0 : index
    %c0_41 = arith.constant 0 : index
    %c32 = arith.constant 32 : index
    %33 = vector.load %arg9[%c0_40, %c0_41, %c32] : memref<16x16x72xbf16, #tpu.memory_space<vmem>>, vector<16x16x8xbf16>
    tpu.vector_store %arg9[%c0_40, %c0_41, %c32], %32 {strides = array<i32>} : memref<16x16x72xbf16, #tpu.memory_space<vmem>>, vector<16x16x8xbf16>,
    %c1_42 = arith.constant 1 : index
    %c2_43 = arith.constant 2 : index
    %c0_44 = arith.constant 0 : index
    %34 = vector.load %arg8[%c1_42, %c2_43, %c0_44] : memref<18x18x8xbf16, #tpu.memory_space<vmem>>, vector<16x16x8xbf16>
    %c0_45 = arith.constant 0 : index
    %c0_46 = arith.constant 0 : index
    %c40 = arith.constant 40 : index
    %35 = vector.load %arg9[%c0_45, %c0_46, %c40] : memref<16x16x72xbf16, #tpu.memory_space<vmem>>, vector<16x16x8xbf16>
    tpu.vector_store %arg9[%c0_45, %c0_46, %c40], %34 {strides = array<i32>} : memref<16x16x72xbf16, #tpu.memory_space<vmem>>, vector<16x16x8xbf16>,
    %c2_47 = arith.constant 2 : index
    %c0_48 = arith.constant 0 : index
    %c0_49 = arith.constant 0 : index
    %36 = vector.load %arg8[%c2_47, %c0_48, %c0_49] : memref<18x18x8xbf16, #tpu.memory_space<vmem>>, vector<16x16x8xbf16>
    %c0_50 = arith.constant 0 : index
    %c0_51 = arith.constant 0 : index
    %c48 = arith.constant 48 : index
    %37 = vector.load %arg9[%c0_50, %c0_51, %c48] : memref<16x16x72xbf16, #tpu.memory_space<vmem>>, vector<16x16x8xbf16>
    tpu.vector_store %arg9[%c0_50, %c0_51, %c48], %36 {strides = array<i32>} : memref<16x16x72xbf16, #tpu.memory_space<vmem>>, vector<16x16x8xbf16>,
    %c2_52 = arith.constant 2 : index
    %c1_53 = arith.constant 1 : index
    %c0_54 = arith.constant 0 : index
    %38 = vector.load %arg8[%c2_52, %c1_53, %c0_54] : memref<18x18x8xbf16, #tpu.memory_space<vmem>>, vector<16x16x8xbf16>
    %c0_55 = arith.constant 0 : index
    %c0_56 = arith.constant 0 : index
    %c56 = arith.constant 56 : index
    %39 = vector.load %arg9[%c0_55, %c0_56, %c56] : memref<16x16x72xbf16, #tpu.memory_space<vmem>>, vector<16x16x8xbf16>
    tpu.vector_store %arg9[%c0_55, %c0_56, %c56], %38 {strides = array<i32>} : memref<16x16x72xbf16, #tpu.memory_space<vmem>>, vector<16x16x8xbf16>,
    %c2_57 = arith.constant 2 : index
    %c2_58 = arith.constant 2 : index
    %c0_59 = arith.constant 0 : index
    %40 = vector.load %arg8[%c2_57, %c2_58, %c0_59] : memref<18x18x8xbf16, #tpu.memory_space<vmem>>, vector<16x16x8xbf16>
    %c0_60 = arith.constant 0 : index
    %c0_61 = arith.constant 0 : index
    %c64 = arith.constant 64 : index
    %41 = vector.load %arg9[%c0_60, %c0_61, %c64] : memref<16x16x72xbf16, #tpu.memory_space<vmem>>, vector<16x16x8xbf16>
    tpu.vector_store %arg9[%c0_60, %c0_61, %c64], %40 {strides = array<i32>} : memref<16x16x72xbf16, #tpu.memory_space<vmem>>, vector<16x16x8xbf16>,
    %c0_62 = arith.constant 0 : index
    %c0_63 = arith.constant 0 : index
    %c0_64 = arith.constant 0 : index
    %42 = vector.load %arg9[%c0_62, %c0_63, %c0_64] : memref<16x16x72xbf16, #tpu.memory_space<vmem>>, vector<16x16x72xbf16>
    %43 = vector.shape_cast %42 : vector<16x16x72xbf16> to vector<256x72xbf16>
    %c0_65 = arith.constant 0 : index
    %c0_66 = arith.constant 0 : index
    %44 = vector.load %arg5[%c0_65, %c0_66] : memref<72x128xbf16, #tpu.memory_space<vmem>>, vector<72x128xbf16>
    %cst_67 = arith.constant dense<0.000000e+00> : vector<256x128xf32>
    %45 = tpu.matmul %43, %44, %cst_67 {dimension_numbers = #tpu.dot_dimension_numbers<[1], [0], [0], [1], [0, 0, 1, 1], [], []>} : vector<256x72xbf16>, vector<72x128xbf16>, vector<256x128xf32> -> vector<256x128xf32>
    %c0_68 = arith.constant 0 : index
    %c0_69 = arith.constant 0 : index
    %46 = vector.load %arg6[%c0_68, %c0_69] : memref<1x128xf32, #tpu.memory_space<vmem>>, vector<1x128xf32>
    %47 = vector.broadcast %46 : vector<1x128xf32> to vector<256x128xf32>
    %48 = arith.addf %45, %47 : vector<256x128xf32>
    %c0_70 = arith.constant 0 : index
    %c0_71 = arith.constant 0 : index
    %c0_72 = arith.constant 0 : index
    %49 = vector.load %arg7[%c0_70, %c0_71, %c0_72] : memref<1x256x128xf32, #tpu.memory_space<vmem>>, vector<1x256x128xf32>
    %50 = vector.shape_cast %49 : vector<1x256x128xf32> to vector<256x128xf32>
    %51 = vector.shape_cast %48 : vector<256x128xf32> to vector<1x256x128xf32>
    tpu.vector_store %arg7[%c0_70, %c0_71, %c0_72], %51 {strides = array<i32>} : memref<1x256x128xf32, #tpu.memory_space<vmem>>, vector<1x256x128xf32>,
    return
  }
  func.func @transform_0(%arg0: i32, %arg1: i32) -> (i32, i32, i32) {
    %c0_i32 = arith.constant 0 : i32
    %c0_i32_0 = arith.constant 0 : i32
    %c0_i32_1 = arith.constant 0 : i32
    return %arg0, %c0_i32, %c0_i32_0 : i32, i32, i32
  }
  func.func @transform_1(%arg0: i32, %arg1: i32) -> (i32, i32) {
    %c0_i32 = arith.constant 0 : i32
    %c0_i32_0 = arith.constant 0 : i32
    %c0_i32_1 = arith.constant 0 : i32
    return %c0_i32, %c0_i32_0 : i32, i32
  }
  func.func @transform_2(%arg0: i32, %arg1: i32) -> (i32, i32) {
    %c0_i32 = arith.constant 0 : i32
    %c0_i32_0 = arith.constant 0 : i32
    %c0_i32_1 = arith.constant 0 : i32
    return %c0_i32, %c0_i32_0 : i32, i32
  }
  func.func @transform_3(%arg0: i32, %arg1: i32) -> (i32, i32) {
    %c0_i32 = arith.constant 0 : i32
    %c0_i32_0 = arith.constant 0 : i32
    %c0_i32_1 = arith.constant 0 : i32
    return %c0_i32, %c0_i32_0 : i32, i32
  }
  func.func @transform_4(%arg0: i32, %arg1: i32) -> (i32, i32) {
    %c0_i32 = arith.constant 0 : i32
    %c0_i32_0 = arith.constant 0 : i32
    %c0_i32_1 = arith.constant 0 : i32
    return %c0_i32, %c0_i32_0 : i32, i32
  }
  func.func @transform_5(%arg0: i32, %arg1: i32) -> (i32, i32, i32) {
    %c0_i32 = arith.constant 0 : i32
    %c0_i32_0 = arith.constant 0 : i32
    return %arg0, %arg1, %c0_i32 : i32, i32, i32
  }
}

</mosaic_0001>

<llo_original>
// kernel: tpu_custom_call.1
$region0: #{tpu_custom_call.1}
  #allocation0 [shape = 'u32[]', space=smem, size = 0x4, offset = 0x4, fixed_abs, tag = 'smem constant byte address 0x4 - core index']
  #allocation1 [shape = 'u32[144,128]{1,0:T(1,128)}', space=vmem, size = 0x12000, scoped, tag = 'internal scratch']
  #allocation2 [shape = 'bf16[18,18,8]{2,1,0:T(8,128)(2,1)}', space=vmem, size = 0x1b000, scoped, tag = 'scratch operand']
  #allocation3 [shape = 'bf16[16,16,72]{2,1,0:T(16,128)(2,1)}', space=vmem, size = 0x10000, scoped, tag = 'scratch operand']
  %s0 = inlined_call_operand.vmem [shape: bf16[2,324,16], index: 0, kind: input, shape index: {}]
  %s1 = inlined_call_operand.vmem [shape: bf16[16,8], index: 1, kind: input, shape index: {}]
  %s2 = inlined_call_operand.vmem [shape: f32[1,8], index: 2, kind: input, shape index: {}]
  %s3 = inlined_call_operand.vmem [shape: bf16[72,128], index: 3, kind: input, shape index: {}]
  %s4 = inlined_call_operand.vmem [shape: f32[1,128], index: 4, kind: input, shape index: {}]
  %s5 = inlined_call_operand.hbm [shape: f32[2,256,128], index: 5, kind: output, shape index: {}]
  %s6 = sld [smem:[#allocation0]]
  $region57: #{tpu_custom_call.1} parent=0
    _
  %s8 = ssub.s32 1, %s6
  %s9 = scalar_select 0, %s8, %s6
  $region1: #{tpu_custom_call.1} parent=0
    #allocation4 [shape = 'u8[262144]{0}', space=vmem, size = 0x40000, scoped, tag = 'output window, operand 0']
    #allocation5 [shape = 's32[2]{0}', space=sflag, size = 0x8, scoped, tag = 'scoped memory for tpu_custom_call.1']
    %10 = vsyncpa [#allocation5], 0
    %s11 = scalar_lea.sflag [#allocation5], 1
    %12 = vsyncpa %s11, 0
    loop: start=0, step=1, limit=4
    $region2: #{tpu_custom_call.1} parent=1 // loop_pre_header
      _
    $region3: #{tpu_custom_call.1} parent=1 // loop_header
      %s14 = sphi 0, %s18
      %p15 = scmp.ge.s32.totalorder %s14, 4
      %s21 = sphi 0, %s33
      %s22 = sphi 0, %s29
      %s23 = sphi 0, %s21
      %s24 = sphi 0, %s22
      %s25 = sphi 0, %s23
      %s26 = sphi 0, %s24
      %s36 = sphi 0, %s38
      %s39 = sphi 0, %s36
      %s40 = sphi 0, %s39
      %s56 = sphi 0, %s40
      %s60 = sphi 0, %s60
      %s62 = sphi 0, %s60
      %s63 = sphi 0, %s62
      %s77 = sphi 0, %s63
      %s81 = sphi 0, %s81
      %s83 = sphi 0, %s81
      %s84 = sphi 0, %s83
      %s98 = sphi 0, %s84
      %s102 = sphi 0, %s102
      %s104 = sphi 0, %s102
      %s105 = sphi 0, %s104
      %s119 = sphi 0, %s105
      %s123 = sphi 0, %s123
      %s125 = sphi 0, %s123
      %s126 = sphi 0, %s125
      %s140 = sphi 0, %s126
      %s148 = sphi 0, %s150
      %s151 = sphi 0, %s148
      %s152 = sphi 0, %s151
      %s168 = sphi 0, %s152
    $region4: #{tpu_custom_call.1} parent=1 // loop_header_branch
      %17 = sbr.rel (%p15) target = $region8
    $region5: #{tpu_custom_call.1} parent=1 // loop_body
      %s19 = ssub.s32 %s14, 1
      %s20 = ssub.s32 %s14, 2
      %s27 = sadd.s32 1, %s22
      %p28 = scmp.ge.s32.totalorder %s27, 1
      %s29 = scalar_select %p28, 0, %s27
      %s30 = sadd.s32 1, %s21
      %s31 = scalar_select %p28, %s30, %s21
      %p32 = scmp.ge.s32.totalorder %s31, 2
      %s33 = scalar_select %p32, 0, %s31
      %s34 = ssub.s32 %s21, %s33
      %p35 = scmp.eq.s32.totalorder %s34, 0
      %s37 = sadd.s32 %s36, 1
      %s38 = scalar_select %p35, %s36, %s37
      %p41 = pneg %p35
      %p42 = scmp.eq.s32.totalorder %s14, 1
      %p43 = por %p41, %p42
      %p44 = scmp.ne.s32.totalorder %s36, %s39
      %p45 = scmp.eq.s32.totalorder %s14, 0
      %p46 = por %p44, %p45
      %p47 = scmp.ne.s32.totalorder %s36, %s39
      %p48 = scmp.eq.s32.totalorder %s19, 1
      %p49 = por %p47, %p48
      %p50 = scmp.ne.s32.totalorder %s39, %s40
      %p51 = scmp.eq.s32.totalorder %s19, 0
      %p52 = por %p50, %p51
      %p53 = scmp.ne.s32.totalorder %s39, %s40
      %p54 = scmp.eq.s32.totalorder %s20, 1
      %p55 = por %p53, %p54
      %p57 = scmp.ne.s32.totalorder %s40, %s56
      %p58 = scmp.eq.s32.totalorder %s20, 0
      %p59 = por %p57, %p58
      %s61 = sadd.s32 %s60, 1
      %p64 = scmp.eq.s32.totalorder %s14, 1
      %p65 = scmp.ne.s32.totalorder %s60, %s62
      %p66 = scmp.eq.s32.totalorder %s14, 0
      %p67 = por %p65, %p66
      %p68 = scmp.ne.s32.totalorder %s60, %s62
      %p69 = scmp.eq.s32.totalorder %s19, 1
      %p70 = por %p68, %p69
      %p71 = scmp.ne.s32.totalorder %s62, %s63
      %p72 = scmp.eq.s32.totalorder %s19, 0
      %p73 = por %p71, %p72
      %p74 = scmp.ne.s32.totalorder %s62, %s63
      %p75 = scmp.eq.s32.totalorder %s20, 1
      %p76 = por %p74, %p75
      %p78 = scmp.ne.s32.totalorder %s63, %s77
      %p79 = scmp.eq.s32.totalorder %s20, 0
      %p80 = por %p78, %p79
      %s82 = sadd.s32 %s81, 1
      %p85 = scmp.eq.s32.totalorder %s14, 1
      %p86 = scmp.ne.s32.totalorder %s81, %s83
      %p87 = scmp.eq.s32.totalorder %s14, 0
      %p88 = por %p86, %p87
      %p89 = scmp.ne.s32.totalorder %s81, %s83
      %p90 = scmp.eq.s32.totalorder %s19, 1
      %p91 = por %p89, %p90
      %p92 = scmp.ne.s32.totalorder %s83, %s84
      %p93 = scmp.eq.s32.totalorder %s19, 0
      %p94 = por %p92, %p93
      %p95 = scmp.ne.s32.totalorder %s83, %s84
      %p96 = scmp.eq.s32.totalorder %s20, 1
      %p97 = por %p95, %p96
      %p99 = scmp.ne.s32.totalorder %s84, %s98
      %p100 = scmp.eq.s32.totalorder %s20, 0
      %p101 = por %p99, %p100
      %s103 = sadd.s32 %s102, 1
      %p106 = scmp.eq.s32.totalorder %s14, 1
      %p107 = scmp.ne.s32.totalorder %s102, %s104
      %p108 = scmp.eq.s32.totalorder %s14, 0
      %p109 = por %p107, %p108
      %p110 = scmp.ne.s32.totalorder %s102, %s104
      %p111 = scmp.eq.s32.totalorder %s19, 1
      %p112 = por %p110, %p111
      %p113 = scmp.ne.s32.totalorder %s104, %s105
      %p114 = scmp.eq.s32.totalorder %s19, 0
      %p115 = por %p113, %p114
      %p116 = scmp.ne.s32.totalorder %s104, %s105
      %p117 = scmp.eq.s32.totalorder %s20, 1
      %p118 = por %p116, %p117
      %p120 = scmp.ne.s32.totalorder %s105, %s119
      %p121 = scmp.eq.s32.totalorder %s20, 0
      %p122 = por %p120, %p121
      %s124 = sadd.s32 %s123, 1
      %p127 = scmp.eq.s32.totalorder %s14, 1
      %p128 = scmp.ne.s32.totalorder %s123, %s125
      %p129 = scmp.eq.s32.totalorder %s14, 0
      %p130 = por %p128, %p129
      %p131 = scmp.ne.s32.totalorder %s123, %s125
      %p132 = scmp.eq.s32.totalorder %s19, 1
      %p133 = por %p131, %p132
      %p134 = scmp.ne.s32.totalorder %s125, %s126
      %p135 = scmp.eq.s32.totalorder %s19, 0
      %p136 = por %p134, %p135
      %p137 = scmp.ne.s32.totalorder %s125, %s126
      %p138 = scmp.eq.s32.totalorder %s20, 1
      %p139 = por %p137, %p138
      %p141 = scmp.ne.s32.totalorder %s126, %s140
      %p142 = scmp.eq.s32.totalorder %s20, 0
      %p143 = por %p141, %p142
      %s144 = ssub.s32 %s21, %s33
      %s145 = ssub.s32 %s22, %s29
      %s146 = sor.u32 %s144, %s145
      %p147 = scmp.eq.s32.totalorder %s146, 0
      %s149 = sadd.s32 %s148, 1
      %s150 = scalar_select %p147, %s148, %s149
      %p153 = pneg %p147
      %p154 = scmp.eq.s32.totalorder %s14, 1
      %p155 = por %p153, %p154
      %p156 = scmp.ne.s32.totalorder %s148, %s151
      %p157 = scmp.eq.s32.totalorder %s14, 0
      %p158 = por %p156, %p157
      %p159 = scmp.ne.s32.totalorder %s148, %s151
      %p160 = scmp.eq.s32.totalorder %s19, 1
      %p161 = por %p159, %p160
      %p162 = scmp.ne.s32.totalorder %s151, %s152
      %p163 = scmp.eq.s32.totalorder %s19, 0
      %p164 = por %p162, %p163
      %p165 = scmp.ne.s32.totalorder %s151, %s152
      %p166 = scmp.eq.s32.totalorder %s20, 1
      %p167 = por %p165, %p166
      %p169 = scmp.ne.s32.totalorder %s152, %s168
      %p170 = scmp.eq.s32.totalorder %s20, 0
      %p171 = por %p169, %p170
      %p172 = scmp.le.s32.totalorder 1, %s14
      %p173 = scmp.lt.s32.totalorder %s14, 3
      %p174 = pnand %p172, %p173
      %p175 = pneg %p174
      // Predicated region
      $region9: #{tpu_custom_call.1} parent=5 // pred_check
        _
      $region10: #{tpu_custom_call.1} parent=5 // pred_check_branch
        %177 = sbr.rel (%p174) target = $region12
      $region11: #{tpu_custom_call.1} parent=5 // pred_region
        %s178 = ssub.s32 %s14, 1
        // Predicated region
        $region13: #{tpu_custom_call.1} parent=11 // pred_check
          %p179 = pneg %p73
        $region14: #{tpu_custom_call.1} parent=11 // pred_check_branch
          %181 = sbr.rel (%p179) target = $region16
        $region15: #{tpu_custom_call.1} parent=11 // pred_region
          _
        $region16: #{tpu_custom_call.1} parent=11 // pred_fallthru
          _
        // Predicated region
        $region17: #{tpu_custom_call.1} parent=11 // pred_check
          %p182 = pneg %p94
        $region18: #{tpu_custom_call.1} parent=11 // pred_check_branch
          %184 = sbr.rel (%p182) target = $region20
        $region19: #{tpu_custom_call.1} parent=11 // pred_region
          _
        $region20: #{tpu_custom_call.1} parent=11 // pred_fallthru
          _
        // Predicated region
        $region21: #{tpu_custom_call.1} parent=11 // pred_check
          %p185 = pneg %p115
        $region22: #{tpu_custom_call.1} parent=11 // pred_check_branch
          %187 = sbr.rel (%p185) target = $region24
        $region23: #{tpu_custom_call.1} parent=11 // pred_region
          _
        $region24: #{tpu_custom_call.1} parent=11 // pred_fallthru
          _
        // Predicated region
        $region25: #{tpu_custom_call.1} parent=11 // pred_check
          %p188 = pneg %p136
        $region26: #{tpu_custom_call.1} parent=11 // pred_check_branch
          %190 = sbr.rel (%p188) target = $region28
        $region27: #{tpu_custom_call.1} parent=11 // pred_region
          _
        $region28: #{tpu_custom_call.1} parent=11 // pred_fallthru
          _
      $region12: #{tpu_custom_call.1} parent=5 // pred_fallthru
        _
      %p191 = scmp.lt.s32.totalorder %s14, 2
      // Predicated region
      $region29: #{tpu_custom_call.1} parent=5 // pred_check
        %p192 = pneg %p191
      $region30: #{tpu_custom_call.1} parent=5 // pred_check_branch
        %194 = sbr.rel (%p192) target = $region32
      $region31: #{tpu_custom_call.1} parent=5 // pred_region
        // Predicated region
        $region33: #{tpu_custom_call.1} parent=31 // pred_check
          %p195 = pneg %p46
        $region34: #{tpu_custom_call.1} parent=31 // pred_check_branch
          %197 = sbr.rel (%p195) target = $region36
        $region35: #{tpu_custom_call.1} parent=31 // pred_region
          %p198 = scmp.lt.s32.totalorder %s21, 1
          %s199 = scalar_select %p198, %s21, 1
          %s200 = smul.addr %s199, 41
          %s201 = smul.addr %s200, 4
          %s202 = scalar_lea.vmem %s0, %s201
        $region36: #{tpu_custom_call.1} parent=31 // pred_fallthru
          _
      $region32: #{tpu_custom_call.1} parent=5 // pred_fallthru
        _
      %p203 = scmp.le.s32.totalorder 1, %s14
      %p204 = scmp.lt.s32.totalorder %s14, 3
      %p205 = pnand %p203, %p204
      %p206 = pneg %p205
      // Predicated region
      $region37: #{tpu_custom_call.1} parent=5 // pred_check
        _
      $region38: #{tpu_custom_call.1} parent=5 // pred_check_branch
        %208 = sbr.rel (%p205) target = $region40
      $region39: #{tpu_custom_call.1} parent=5 // pred_region
        %s209 = ssub.s32 %s14, 1
        %p210 = scmp.lt.s32.totalorder %s23, 1
        %s211 = scalar_select %p210, %s23, 1
        %s212 = smul.addr %s211, 41
        %s213 = smul.addr %s212, 4
        %s214 = scalar_lea.vmem %s0, %s213
        %p215 = pneg %p52
        %p216 = pneg %p49
        %p217 = pneg %p73
        %p218 = pneg %p70
        %p219 = pneg %p94
        %p220 = pneg %p91
        %p221 = pneg %p115
        %p222 = pneg %p112
        %p223 = pneg %p136
        %p224 = pneg %p133
        %p225 = pneg %p164
        %p226 = pneg %p161
        %s227 = sand.u32 %s151, 1
        %s228 = scalar_lea.sflag [#allocation5], %s227
        %s229 = sand.u32 %s151, 1
        %s230 = smul.addr %s229, 256
        %s231 = scalar_lea.vmem [#allocation4], %s230
        %p232 = scmp.lt.s32.totalorder %s23, 1
        %s233 = scalar_select %p232, %s23, 1
        %s234 = smul.addr %s233, 41
        %s235 = smul.addr %s234, 4
        %s236 = scalar_lea.vmem %s0, %s235
        %s237 = smul.u32 32, %s24
        %s239 = smul.u32 %s24, 288
        %s240 = sshra.s32 %s239, 3
        %s241 = sand.u32 %s239, 7
        %s242 = smul.addr %s240, 4
        %s243 = scalar_lea.vmem %s236, %s242
        %v244 = vld [vmem:[%s243] sm:$0xf]
        %v245 = vld [vmem:[%s243 + $0x4] sm:$0xf]
        %v246 = vld [vmem:[%s243 + $0x8] sm:$0xf]
        %v247 = vld [vmem:[%s243 + $0xc] sm:$0xf]
        %v248 = vld [vmem:[%s243 + $0x10] sm:$0xf]
        %v249 = vld [vmem:[%s243 + $0x14] sm:$0xf]
        %v250 = vld [vmem:[%s243 + $0x18] sm:$0xf]
        %v251 = vld [vmem:[%s243 + $0x1c] sm:$0xf]
        %v252 = vld [vmem:[%s243 + $0x20] sm:$0xf]
        %v253 = vld [vmem:[%s243 + $0x24] sm:$0xf]
        %v254 = vld [vmem:[%s243 + $0x28] sm:$0xf]
        %v255 = vld [vmem:[%s243 + $0x2c] sm:$0xf]
        %v256 = vld [vmem:[%s243 + $0x30] sm:$0xf]
        %v257 = vld [vmem:[%s243 + $0x34] sm:$0xf]
        %v258 = vld [vmem:[%s243 + $0x38] sm:$0xf]
        %v259 = vld [vmem:[%s243 + $0x3c] sm:$0xf]
        %v260 = vld [vmem:[%s243 + $0x40] sm:$0xf]
        %v261 = vld [vmem:[%s243 + $0x44] sm:$0xf]
        %v262 = vld [vmem:[%s243 + $0x48] sm:$0xf]
        %v263 = vld [vmem:[%s243 + $0x4c] sm:$0xf]
        %v264 = vld [vmem:[%s243 + $0x50] sm:$0xf]
        %v265 = vld [vmem:[%s243 + $0x54] sm:$0xf]
        %v266 = vld [vmem:[%s243 + $0x58] sm:$0xf]
        %v267 = vld [vmem:[%s243 + $0x5c] sm:$0xf]
        %v268 = vld [vmem:[%s243 + $0x60] sm:$0xf]
        %v269 = vld [vmem:[%s243 + $0x64] sm:$0xf]
        %v270 = vld [vmem:[%s243 + $0x68] sm:$0xf]
        %v271 = vld [vmem:[%s243 + $0x6c] sm:$0xf]
        %v272 = vld [vmem:[%s243 + $0x70] sm:$0xf]
        %v273 = vld [vmem:[%s243 + $0x74] sm:$0xf]
        %v274 = vld [vmem:[%s243 + $0x78] sm:$0xf]
        %v275 = vld [vmem:[%s243 + $0x7c] sm:$0xf]
        %v276 = vld [vmem:[%s243 + $0x80] sm:$0xf]
        %v277 = vld [vmem:[%s243 + $0x84] sm:$0xf]
        %v278 = vld [vmem:[%s243 + $0x88] sm:$0xf]
        %v279 = vld [vmem:[%s243 + $0x8c] sm:$0xf]
        %v280 = vld [vmem:[%s243 + $0x90] sm:$0xf]
        %v281 = vld [vmem:[%s243 + $0x94] sm:$0xf]
        %v282 = vld [vmem:[%s243 + $0x98] sm:$0xf]
        %v283 = vld [vmem:[%s243 + $0x9c] sm:$0xf]
        %v284 = vld [vmem:[%s243 + $0xa0] sm:$0x3]
        %v285 = vld [vmem:[%s1] sm:$0xf]
        %v286 = vld [vmem:[%s1 + $0x4] sm:$0xf]
        %v287 = vld [vmem:[%s2] sm:$0x1]
        %v289 = vlaneseq
        %v290 = vshrl.u32 %v289, 7
        %v291 = vsub.s32 0, %v290
        %v292 = vrot.slane %v287, %v291
        %v335 = vunpack.c.l.b16 %v244
        %v336 = vunpack.c.l.b16 %v245
        %v337 = vunpack.c.l.b16 %v246
        %v338 = vunpack.c.l.b16 %v247
        %v339 = vunpack.c.l.b16 %v248
        %v340 = vunpack.c.l.b16 %v249
        %v341 = vunpack.c.l.b16 %v250
        %v342 = vunpack.c.l.b16 %v251
        %v343 = vunpack.c.l.b16 %v252
        %v344 = vunpack.c.l.b16 %v253
        %v345 = vunpack.c.l.b16 %v254
        %v346 = vunpack.c.l.b16 %v255
        %v347 = vunpack.c.l.b16 %v256
        %v348 = vunpack.c.l.b16 %v257
        %v349 = vunpack.c.l.b16 %v258
        %v350 = vunpack.c.l.b16 %v259
        %v351 = vunpack.c.l.b16 %v260
        %v352 = vunpack.c.l.b16 %v261
        %v353 = vunpack.c.l.b16 %v262
        %v354 = vunpack.c.l.b16 %v263
        %v355 = vunpack.c.l.b16 %v264
        %v356 = vunpack.c.l.b16 %v265
        %v357 = vunpack.c.l.b16 %v266
        %v358 = vunpack.c.l.b16 %v267
        %v359 = vunpack.c.l.b16 %v268
        %v360 = vunpack.c.l.b16 %v269
        %v361 = vunpack.c.l.b16 %v270
        %v362 = vunpack.c.l.b16 %v271
        %v363 = vunpack.c.l.b16 %v272
        %v364 = vunpack.c.l.b16 %v273
        %v365 = vunpack.c.l.b16 %v274
        %v366 = vunpack.c.l.b16 %v275
        %v367 = vunpack.c.l.b16 %v276
        %v368 = vunpack.c.l.b16 %v277
        %v369 = vunpack.c.l.b16 %v278
        %v370 = vunpack.c.l.b16 %v279
        %v371 = vunpack.c.l.b16 %v280
        %v372 = vunpack.c.l.b16 %v281
        %v373 = vunpack.c.l.b16 %v282
        %v374 = vunpack.c.l.b16 %v283
        %v375 = vunpack.c.l.b16 %v284
        %v376 = vpack.c.b16 %v336, %v335
        %v377 = vpack.c.b16 %v338, %v337
        %v378 = vpack.c.b16 %v340, %v339
        %v379 = vpack.c.b16 %v342, %v341
        %v380 = vpack.c.b16 %v344, %v343
        %v381 = vpack.c.b16 %v346, %v345
        %v382 = vpack.c.b16 %v348, %v347
        %v383 = vpack.c.b16 %v350, %v349
        %v384 = vpack.c.b16 %v352, %v351
        %v385 = vpack.c.b16 %v354, %v353
        %v386 = vpack.c.b16 %v356, %v355
        %v387 = vpack.c.b16 %v358, %v357
        %v388 = vpack.c.b16 %v360, %v359
        %v389 = vpack.c.b16 %v362, %v361
        %v390 = vpack.c.b16 %v364, %v363
        %v391 = vpack.c.b16 %v366, %v365
        %v392 = vpack.c.b16 %v368, %v367
        %v393 = vpack.c.b16 %v370, %v369
        %v394 = vpack.c.b16 %v372, %v371
        %v395 = vpack.c.b16 %v374, %v373
        %v396 = vpack.c.b16 %v375, %v375
        %v399 = vunpack.c.l.b16 %v285
        %v400 = vunpack.c.l.b16 %v286
        %v401 = vpack.c.b16 %v400, %v399
        %vm403 = vcmask 130048
        %v405 = vsel %vm403, %v376, 0
        %v408 = vsel %vm403, %v377, 0
        %v411 = vsel %vm403, %v378, 0
        %v414 = vsel %vm403, %v379, 0
        %v417 = vsel %vm403, %v380, 0
        %v420 = vsel %vm403, %v381, 0
        %v423 = vsel %vm403, %v382, 0
        %v426 = vsel %vm403, %v383, 0
        %v429 = vsel %vm403, %v384, 0
        %v432 = vsel %vm403, %v385, 0
        %v435 = vsel %vm403, %v386, 0
        %v438 = vsel %vm403, %v387, 0
        %v441 = vsel %vm403, %v388, 0
        %v444 = vsel %vm403, %v389, 0
        %v447 = vsel %vm403, %v390, 0
        %v450 = vsel %vm403, %v391, 0
        %v453 = vsel %vm403, %v392, 0
        %v456 = vsel %vm403, %v393, 0
        %v459 = vsel %vm403, %v394, 0
        %v462 = vsel %vm403, %v395, 0
        %v465 = vsel %vm403, %v396, 0
        %467 = vmatprep.subr.bf16.mxu0 0
        %468 = vmatpush1.bf16.msra.mxu0 %v401
        %469 = vmatprep.subr.bf16.mxu0 0
        %470 = vmatpush1.bf16.msra.mxu0 0
        %471 = vmatprep.subr.bf16.mxu0 0
        %472 = vmatpush1.bf16.msra.mxu0 0
        %473 = vmatprep.subr.bf16.mxu0 0
        %474 = vmatpush1.bf16.msra.mxu0 0
        %475 = vmatprep.subr.bf16.mxu0 0
        %476 = vmatpush1.bf16.msra.mxu0 0
        %477 = vmatprep.subr.bf16.mxu0 0
        %478 = vmatpush1.bf16.msra.mxu0 0
        %479 = vmatprep.subr.bf16.mxu0 0
        %480 = vmatpush1.bf16.msra.mxu0 0
        %481 = vmatprep.subr.bf16.mxu0 0
        %482 = vmatpush1.bf16.msra.mxu0 0
        %483 = vmatprep.subr.bf16.mxu0 0
        %484 = vmatpush1.bf16.msra.mxu0 0
        %485 = vmatprep.subr.bf16.mxu0 0
        %486 = vmatpush1.bf16.msra.mxu0 0
        %487 = vmatprep.subr.bf16.mxu0 0
        %488 = vmatpush1.bf16.msra.mxu0 0
        %489 = vmatprep.subr.bf16.mxu0 0
        %490 = vmatpush1.bf16.msra.mxu0 0
        %491 = vmatprep.subr.bf16.mxu0 0
        %492 = vmatpush1.bf16.msra.mxu0 0
        %493 = vmatprep.subr.bf16.mxu0 0
        %494 = vmatpush1.bf16.msra.mxu0 0
        %495 = vmatprep.subr.bf16.mxu0 0
        %496 = vmatpush1.bf16.msra.mxu0 0
        %497 = vmatprep.subr.bf16.mxu0 0
        %498 = vmatpush1.bf16.msra.mxu0 0
        %499 = vmatprep.mubr.bf16.mxu0 0
        %500 = vmatmul.mubr.bf16.gmra.mrb[0].mxu0 %v405
        %v501 = vpop.f32.mrb[0].mxu0
        %v502 = vadd.f32 %v292, %v501
        %v503 = vpop.f32.mrb[0].mxu0
        %v504 = vpop.f32.mrb[0].mxu0
        %v505 = vadd.f32 %v292, %v504
        %v506 = vpop.f32.mrb[0].mxu0
        %507 = vmatprep.mubr.bf16.mxu0 0
        %508 = vmatmul.mubr.bf16.gmra.mrb[0].mxu0 %v408
        %v509 = vpop.f32.mrb[0].mxu0
        %v510 = vadd.f32 %v292, %v509
        %v511 = vpop.f32.mrb[0].mxu0
        %v512 = vpop.f32.mrb[0].mxu0
        %v513 = vadd.f32 %v292, %v512
        %v514 = vpop.f32.mrb[0].mxu0
        %515 = vmatprep.mubr.bf16.mxu0 0
        %516 = vmatmul.mubr.bf16.gmra.mrb[0].mxu0 %v411
        %v517 = vpop.f32.mrb[0].mxu0
        %v518 = vadd.f32 %v292, %v517
        %v519 = vpop.f32.mrb[0].mxu0
        %v520 = vpop.f32.mrb[0].mxu0
        %v521 = vadd.f32 %v292, %v520
        %v522 = vpop.f32.mrb[0].mxu0
        %523 = vmatprep.mubr.bf16.mxu0 0
        %524 = vmatmul.mubr.bf16.gmra.mrb[0].mxu0 %v414
        %v525 = vpop.f32.mrb[0].mxu0
        %v526 = vadd.f32 %v292, %v525
        %v527 = vpop.f32.mrb[0].mxu0
        %v528 = vpop.f32.mrb[0].mxu0
        %v529 = vadd.f32 %v292, %v528
        %v530 = vpop.f32.mrb[0].mxu0
        %531 = vmatprep.mubr.bf16.mxu0 0
        %532 = vmatmul.mubr.bf16.gmra.mrb[0].mxu0 %v417
        %v533 = vpop.f32.mrb[0].mxu0
        %v534 = vadd.f32 %v292, %v533
        %v535 = vpop.f32.mrb[0].mxu0
        %v536 = vpop.f32.mrb[0].mxu0
        %v537 = vadd.f32 %v292, %v536
        %v538 = vpop.f32.mrb[0].mxu0
        %539 = vmatprep.mubr.bf16.mxu0 0
        %540 = vmatmul.mubr.bf16.gmra.mrb[0].mxu0 %v420
        %v541 = vpop.f32.mrb[0].mxu0
        %v542 = vadd.f32 %v292, %v541
        %v543 = vpop.f32.mrb[0].mxu0
        %v544 = vpop.f32.mrb[0].mxu0
        %v545 = vadd.f32 %v292, %v544
        %v546 = vpop.f32.mrb[0].mxu0
        %547 = vmatprep.mubr.bf16.mxu0 0
        %548 = vmatmul.mubr.bf16.gmra.mrb[0].mxu0 %v423
        %v549 = vpop.f32.mrb[0].mxu0
        %v550 = vadd.f32 %v292, %v549
        %v551 = vpop.f32.mrb[0].mxu0
        %v552 = vpop.f32.mrb[0].mxu0
        %v553 = vadd.f32 %v292, %v552
        %v554 = vpop.f32.mrb[0].mxu0
        %555 = vmatprep.mubr.bf16.mxu0 0
        %556 = vmatmul.mubr.bf16.gmra.mrb[0].mxu0 %v426
        %v557 = vpop.f32.mrb[0].mxu0
        %v558 = vadd.f32 %v292, %v557
        %v559 = vpop.f32.mrb[0].mxu0
        %v560 = vpop.f32.mrb[0].mxu0
        %v561 = vadd.f32 %v292, %v560
        %v562 = vpop.f32.mrb[0].mxu0
        %563 = vmatprep.mubr.bf16.mxu0 0
        %564 = vmatmul.mubr.bf16.gmra.mrb[0].mxu0 %v429
        %v565 = vpop.f32.mrb[0].mxu0
        %v566 = vadd.f32 %v292, %v565
        %v567 = vpop.f32.mrb[0].mxu0
        %v568 = vpop.f32.mrb[0].mxu0
        %v569 = vadd.f32 %v292, %v568
        %v570 = vpop.f32.mrb[0].mxu0
        %571 = vmatprep.mubr.bf16.mxu0 0
        %572 = vmatmul.mubr.bf16.gmra.mrb[0].mxu0 %v432
        %v573 = vpop.f32.mrb[0].mxu0
        %v574 = vadd.f32 %v292, %v573
        %v575 = vpop.f32.mrb[0].mxu0
        %v576 = vpop.f32.mrb[0].mxu0
        %v577 = vadd.f32 %v292, %v576
        %v578 = vpop.f32.mrb[0].mxu0
        %579 = vmatprep.mubr.bf16.mxu0 0
        %580 = vmatmul.mubr.bf16.gmra.mrb[0].mxu0 %v435
        %v581 = vpop.f32.mrb[0].mxu0
        %v582 = vadd.f32 %v292, %v581
        %v583 = vpop.f32.mrb[0].mxu0
        %v584 = vpop.f32.mrb[0].mxu0
        %v585 = vadd.f32 %v292, %v584
        %v586 = vpop.f32.mrb[0].mxu0
        %587 = vmatprep.mubr.bf16.mxu0 0
        %588 = vmatmul.mubr.bf16.gmra.mrb[0].mxu0 %v438
        %v589 = vpop.f32.mrb[0].mxu0
        %v590 = vadd.f32 %v292, %v589
        %v591 = vpop.f32.mrb[0].mxu0
        %v592 = vpop.f32.mrb[0].mxu0
        %v593 = vadd.f32 %v292, %v592
        %v594 = vpop.f32.mrb[0].mxu0
        %595 = vmatprep.mubr.bf16.mxu0 0
        %596 = vmatmul.mubr.bf16.gmra.mrb[0].mxu0 %v441
        %v597 = vpop.f32.mrb[0].mxu0
        %v598 = vadd.f32 %v292, %v597
        %v599 = vpop.f32.mrb[0].mxu0
        %v600 = vpop.f32.mrb[0].mxu0
        %v601 = vadd.f32 %v292, %v600
        %v602 = vpop.f32.mrb[0].mxu0
        %603 = vmatprep.mubr.bf16.mxu0 0
        %604 = vmatmul.mubr.bf16.gmra.mrb[0].mxu0 %v444
        %v605 = vpop.f32.mrb[0].mxu0
        %v606 = vadd.f32 %v292, %v605
        %v607 = vpop.f32.mrb[0].mxu0
        %v608 = vpop.f32.mrb[0].mxu0
        %v609 = vadd.f32 %v292, %v608
        %v610 = vpop.f32.mrb[0].mxu0
        %611 = vmatprep.mubr.bf16.mxu0 0
        %612 = vmatmul.mubr.bf16.gmra.mrb[0].mxu0 %v447
        %v613 = vpop.f32.mrb[0].mxu0
        %v614 = vadd.f32 %v292, %v613
        %v615 = vpop.f32.mrb[0].mxu0
        %v616 = vpop.f32.mrb[0].mxu0
        %v617 = vadd.f32 %v292, %v616
        %v618 = vpop.f32.mrb[0].mxu0
        %619 = vmatprep.mubr.bf16.mxu0 0
        %620 = vmatmul.mubr.bf16.gmra.mrb[0].mxu0 %v450
        %v621 = vpop.f32.mrb[0].mxu0
        %v622 = vadd.f32 %v292, %v621
        %v623 = vpop.f32.mrb[0].mxu0
        %v624 = vpop.f32.mrb[0].mxu0
        %v625 = vadd.f32 %v292, %v624
        %v626 = vpop.f32.mrb[0].mxu0
        %627 = vmatprep.mubr.bf16.mxu0 0
        %628 = vmatmul.mubr.bf16.gmra.mrb[0].mxu0 %v453
        %v629 = vpop.f32.mrb[0].mxu0
        %v630 = vadd.f32 %v292, %v629
        %v631 = vpop.f32.mrb[0].mxu0
        %v632 = vpop.f32.mrb[0].mxu0
        %v633 = vadd.f32 %v292, %v632
        %v634 = vpop.f32.mrb[0].mxu0
        %635 = vmatprep.mubr.bf16.mxu0 0
        %636 = vmatmul.mubr.bf16.gmra.mrb[0].mxu0 %v456
        %v637 = vpop.f32.mrb[0].mxu0
        %v638 = vadd.f32 %v292, %v637
        %v639 = vpop.f32.mrb[0].mxu0
        %v640 = vpop.f32.mrb[0].mxu0
        %v641 = vadd.f32 %v292, %v640
        %v642 = vpop.f32.mrb[0].mxu0
        %643 = vmatprep.mubr.bf16.mxu0 0
        %644 = vmatmul.mubr.bf16.gmra.mrb[0].mxu0 %v459
        %v645 = vpop.f32.mrb[0].mxu0
        %v646 = vadd.f32 %v292, %v645
        %v647 = vpop.f32.mrb[0].mxu0
        %v648 = vpop.f32.mrb[0].mxu0
        %v649 = vadd.f32 %v292, %v648
        %v650 = vpop.f32.mrb[0].mxu0
        %651 = vmatprep.mubr.bf16.mxu0 0
        %652 = vmatmul.mubr.bf16.gmra.mrb[0].mxu0 %v462
        %v653 = vpop.f32.mrb[0].mxu0
        %v654 = vadd.f32 %v292, %v653
        %v655 = vpop.f32.mrb[0].mxu0
        %v656 = vpop.f32.mrb[0].mxu0
        %v657 = vadd.f32 %v292, %v656
        %v658 = vpop.f32.mrb[0].mxu0
        %659 = vmatprep.mubr.bf16.mxu0 0
        %660 = vmatmul.mubr.bf16.gmra.mrb[0].mxu0 %v465
        %v661 = vpop.f32.mrb[0].mxu0
        %v662 = vadd.f32 %v292, %v661
        %v663 = vpop.f32.mrb[0].mxu0
        %v664 = vpop.f32.mrb[0].mxu0
        %v665 = vpop.f32.mrb[0].mxu0
        %666 = vdwg.mxu0
        %v667 = vmax.f32 %v502, 0.0
        %v668 = vmax.f32 %v505, 0.0
        %v669 = vmax.f32 %v510, 0.0
        %v670 = vmax.f32 %v513, 0.0
        %v671 = vmax.f32 %v518, 0.0
        %v672 = vmax.f32 %v521, 0.0
        %v673 = vmax.f32 %v526, 0.0
        %v674 = vmax.f32 %v529, 0.0
        %v675 = vmax.f32 %v534, 0.0
        %v676 = vmax.f32 %v537, 0.0
        %v677 = vmax.f32 %v542, 0.0
        %v678 = vmax.f32 %v545, 0.0
        %v679 = vmax.f32 %v550, 0.0
        %v680 = vmax.f32 %v553, 0.0
        %v681 = vmax.f32 %v558, 0.0
        %v682 = vmax.f32 %v561, 0.0
        %v683 = vmax.f32 %v566, 0.0
        %v684 = vmax.f32 %v569, 0.0
        %v685 = vmax.f32 %v574, 0.0
        %v686 = vmax.f32 %v577, 0.0
        %v687 = vmax.f32 %v582, 0.0
        %v688 = vmax.f32 %v585, 0.0
        %v689 = vmax.f32 %v590, 0.0
        %v690 = vmax.f32 %v593, 0.0
        %v691 = vmax.f32 %v598, 0.0
        %v692 = vmax.f32 %v601, 0.0
        %v693 = vmax.f32 %v606, 0.0
        %v694 = vmax.f32 %v609, 0.0
        %v695 = vmax.f32 %v614, 0.0
        %v696 = vmax.f32 %v617, 0.0
        %v697 = vmax.f32 %v622, 0.0
        %v698 = vmax.f32 %v625, 0.0
        %v699 = vmax.f32 %v630, 0.0
        %v700 = vmax.f32 %v633, 0.0
        %v701 = vmax.f32 %v638, 0.0
        %v702 = vmax.f32 %v641, 0.0
        %v703 = vmax.f32 %v646, 0.0
        %v704 = vmax.f32 %v649, 0.0
        %v705 = vmax.f32 %v654, 0.0
        %v706 = vmax.f32 %v657, 0.0
        %v707 = vmax.f32 %v662, 0.0
        %v749 = vcombine.high %v667, %v667
        %v751 = vunpack.c.l.s4 1983009808
        %v752 = vunpack.c.0.s8 %v751
        %v753 = vlaneseq
        %v754 = vshrl.u32 %v753, 7
        %v755 = vsub.s32 %v752, %v754
        %v756 = vrot.slane %v667, %v755
        %v758 = vunpack.c.l.s4 1983009808
        %v759 = vunpack.c.0.s8 %v758
        %v760 = vlaneseq
        %v761 = vshrl.u32 %v760, 7
        %v762 = vsub.s32 %v759, %v761
        %v763 = vrot.slane %v749, %v762
        %v764 = vcombine.high %v756, %v756
        %v765 = vcombine.high %v763, %v763
        %v766 = vcombine.high %v668, %v668
        %v768 = vunpack.c.l.s4 1983009808
        %v769 = vunpack.c.0.s8 %v768
        %v770 = vlaneseq
        %v771 = vshrl.u32 %v770, 7
        %v772 = vsub.s32 %v769, %v771
        %v773 = vrot.slane %v668, %v772
        %v775 = vunpack.c.l.s4 1983009808
        %v776 = vunpack.c.0.s8 %v775
        %v777 = vlaneseq
        %v778 = vshrl.u32 %v777, 7
        %v779 = vsub.s32 %v776, %v778
        %v780 = vrot.slane %v766, %v779
        %v781 = vcombine.high %v773, %v773
        %v782 = vcombine.high %v780, %v780
        %v783 = vcombine.high %v669, %v669
        %v785 = vunpack.c.l.s4 1983009808
        %v786 = vunpack.c.0.s8 %v785
        %v787 = vlaneseq
        %v788 = vshrl.u32 %v787, 7
        %v789 = vsub.s32 %v786, %v788
        %v790 = vrot.slane %v669, %v789
        %v792 = vunpack.c.l.s4 1983009808
        %v793 = vunpack.c.0.s8 %v792
        %v794 = vlaneseq
        %v795 = vshrl.u32 %v794, 7
        %v796 = vsub.s32 %v793, %v795
        %v797 = vrot.slane %v783, %v796
        %v798 = vcombine.high %v790, %v790
        %v799 = vcombine.high %v797, %v797
        %v800 = vcombine.high %v670, %v670
        %v802 = vunpack.c.l.s4 1983009808
        %v803 = vunpack.c.0.s8 %v802
        %v804 = vlaneseq
        %v805 = vshrl.u32 %v804, 7
        %v806 = vsub.s32 %v803, %v805
        %v807 = vrot.slane %v670, %v806
        %v809 = vunpack.c.l.s4 1983009808
        %v810 = vunpack.c.0.s8 %v809
        %v811 = vlaneseq
        %v812 = vshrl.u32 %v811, 7
        %v813 = vsub.s32 %v810, %v812
        %v814 = vrot.slane %v800, %v813
        %v815 = vcombine.high %v807, %v807
        %v816 = vcombine.high %v814, %v814
        %v817 = vcombine.high %v671, %v671
        %v819 = vunpack.c.l.s4 1983009808
        %v820 = vunpack.c.0.s8 %v819
        %v821 = vlaneseq
        %v822 = vshrl.u32 %v821, 7
        %v823 = vsub.s32 %v820, %v822
        %v824 = vrot.slane %v671, %v823
        %v826 = vunpack.c.l.s4 1983009808
        %v827 = vunpack.c.0.s8 %v826
        %v828 = vlaneseq
        %v829 = vshrl.u32 %v828, 7
        %v830 = vsub.s32 %v827, %v829
        %v831 = vrot.slane %v817, %v830
        %v832 = vcombine.high %v824, %v824
        %v833 = vcombine.high %v831, %v831
        %v834 = vcombine.high %v672, %v672
        %v836 = vunpack.c.l.s4 1983009808
        %v837 = vunpack.c.0.s8 %v836
        %v838 = vlaneseq
        %v839 = vshrl.u32 %v838, 7
        %v840 = vsub.s32 %v837, %v839
        %v841 = vrot.slane %v672, %v840
        %v843 = vunpack.c.l.s4 1983009808
        %v844 = vunpack.c.0.s8 %v843
        %v845 = vlaneseq
        %v846 = vshrl.u32 %v845, 7
        %v847 = vsub.s32 %v844, %v846
        %v848 = vrot.slane %v834, %v847
        %v849 = vcombine.high %v841, %v841
        %v850 = vcombine.high %v848, %v848
        %v851 = vcombine.high %v673, %v673
        %v853 = vunpack.c.l.s4 1983009808
        %v854 = vunpack.c.0.s8 %v853
        %v855 = vlaneseq
        %v856 = vshrl.u32 %v855, 7
        %v857 = vsub.s32 %v854, %v856
        %v858 = vrot.slane %v673, %v857
        %v860 = vunpack.c.l.s4 1983009808
        %v861 = vunpack.c.0.s8 %v860
        %v862 = vlaneseq
        %v863 = vshrl.u32 %v862, 7
        %v864 = vsub.s32 %v861, %v863
        %v865 = vrot.slane %v851, %v864
        %v866 = vcombine.high %v858, %v858
        %v867 = vcombine.high %v865, %v865
        %v868 = vcombine.high %v674, %v674
        %v870 = vunpack.c.l.s4 1983009808
        %v871 = vunpack.c.0.s8 %v870
        %v872 = vlaneseq
        %v873 = vshrl.u32 %v872, 7
        %v874 = vsub.s32 %v871, %v873
        %v875 = vrot.slane %v674, %v874
        %v877 = vunpack.c.l.s4 1983009808
        %v878 = vunpack.c.0.s8 %v877
        %v879 = vlaneseq
        %v880 = vshrl.u32 %v879, 7
        %v881 = vsub.s32 %v878, %v880
        %v882 = vrot.slane %v868, %v881
        %v883 = vcombine.high %v875, %v875
        %v884 = vcombine.high %v882, %v882
        %v885 = vcombine.high %v675, %v675
        %v887 = vunpack.c.l.s4 1983009808
        %v888 = vunpack.c.0.s8 %v887
        %v889 = vlaneseq
        %v890 = vshrl.u32 %v889, 7
        %v891 = vsub.s32 %v888, %v890
        %v892 = vrot.slane %v675, %v891
        %v894 = vunpack.c.l.s4 1983009808
        %v895 = vunpack.c.0.s8 %v894
        %v896 = vlaneseq
        %v897 = vshrl.u32 %v896, 7
        %v898 = vsub.s32 %v895, %v897
        %v899 = vrot.slane %v885, %v898
        %v900 = vcombine.high %v892, %v892
        %v901 = vcombine.high %v899, %v899
        %v902 = vcombine.high %v676, %v676
        %v904 = vunpack.c.l.s4 1983009808
        %v905 = vunpack.c.0.s8 %v904
        %v906 = vlaneseq
        %v907 = vshrl.u32 %v906, 7
        %v908 = vsub.s32 %v905, %v907
        %v909 = vrot.slane %v676, %v908
        %v911 = vunpack.c.l.s4 1983009808
        %v912 = vunpack.c.0.s8 %v911
        %v913 = vlaneseq
        %v914 = vshrl.u32 %v913, 7
        %v915 = vsub.s32 %v912, %v914
        %v916 = vrot.slane %v902, %v915
        %v917 = vcombine.high %v909, %v909
        %v918 = vcombine.high %v916, %v916
        %v919 = vcombine.high %v677, %v677
        %v921 = vunpack.c.l.s4 1983009808
        %v922 = vunpack.c.0.s8 %v921
        %v923 = vlaneseq
        %v924 = vshrl.u32 %v923, 7
        %v925 = vsub.s32 %v922, %v924
        %v926 = vrot.slane %v677, %v925
        %v928 = vunpack.c.l.s4 1983009808
        %v929 = vunpack.c.0.s8 %v928
        %v930 = vlaneseq
        %v931 = vshrl.u32 %v930, 7
        %v932 = vsub.s32 %v929, %v931
        %v933 = vrot.slane %v919, %v932
        %v934 = vcombine.high %v926, %v926
        %v935 = vcombine.high %v933, %v933
        %v936 = vcombine.high %v678, %v678
        %v938 = vunpack.c.l.s4 1983009808
        %v939 = vunpack.c.0.s8 %v938
        %v940 = vlaneseq
        %v941 = vshrl.u32 %v940, 7
        %v942 = vsub.s32 %v939, %v941
        %v943 = vrot.slane %v678, %v942
        %v945 = vunpack.c.l.s4 1983009808
        %v946 = vunpack.c.0.s8 %v945
        %v947 = vlaneseq
        %v948 = vshrl.u32 %v947, 7
        %v949 = vsub.s32 %v946, %v948
        %v950 = vrot.slane %v936, %v949
        %v951 = vcombine.high %v943, %v943
        %v952 = vcombine.high %v950, %v950
        %v953 = vcombine.high %v679, %v679
        %v955 = vunpack.c.l.s4 1983009808
        %v956 = vunpack.c.0.s8 %v955
        %v957 = vlaneseq
        %v958 = vshrl.u32 %v957, 7
        %v959 = vsub.s32 %v956, %v958
        %v960 = vrot.slane %v679, %v959
        %v962 = vunpack.c.l.s4 1983009808
        %v963 = vunpack.c.0.s8 %v962
        %v964 = vlaneseq
        %v965 = vshrl.u32 %v964, 7
        %v966 = vsub.s32 %v963, %v965
        %v967 = vrot.slane %v953, %v966
        %v968 = vcombine.high %v960, %v960
        %v969 = vcombine.high %v967, %v967
        %v970 = vcombine.high %v680, %v680
        %v972 = vunpack.c.l.s4 1983009808
        %v973 = vunpack.c.0.s8 %v972
        %v974 = vlaneseq
        %v975 = vshrl.u32 %v974, 7
        %v976 = vsub.s32 %v973, %v975
        %v977 = vrot.slane %v680, %v976
        %v979 = vunpack.c.l.s4 1983009808
        %v980 = vunpack.c.0.s8 %v979
        %v981 = vlaneseq
        %v982 = vshrl.u32 %v981, 7
        %v983 = vsub.s32 %v980, %v982
        %v984 = vrot.slane %v970, %v983
        %v985 = vcombine.high %v977, %v977
        %v986 = vcombine.high %v984, %v984
        %v987 = vcombine.high %v681, %v681
        %v989 = vunpack.c.l.s4 1983009808
        %v990 = vunpack.c.0.s8 %v989
        %v991 = vlaneseq
        %v992 = vshrl.u32 %v991, 7
        %v993 = vsub.s32 %v990, %v992
        %v994 = vrot.slane %v681, %v993
        %v996 = vunpack.c.l.s4 1983009808
        %v997 = vunpack.c.0.s8 %v996
        %v998 = vlaneseq
        %v999 = vshrl.u32 %v998, 7
        %v1000 = vsub.s32 %v997, %v999
        %v1001 = vrot.slane %v987, %v1000
        %v1002 = vcombine.high %v994, %v994
        %v1003 = vcombine.high %v1001, %v1001
        %v1004 = vcombine.high %v682, %v682
        %v1006 = vunpack.c.l.s4 1983009808
        %v1007 = vunpack.c.0.s8 %v1006
        %v1008 = vlaneseq
        %v1009 = vshrl.u32 %v1008, 7
        %v1010 = vsub.s32 %v1007, %v1009
        %v1011 = vrot.slane %v682, %v1010
        %v1013 = vunpack.c.l.s4 1983009808
        %v1014 = vunpack.c.0.s8 %v1013
        %v1015 = vlaneseq
        %v1016 = vshrl.u32 %v1015, 7
        %v1017 = vsub.s32 %v1014, %v1016
        %v1018 = vrot.slane %v1004, %v1017
        %v1019 = vcombine.high %v1011, %v1011
        %v1020 = vcombine.high %v1018, %v1018
        %v1021 = vcombine.high %v683, %v683
        %v1023 = vunpack.c.l.s4 1983009808
        %v1024 = vunpack.c.0.s8 %v1023
        %v1025 = vlaneseq
        %v1026 = vshrl.u32 %v1025, 7
        %v1027 = vsub.s32 %v1024, %v1026
        %v1028 = vrot.slane %v683, %v1027
        %v1030 = vunpack.c.l.s4 1983009808
        %v1031 = vunpack.c.0.s8 %v1030
        %v1032 = vlaneseq
        %v1033 = vshrl.u32 %v1032, 7
        %v1034 = vsub.s32 %v1031, %v1033
        %v1035 = vrot.slane %v1021, %v1034
        %v1036 = vcombine.high %v1028, %v1028
        %v1037 = vcombine.high %v1035, %v1035
        %v1038 = vcombine.high %v684, %v684
        %v1040 = vunpack.c.l.s4 1983009808
        %v1041 = vunpack.c.0.s8 %v1040
        %v1042 = vlaneseq
        %v1043 = vshrl.u32 %v1042, 7
        %v1044 = vsub.s32 %v1041, %v1043
        %v1045 = vrot.slane %v684, %v1044
        %v1047 = vunpack.c.l.s4 1983009808
        %v1048 = vunpack.c.0.s8 %v1047
        %v1049 = vlaneseq
        %v1050 = vshrl.u32 %v1049, 7
        %v1051 = vsub.s32 %v1048, %v1050
        %v1052 = vrot.slane %v1038, %v1051
        %v1053 = vcombine.high %v1045, %v1045
        %v1054 = vcombine.high %v1052, %v1052
        %v1055 = vcombine.high %v685, %v685
        %v1057 = vunpack.c.l.s4 1983009808
        %v1058 = vunpack.c.0.s8 %v1057
        %v1059 = vlaneseq
        %v1060 = vshrl.u32 %v1059, 7
        %v1061 = vsub.s32 %v1058, %v1060
        %v1062 = vrot.slane %v685, %v1061
        %v1064 = vunpack.c.l.s4 1983009808
        %v1065 = vunpack.c.0.s8 %v1064
        %v1066 = vlaneseq
        %v1067 = vshrl.u32 %v1066, 7
        %v1068 = vsub.s32 %v1065, %v1067
        %v1069 = vrot.slane %v1055, %v1068
        %v1070 = vcombine.high %v1062, %v1062
        %v1071 = vcombine.high %v1069, %v1069
        %v1072 = vcombine.high %v686, %v686
        %v1074 = vunpack.c.l.s4 1983009808
        %v1075 = vunpack.c.0.s8 %v1074
        %v1076 = vlaneseq
        %v1077 = vshrl.u32 %v1076, 7
        %v1078 = vsub.s32 %v1075, %v1077
        %v1079 = vrot.slane %v686, %v1078
        %v1081 = vunpack.c.l.s4 1983009808
        %v1082 = vunpack.c.0.s8 %v1081
        %v1083 = vlaneseq
        %v1084 = vshrl.u32 %v1083, 7
        %v1085 = vsub.s32 %v1082, %v1084
        %v1086 = vrot.slane %v1072, %v1085
        %v1087 = vcombine.high %v1079, %v1079
        %v1088 = vcombine.high %v1086, %v1086
        %v1089 = vcombine.high %v687, %v687
        %v1091 = vunpack.c.l.s4 1983009808
        %v1092 = vunpack.c.0.s8 %v1091
        %v1093 = vlaneseq
        %v1094 = vshrl.u32 %v1093, 7
        %v1095 = vsub.s32 %v1092, %v1094
        %v1096 = vrot.slane %v687, %v1095
        %v1098 = vunpack.c.l.s4 1983009808
        %v1099 = vunpack.c.0.s8 %v1098
        %v1100 = vlaneseq
        %v1101 = vshrl.u32 %v1100, 7
        %v1102 = vsub.s32 %v1099, %v1101
        %v1103 = vrot.slane %v1089, %v1102
        %v1104 = vcombine.high %v1096, %v1096
        %v1105 = vcombine.high %v1103, %v1103
        %v1106 = vcombine.high %v688, %v688
        %v1108 = vunpack.c.l.s4 1983009808
        %v1109 = vunpack.c.0.s8 %v1108
        %v1110 = vlaneseq
        %v1111 = vshrl.u32 %v1110, 7
        %v1112 = vsub.s32 %v1109, %v1111
        %v1113 = vrot.slane %v688, %v1112
        %v1115 = vunpack.c.l.s4 1983009808
        %v1116 = vunpack.c.0.s8 %v1115
        %v1117 = vlaneseq
        %v1118 = vshrl.u32 %v1117, 7
        %v1119 = vsub.s32 %v1116, %v1118
        %v1120 = vrot.slane %v1106, %v1119
        %v1121 = vcombine.high %v1113, %v1113
        %v1122 = vcombine.high %v1120, %v1120
        %v1123 = vcombine.high %v689, %v689
        %v1125 = vunpack.c.l.s4 1983009808
        %v1126 = vunpack.c.0.s8 %v1125
        %v1127 = vlaneseq
        %v1128 = vshrl.u32 %v1127, 7
        %v1129 = vsub.s32 %v1126, %v1128
        %v1130 = vrot.slane %v689, %v1129
        %v1132 = vunpack.c.l.s4 1983009808
        %v1133 = vunpack.c.0.s8 %v1132
        %v1134 = vlaneseq
        %v1135 = vshrl.u32 %v1134, 7
        %v1136 = vsub.s32 %v1133, %v1135
        %v1137 = vrot.slane %v1123, %v1136
        %v1138 = vcombine.high %v1130, %v1130
        %v1139 = vcombine.high %v1137, %v1137
        %v1140 = vcombine.high %v690, %v690
        %v1142 = vunpack.c.l.s4 1983009808
        %v1143 = vunpack.c.0.s8 %v1142
        %v1144 = vlaneseq
        %v1145 = vshrl.u32 %v1144, 7
        %v1146 = vsub.s32 %v1143, %v1145
        %v1147 = vrot.slane %v690, %v1146
        %v1149 = vunpack.c.l.s4 1983009808
        %v1150 = vunpack.c.0.s8 %v1149
        %v1151 = vlaneseq
        %v1152 = vshrl.u32 %v1151, 7
        %v1153 = vsub.s32 %v1150, %v1152
        %v1154 = vrot.slane %v1140, %v1153
        %v1155 = vcombine.high %v1147, %v1147
        %v1156 = vcombine.high %v1154, %v1154
        %v1157 = vcombine.high %v691, %v691
        %v1159 = vunpack.c.l.s4 1983009808
        %v1160 = vunpack.c.0.s8 %v1159
        %v1161 = vlaneseq
        %v1162 = vshrl.u32 %v1161, 7
        %v1163 = vsub.s32 %v1160, %v1162
        %v1164 = vrot.slane %v691, %v1163
        %v1166 = vunpack.c.l.s4 1983009808
        %v1167 = vunpack.c.0.s8 %v1166
        %v1168 = vlaneseq
        %v1169 = vshrl.u32 %v1168, 7
        %v1170 = vsub.s32 %v1167, %v1169
        %v1171 = vrot.slane %v1157, %v1170
        %v1172 = vcombine.high %v1164, %v1164
        %v1173 = vcombine.high %v1171, %v1171
        %v1174 = vcombine.high %v692, %v692
        %v1176 = vunpack.c.l.s4 1983009808
        %v1177 = vunpack.c.0.s8 %v1176
        %v1178 = vlaneseq
        %v1179 = vshrl.u32 %v1178, 7
        %v1180 = vsub.s32 %v1177, %v1179
        %v1181 = vrot.slane %v692, %v1180
        %v1183 = vunpack.c.l.s4 1983009808
        %v1184 = vunpack.c.0.s8 %v1183
        %v1185 = vlaneseq
        %v1186 = vshrl.u32 %v1185, 7
        %v1187 = vsub.s32 %v1184, %v1186
        %v1188 = vrot.slane %v1174, %v1187
        %v1189 = vcombine.high %v1181, %v1181
        %v1190 = vcombine.high %v1188, %v1188
        %v1191 = vcombine.high %v693, %v693
        %v1193 = vunpack.c.l.s4 1983009808
        %v1194 = vunpack.c.0.s8 %v1193
        %v1195 = vlaneseq
        %v1196 = vshrl.u32 %v1195, 7
        %v1197 = vsub.s32 %v1194, %v1196
        %v1198 = vrot.slane %v693, %v1197
        %v1200 = vunpack.c.l.s4 1983009808
        %v1201 = vunpack.c.0.s8 %v1200
        %v1202 = vlaneseq
        %v1203 = vshrl.u32 %v1202, 7
        %v1204 = vsub.s32 %v1201, %v1203
        %v1205 = vrot.slane %v1191, %v1204
        %v1206 = vcombine.high %v1198, %v1198
        %v1207 = vcombine.high %v1205, %v1205
        %v1208 = vcombine.high %v694, %v694
        %v1210 = vunpack.c.l.s4 1983009808
        %v1211 = vunpack.c.0.s8 %v1210
        %v1212 = vlaneseq
        %v1213 = vshrl.u32 %v1212, 7
        %v1214 = vsub.s32 %v1211, %v1213
        %v1215 = vrot.slane %v694, %v1214
        %v1217 = vunpack.c.l.s4 1983009808
        %v1218 = vunpack.c.0.s8 %v1217
        %v1219 = vlaneseq
        %v1220 = vshrl.u32 %v1219, 7
        %v1221 = vsub.s32 %v1218, %v1220
        %v1222 = vrot.slane %v1208, %v1221
        %v1223 = vcombine.high %v1215, %v1215
        %v1224 = vcombine.high %v1222, %v1222
        %v1225 = vcombine.high %v695, %v695
        %v1227 = vunpack.c.l.s4 1983009808
        %v1228 = vunpack.c.0.s8 %v1227
        %v1229 = vlaneseq
        %v1230 = vshrl.u32 %v1229, 7
        %v1231 = vsub.s32 %v1228, %v1230
        %v1232 = vrot.slane %v695, %v1231
        %v1234 = vunpack.c.l.s4 1983009808
        %v1235 = vunpack.c.0.s8 %v1234
        %v1236 = vlaneseq
        %v1237 = vshrl.u32 %v1236, 7
        %v1238 = vsub.s32 %v1235, %v1237
        %v1239 = vrot.slane %v1225, %v1238
        %v1240 = vcombine.high %v1232, %v1232
        %v1241 = vcombine.high %v1239, %v1239
        %v1242 = vcombine.high %v696, %v696
        %v1244 = vunpack.c.l.s4 1983009808
        %v1245 = vunpack.c.0.s8 %v1244
        %v1246 = vlaneseq
        %v1247 = vshrl.u32 %v1246, 7
        %v1248 = vsub.s32 %v1245, %v1247
        %v1249 = vrot.slane %v696, %v1248
        %v1251 = vunpack.c.l.s4 1983009808
        %v1252 = vunpack.c.0.s8 %v1251
        %v1253 = vlaneseq
        %v1254 = vshrl.u32 %v1253, 7
        %v1255 = vsub.s32 %v1252, %v1254
        %v1256 = vrot.slane %v1242, %v1255
        %v1257 = vcombine.high %v1249, %v1249
        %v1258 = vcombine.high %v1256, %v1256
        %v1259 = vcombine.high %v697, %v697
        %v1261 = vunpack.c.l.s4 1983009808
        %v1262 = vunpack.c.0.s8 %v1261
        %v1263 = vlaneseq
        %v1264 = vshrl.u32 %v1263, 7
        %v1265 = vsub.s32 %v1262, %v1264
        %v1266 = vrot.slane %v697, %v1265
        %v1268 = vunpack.c.l.s4 1983009808
        %v1269 = vunpack.c.0.s8 %v1268
        %v1270 = vlaneseq
        %v1271 = vshrl.u32 %v1270, 7
        %v1272 = vsub.s32 %v1269, %v1271
        %v1273 = vrot.slane %v1259, %v1272
        %v1274 = vcombine.high %v1266, %v1266
        %v1275 = vcombine.high %v1273, %v1273
        %v1276 = vcombine.high %v698, %v698
        %v1278 = vunpack.c.l.s4 1983009808
        %v1279 = vunpack.c.0.s8 %v1278
        %v1280 = vlaneseq
        %v1281 = vshrl.u32 %v1280, 7
        %v1282 = vsub.s32 %v1279, %v1281
        %v1283 = vrot.slane %v698, %v1282
        %v1285 = vunpack.c.l.s4 1983009808
        %v1286 = vunpack.c.0.s8 %v1285
        %v1287 = vlaneseq
        %v1288 = vshrl.u32 %v1287, 7
        %v1289 = vsub.s32 %v1286, %v1288
        %v1290 = vrot.slane %v1276, %v1289
        %v1291 = vcombine.high %v1283, %v1283
        %v1292 = vcombine.high %v1290, %v1290
        %v1293 = vcombine.high %v699, %v699
        %v1295 = vunpack.c.l.s4 1983009808
        %v1296 = vunpack.c.0.s8 %v1295
        %v1297 = vlaneseq
        %v1298 = vshrl.u32 %v1297, 7
        %v1299 = vsub.s32 %v1296, %v1298
        %v1300 = vrot.slane %v699, %v1299
        %v1302 = vunpack.c.l.s4 1983009808
        %v1303 = vunpack.c.0.s8 %v1302
        %v1304 = vlaneseq
        %v1305 = vshrl.u32 %v1304, 7
        %v1306 = vsub.s32 %v1303, %v1305
        %v1307 = vrot.slane %v1293, %v1306
        %v1308 = vcombine.high %v1300, %v1300
        %v1309 = vcombine.high %v1307, %v1307
        %v1310 = vcombine.high %v700, %v700
        %v1312 = vunpack.c.l.s4 1983009808
        %v1313 = vunpack.c.0.s8 %v1312
        %v1314 = vlaneseq
        %v1315 = vshrl.u32 %v1314, 7
        %v1316 = vsub.s32 %v1313, %v1315
        %v1317 = vrot.slane %v700, %v1316
        %v1319 = vunpack.c.l.s4 1983009808
        %v1320 = vunpack.c.0.s8 %v1319
        %v1321 = vlaneseq
        %v1322 = vshrl.u32 %v1321, 7
        %v1323 = vsub.s32 %v1320, %v1322
        %v1324 = vrot.slane %v1310, %v1323
        %v1325 = vcombine.high %v1317, %v1317
        %v1326 = vcombine.high %v1324, %v1324
        %v1327 = vcombine.high %v701, %v701
        %v1329 = vunpack.c.l.s4 1983009808
        %v1330 = vunpack.c.0.s8 %v1329
        %v1331 = vlaneseq
        %v1332 = vshrl.u32 %v1331, 7
        %v1333 = vsub.s32 %v1330, %v1332
        %v1334 = vrot.slane %v701, %v1333
        %v1336 = vunpack.c.l.s4 1983009808
        %v1337 = vunpack.c.0.s8 %v1336
        %v1338 = vlaneseq
        %v1339 = vshrl.u32 %v1338, 7
        %v1340 = vsub.s32 %v1337, %v1339
        %v1341 = vrot.slane %v1327, %v1340
        %v1342 = vcombine.high %v1334, %v1334
        %v1343 = vcombine.high %v1341, %v1341
        %v1344 = vcombine.high %v702, %v702
        %v1346 = vunpack.c.l.s4 1983009808
        %v1347 = vunpack.c.0.s8 %v1346
        %v1348 = vlaneseq
        %v1349 = vshrl.u32 %v1348, 7
        %v1350 = vsub.s32 %v1347, %v1349
        %v1351 = vrot.slane %v702, %v1350
        %v1353 = vunpack.c.l.s4 1983009808
        %v1354 = vunpack.c.0.s8 %v1353
        %v1355 = vlaneseq
        %v1356 = vshrl.u32 %v1355, 7
        %v1357 = vsub.s32 %v1354, %v1356
        %v1358 = vrot.slane %v1344, %v1357
        %v1359 = vcombine.high %v1351, %v1351
        %v1360 = vcombine.high %v1358, %v1358
        %v1361 = vcombine.high %v703, %v703
        %v1363 = vunpack.c.l.s4 1983009808
        %v1364 = vunpack.c.0.s8 %v1363
        %v1365 = vlaneseq
        %v1366 = vshrl.u32 %v1365, 7
        %v1367 = vsub.s32 %v1364, %v1366
        %v1368 = vrot.slane %v703, %v1367
        %v1370 = vunpack.c.l.s4 1983009808
        %v1371 = vunpack.c.0.s8 %v1370
        %v1372 = vlaneseq
        %v1373 = vshrl.u32 %v1372, 7
        %v1374 = vsub.s32 %v1371, %v1373
        %v1375 = vrot.slane %v1361, %v1374
        %v1376 = vcombine.high %v1368, %v1368
        %v1377 = vcombine.high %v1375, %v1375
        %v1378 = vcombine.high %v704, %v704
        %v1380 = vunpack.c.l.s4 1983009808
        %v1381 = vunpack.c.0.s8 %v1380
        %v1382 = vlaneseq
        %v1383 = vshrl.u32 %v1382, 7
        %v1384 = vsub.s32 %v1381, %v1383
        %v1385 = vrot.slane %v704, %v1384
        %v1387 = vunpack.c.l.s4 1983009808
        %v1388 = vunpack.c.0.s8 %v1387
        %v1389 = vlaneseq
        %v1390 = vshrl.u32 %v1389, 7
        %v1391 = vsub.s32 %v1388, %v1390
        %v1392 = vrot.slane %v1378, %v1391
        %v1393 = vcombine.high %v1385, %v1385
        %v1394 = vcombine.high %v1392, %v1392
        %v1395 = vcombine.high %v705, %v705
        %v1397 = vunpack.c.l.s4 1983009808
        %v1398 = vunpack.c.0.s8 %v1397
        %v1399 = vlaneseq
        %v1400 = vshrl.u32 %v1399, 7
        %v1401 = vsub.s32 %v1398, %v1400
        %v1402 = vrot.slane %v705, %v1401
        %v1404 = vunpack.c.l.s4 1983009808
        %v1405 = vunpack.c.0.s8 %v1404
        %v1406 = vlaneseq
        %v1407 = vshrl.u32 %v1406, 7
        %v1408 = vsub.s32 %v1405, %v1407
        %v1409 = vrot.slane %v1395, %v1408
        %v1410 = vcombine.high %v1402, %v1402
        %v1411 = vcombine.high %v1409, %v1409
        %v1412 = vcombine.high %v706, %v706
        %v1414 = vunpack.c.l.s4 1983009808
        %v1415 = vunpack.c.0.s8 %v1414
        %v1416 = vlaneseq
        %v1417 = vshrl.u32 %v1416, 7
        %v1418 = vsub.s32 %v1415, %v1417
        %v1419 = vrot.slane %v706, %v1418
        %v1421 = vunpack.c.l.s4 1983009808
        %v1422 = vunpack.c.0.s8 %v1421
        %v1423 = vlaneseq
        %v1424 = vshrl.u32 %v1423, 7
        %v1425 = vsub.s32 %v1422, %v1424
        %v1426 = vrot.slane %v1412, %v1425
        %v1427 = vcombine.high %v1419, %v1419
        %v1428 = vcombine.high %v1426, %v1426
        %v1430 = vunpack.c.l.s4 1983009808
        %v1431 = vunpack.c.0.s8 %v1430
        %v1432 = vlaneseq
        %v1433 = vshrl.u32 %v1432, 7
        %v1434 = vsub.s32 %v1431, %v1433
        %v1435 = vrot.slane %v707, %v1434
        %v1436 = vcombine.high %v1435, %v1435
        %v1437 = vcombine.low %v756, %v764
        %v1438 = vcombine.low %v763, %v765
        %v1440 = vunpack.c.l.s4 1983009808
        %v1441 = vunpack.c.0.s8 %v1440
        %v1442 = vlaneseq
        %v1443 = vshrl.u32 %v1442, 7
        %v1444 = vsub.s32 %v1441, %v1443
        %v1445 = vrot.slane %v1437, %v1444
        %v1447 = vunpack.c.l.s4 1983009808
        %v1448 = vunpack.c.0.s8 %v1447
        %v1449 = vlaneseq
        %v1450 = vshrl.u32 %v1449, 7
        %v1451 = vsub.s32 %v1448, %v1450
        %v1452 = vrot.slane %v1438, %v1451
        %v1453 = vcombine.low %v1445, %v1452
        %v1454 = vcombine.low %v773, %v781
        %v1455 = vcombine.low %v780, %v782
        %v1457 = vunpack.c.l.s4 1983009808
        %v1458 = vunpack.c.0.s8 %v1457
        %v1459 = vlaneseq
        %v1460 = vshrl.u32 %v1459, 7
        %v1461 = vsub.s32 %v1458, %v1460
        %v1462 = vrot.slane %v1454, %v1461
        %v1464 = vunpack.c.l.s4 1983009808
        %v1465 = vunpack.c.0.s8 %v1464
        %v1466 = vlaneseq
        %v1467 = vshrl.u32 %v1466, 7
        %v1468 = vsub.s32 %v1465, %v1467
        %v1469 = vrot.slane %v1455, %v1468
        %v1470 = vcombine.low %v1462, %v1469
        %v1472 = vunpack.c.l.s4 1983009808
        %v1473 = vunpack.c.0.s8 %v1472
        %v1474 = vlaneseq
        %v1475 = vshrl.u32 %v1474, 7
        %v1476 = vsub.s32 %v1473, %v1475
        %v1477 = vrot.slane %v790, %v1476
        %v1478 = vcombine.low %v798, %v797
        %v1479 = vcombine.low %v799, %v807
        %v1481 = vunpack.c.l.s4 1983009808
        %v1482 = vunpack.c.0.s8 %v1481
        %v1483 = vlaneseq
        %v1484 = vshrl.u32 %v1483, 7
        %v1485 = vsub.s32 %v1482, %v1484
        %v1486 = vrot.slane %v1478, %v1485
        %v1488 = vunpack.c.l.s4 1983009808
        %v1489 = vunpack.c.0.s8 %v1488
        %v1490 = vlaneseq
        %v1491 = vshrl.u32 %v1490, 7
        %v1492 = vsub.s32 %v1489, %v1491
        %v1493 = vrot.slane %v1479, %v1492
        %v1494 = vcombine.low %v1486, %v1493
        %v1495 = vcombine.low %v815, %v814
        %v1496 = vcombine.low %v816, %v824
        %v1498 = vunpack.c.l.s4 1983009808
        %v1499 = vunpack.c.0.s8 %v1498
        %v1500 = vlaneseq
        %v1501 = vshrl.u32 %v1500, 7
        %v1502 = vsub.s32 %v1499, %v1501
        %v1503 = vrot.slane %v1495, %v1502
        %v1505 = vunpack.c.l.s4 1983009808
        %v1506 = vunpack.c.0.s8 %v1505
        %v1507 = vlaneseq
        %v1508 = vshrl.u32 %v1507, 7
        %v1509 = vsub.s32 %v1506, %v1508
        %v1510 = vrot.slane %v1496, %v1509
        %v1511 = vcombine.low %v1503, %v1510
        %v1513 = vunpack.c.l.s4 1983009808
        %v1514 = vunpack.c.0.s8 %v1513
        %v1515 = vlaneseq
        %v1516 = vshrl.u32 %v1515, 7
        %v1517 = vsub.s32 %v1514, %v1516
        %v1518 = vrot.slane %v832, %v1517
        %v1519 = vcombine.low %v831, %v833
        %v1520 = vcombine.low %v841, %v849
        %v1522 = vunpack.c.l.s4 1983009808
        %v1523 = vunpack.c.0.s8 %v1522
        %v1524 = vlaneseq
        %v1525 = vshrl.u32 %v1524, 7
        %v1526 = vsub.s32 %v1523, %v1525
        %v1527 = vrot.slane %v1519, %v1526
        %v1529 = vunpack.c.l.s4 1983009808
        %v1530 = vunpack.c.0.s8 %v1529
        %v1531 = vlaneseq
        %v1532 = vshrl.u32 %v1531, 7
        %v1533 = vsub.s32 %v1530, %v1532
        %v1534 = vrot.slane %v1520, %v1533
        %v1535 = vcombine.low %v1527, %v1534
        %v1536 = vcombine.low %v848, %v850
        %v1537 = vcombine.low %v858, %v866
        %v1539 = vunpack.c.l.s4 1983009808
        %v1540 = vunpack.c.0.s8 %v1539
        %v1541 = vlaneseq
        %v1542 = vshrl.u32 %v1541, 7
        %v1543 = vsub.s32 %v1540, %v1542
        %v1544 = vrot.slane %v1536, %v1543
        %v1546 = vunpack.c.l.s4 1983009808
        %v1547 = vunpack.c.0.s8 %v1546
        %v1548 = vlaneseq
        %v1549 = vshrl.u32 %v1548, 7
        %v1550 = vsub.s32 %v1547, %v1549
        %v1551 = vrot.slane %v1537, %v1550
        %v1552 = vcombine.low %v1544, %v1551
        %v1554 = vunpack.c.l.s4 1983009808
        %v1555 = vunpack.c.0.s8 %v1554
        %v1556 = vlaneseq
        %v1557 = vshrl.u32 %v1556, 7
        %v1558 = vsub.s32 %v1555, %v1557
        %v1559 = vrot.slane %v865, %v1558
        %v1560 = vcombine.low %v867, %v875
        %v1561 = vcombine.low %v883, %v882
        %v1563 = vunpack.c.l.s4 1983009808
        %v1564 = vunpack.c.0.s8 %v1563
        %v1565 = vlaneseq
        %v1566 = vshrl.u32 %v1565, 7
        %v1567 = vsub.s32 %v1564, %v1566
        %v1568 = vrot.slane %v1560, %v1567
        %v1570 = vunpack.c.l.s4 1983009808
        %v1571 = vunpack.c.0.s8 %v1570
        %v1572 = vlaneseq
        %v1573 = vshrl.u32 %v1572, 7
        %v1574 = vsub.s32 %v1571, %v1573
        %v1575 = vrot.slane %v1561, %v1574
        %v1576 = vcombine.low %v1568, %v1575
        %v1577 = vcombine.low %v884, %v892
        %v1578 = vcombine.low %v900, %v899
        %v1580 = vunpack.c.l.s4 1983009808
        %v1581 = vunpack.c.0.s8 %v1580
        %v1582 = vlaneseq
        %v1583 = vshrl.u32 %v1582, 7
        %v1584 = vsub.s32 %v1581, %v1583
        %v1585 = vrot.slane %v1577, %v1584
        %v1587 = vunpack.c.l.s4 1983009808
        %v1588 = vunpack.c.0.s8 %v1587
        %v1589 = vlaneseq
        %v1590 = vshrl.u32 %v1589, 7
        %v1591 = vsub.s32 %v1588, %v1590
        %v1592 = vrot.slane %v1578, %v1591
        %v1593 = vcombine.low %v1585, %v1592
        %v1595 = vunpack.c.l.s4 1983009808
        %v1596 = vunpack.c.0.s8 %v1595
        %v1597 = vlaneseq
        %v1598 = vshrl.u32 %v1597, 7
        %v1599 = vsub.s32 %v1596, %v1598
        %v1600 = vrot.slane %v901, %v1599
        %v1601 = vcombine.low %v909, %v917
        %v1602 = vcombine.low %v916, %v918
        %v1604 = vunpack.c.l.s4 1983009808
        %v1605 = vunpack.c.0.s8 %v1604
        %v1606 = vlaneseq
        %v1607 = vshrl.u32 %v1606, 7
        %v1608 = vsub.s32 %v1605, %v1607
        %v1609 = vrot.slane %v1601, %v1608
        %v1611 = vunpack.c.l.s4 1983009808
        %v1612 = vunpack.c.0.s8 %v1611
        %v1613 = vlaneseq
        %v1614 = vshrl.u32 %v1613, 7
        %v1615 = vsub.s32 %v1612, %v1614
        %v1616 = vrot.slane %v1602, %v1615
        %v1617 = vcombine.low %v1609, %v1616
        %v1618 = vcombine.low %v926, %v934
        %v1619 = vcombine.low %v933, %v935
        %v1621 = vunpack.c.l.s4 1983009808
        %v1622 = vunpack.c.0.s8 %v1621
        %v1623 = vlaneseq
        %v1624 = vshrl.u32 %v1623, 7
        %v1625 = vsub.s32 %v1622, %v1624
        %v1626 = vrot.slane %v1618, %v1625
        %v1628 = vunpack.c.l.s4 1983009808
        %v1629 = vunpack.c.0.s8 %v1628
        %v1630 = vlaneseq
        %v1631 = vshrl.u32 %v1630, 7
        %v1632 = vsub.s32 %v1629, %v1631
        %v1633 = vrot.slane %v1619, %v1632
        %v1634 = vcombine.low %v1626, %v1633
        %v1636 = vunpack.c.l.s4 1983009808
        %v1637 = vunpack.c.0.s8 %v1636
        %v1638 = vlaneseq
        %v1639 = vshrl.u32 %v1638, 7
        %v1640 = vsub.s32 %v1637, %v1639
        %v1641 = vrot.slane %v943, %v1640
        %v1642 = vcombine.low %v951, %v950
        %v1643 = vcombine.low %v952, %v960
        %v1645 = vunpack.c.l.s4 1983009808
        %v1646 = vunpack.c.0.s8 %v1645
        %v1647 = vlaneseq
        %v1648 = vshrl.u32 %v1647, 7
        %v1649 = vsub.s32 %v1646, %v1648
        %v1650 = vrot.slane %v1642, %v1649
        %v1652 = vunpack.c.l.s4 1983009808
        %v1653 = vunpack.c.0.s8 %v1652
        %v1654 = vlaneseq
        %v1655 = vshrl.u32 %v1654, 7
        %v1656 = vsub.s32 %v1653, %v1655
        %v1657 = vrot.slane %v1643, %v1656
        %v1658 = vcombine.low %v1650, %v1657
        %v1659 = vcombine.low %v968, %v967
        %v1660 = vcombine.low %v969, %v977
        %v1662 = vunpack.c.l.s4 1983009808
        %v1663 = vunpack.c.0.s8 %v1662
        %v1664 = vlaneseq
        %v1665 = vshrl.u32 %v1664, 7
        %v1666 = vsub.s32 %v1663, %v1665
        %v1667 = vrot.slane %v1659, %v1666
        %v1669 = vunpack.c.l.s4 1983009808
        %v1670 = vunpack.c.0.s8 %v1669
        %v1671 = vlaneseq
        %v1672 = vshrl.u32 %v1671, 7
        %v1673 = vsub.s32 %v1670, %v1672
        %v1674 = vrot.slane %v1660, %v1673
        %v1675 = vcombine.low %v1667, %v1674
        %v1677 = vunpack.c.l.s4 1983009808
        %v1678 = vunpack.c.0.s8 %v1677
        %v1679 = vlaneseq
        %v1680 = vshrl.u32 %v1679, 7
        %v1681 = vsub.s32 %v1678, %v1680
        %v1682 = vrot.slane %v985, %v1681
        %v1683 = vcombine.low %v984, %v986
        %v1684 = vcombine.low %v994, %v1002
        %v1686 = vunpack.c.l.s4 1983009808
        %v1687 = vunpack.c.0.s8 %v1686
        %v1688 = vlaneseq
        %v1689 = vshrl.u32 %v1688, 7
        %v1690 = vsub.s32 %v1687, %v1689
        %v1691 = vrot.slane %v1683, %v1690
        %v1693 = vunpack.c.l.s4 1983009808
        %v1694 = vunpack.c.0.s8 %v1693
        %v1695 = vlaneseq
        %v1696 = vshrl.u32 %v1695, 7
        %v1697 = vsub.s32 %v1694, %v1696
        %v1698 = vrot.slane %v1684, %v1697
        %v1699 = vcombine.low %v1691, %v1698
        %v1700 = vcombine.low %v1001, %v1003
        %v1701 = vcombine.low %v1011, %v1019
        %v1703 = vunpack.c.l.s4 1983009808
        %v1704 = vunpack.c.0.s8 %v1703
        %v1705 = vlaneseq
        %v1706 = vshrl.u32 %v1705, 7
        %v1707 = vsub.s32 %v1704, %v1706
        %v1708 = vrot.slane %v1700, %v1707
        %v1710 = vunpack.c.l.s4 1983009808
        %v1711 = vunpack.c.0.s8 %v1710
        %v1712 = vlaneseq
        %v1713 = vshrl.u32 %v1712, 7
        %v1714 = vsub.s32 %v1711, %v1713
        %v1715 = vrot.slane %v1701, %v1714
        %v1716 = vcombine.low %v1708, %v1715
        %v1718 = vunpack.c.l.s4 1983009808
        %v1719 = vunpack.c.0.s8 %v1718
        %v1720 = vlaneseq
        %v1721 = vshrl.u32 %v1720, 7
        %v1722 = vsub.s32 %v1719, %v1721
        %v1723 = vrot.slane %v1018, %v1722
        %v1724 = vcombine.low %v1020, %v1028
        %v1725 = vcombine.low %v1036, %v1035
        %v1727 = vunpack.c.l.s4 1983009808
        %v1728 = vunpack.c.0.s8 %v1727
        %v1729 = vlaneseq
        %v1730 = vshrl.u32 %v1729, 7
        %v1731 = vsub.s32 %v1728, %v1730
        %v1732 = vrot.slane %v1724, %v1731
        %v1734 = vunpack.c.l.s4 1983009808
        %v1735 = vunpack.c.0.s8 %v1734
        %v1736 = vlaneseq
        %v1737 = vshrl.u32 %v1736, 7
        %v1738 = vsub.s32 %v1735, %v1737
        %v1739 = vrot.slane %v1725, %v1738
        %v1740 = vcombine.low %v1732, %v1739
        %v1741 = vcombine.low %v1037, %v1045
        %v1742 = vcombine.low %v1053, %v1052
        %v1744 = vunpack.c.l.s4 1983009808
        %v1745 = vunpack.c.0.s8 %v1744
        %v1746 = vlaneseq
        %v1747 = vshrl.u32 %v1746, 7
        %v1748 = vsub.s32 %v1745, %v1747
        %v1749 = vrot.slane %v1741, %v1748
        %v1751 = vunpack.c.l.s4 1983009808
        %v1752 = vunpack.c.0.s8 %v1751
        %v1753 = vlaneseq
        %v1754 = vshrl.u32 %v1753, 7
        %v1755 = vsub.s32 %v1752, %v1754
        %v1756 = vrot.slane %v1742, %v1755
        %v1757 = vcombine.low %v1749, %v1756
        %v1759 = vunpack.c.l.s4 1983009808
        %v1760 = vunpack.c.0.s8 %v1759
        %v1761 = vlaneseq
        %v1762 = vshrl.u32 %v1761, 7
        %v1763 = vsub.s32 %v1760, %v1762
        %v1764 = vrot.slane %v1054, %v1763
        %v1765 = vcombine.low %v1062, %v1070
        %v1766 = vcombine.low %v1069, %v1071
        %v1768 = vunpack.c.l.s4 1983009808
        %v1769 = vunpack.c.0.s8 %v1768
        %v1770 = vlaneseq
        %v1771 = vshrl.u32 %v1770, 7
        %v1772 = vsub.s32 %v1769, %v1771
        %v1773 = vrot.slane %v1765, %v1772
        %v1775 = vunpack.c.l.s4 1983009808
        %v1776 = vunpack.c.0.s8 %v1775
        %v1777 = vlaneseq
        %v1778 = vshrl.u32 %v1777, 7
        %v1779 = vsub.s32 %v1776, %v1778
        %v1780 = vrot.slane %v1766, %v1779
        %v1781 = vcombine.low %v1773, %v1780
        %v1782 = vcombine.low %v1079, %v1087
        %v1783 = vcombine.low %v1086, %v1088
        %v1785 = vunpack.c.l.s4 1983009808
        %v1786 = vunpack.c.0.s8 %v1785
        %v1787 = vlaneseq
        %v1788 = vshrl.u32 %v1787, 7
        %v1789 = vsub.s32 %v1786, %v1788
        %v1790 = vrot.slane %v1782, %v1789
        %v1792 = vunpack.c.l.s4 1983009808
        %v1793 = vunpack.c.0.s8 %v1792
        %v1794 = vlaneseq
        %v1795 = vshrl.u32 %v1794, 7
        %v1796 = vsub.s32 %v1793, %v1795
        %v1797 = vrot.slane %v1783, %v1796
        %v1798 = vcombine.low %v1790, %v1797
        %v1800 = vunpack.c.l.s4 1983009808
        %v1801 = vunpack.c.0.s8 %v1800
        %v1802 = vlaneseq
        %v1803 = vshrl.u32 %v1802, 7
        %v1804 = vsub.s32 %v1801, %v1803
        %v1805 = vrot.slane %v1096, %v1804
        %v1806 = vcombine.low %v1104, %v1103
        %v1807 = vcombine.low %v1105, %v1113
        %v1809 = vunpack.c.l.s4 1983009808
        %v1810 = vunpack.c.0.s8 %v1809
        %v1811 = vlaneseq
        %v1812 = vshrl.u32 %v1811, 7
        %v1813 = vsub.s32 %v1810, %v1812
        %v1814 = vrot.slane %v1806, %v1813
        %v1816 = vunpack.c.l.s4 1983009808
        %v1817 = vunpack.c.0.s8 %v1816
        %v1818 = vlaneseq
        %v1819 = vshrl.u32 %v1818, 7
        %v1820 = vsub.s32 %v1817, %v1819
        %v1821 = vrot.slane %v1807, %v1820
        %v1822 = vcombine.low %v1814, %v1821
        %v1823 = vcombine.low %v1121, %v1120
        %v1824 = vcombine.low %v1122, %v1130
        %v1826 = vunpack.c.l.s4 1983009808
        %v1827 = vunpack.c.0.s8 %v1826
        %v1828 = vlaneseq
        %v1829 = vshrl.u32 %v1828, 7
        %v1830 = vsub.s32 %v1827, %v1829
        %v1831 = vrot.slane %v1823, %v1830
        %v1833 = vunpack.c.l.s4 1983009808
        %v1834 = vunpack.c.0.s8 %v1833
        %v1835 = vlaneseq
        %v1836 = vshrl.u32 %v1835, 7
        %v1837 = vsub.s32 %v1834, %v1836
        %v1838 = vrot.slane %v1824, %v1837
        %v1839 = vcombine.low %v1831, %v1838
        %v1841 = vunpack.c.l.s4 1983009808
        %v1842 = vunpack.c.0.s8 %v1841
        %v1843 = vlaneseq
        %v1844 = vshrl.u32 %v1843, 7
        %v1845 = vsub.s32 %v1842, %v1844
        %v1846 = vrot.slane %v1138, %v1845
        %v1847 = vcombine.low %v1137, %v1139
        %v1848 = vcombine.low %v1147, %v1155
        %v1850 = vunpack.c.l.s4 1983009808
        %v1851 = vunpack.c.0.s8 %v1850
        %v1852 = vlaneseq
        %v1853 = vshrl.u32 %v1852, 7
        %v1854 = vsub.s32 %v1851, %v1853
        %v1855 = vrot.slane %v1847, %v1854
        %v1857 = vunpack.c.l.s4 1983009808
        %v1858 = vunpack.c.0.s8 %v1857
        %v1859 = vlaneseq
        %v1860 = vshrl.u32 %v1859, 7
        %v1861 = vsub.s32 %v1858, %v1860
        %v1862 = vrot.slane %v1848, %v1861
        %v1863 = vcombine.low %v1855, %v1862
        %v1864 = vcombine.low %v1154, %v1156
        %v1865 = vcombine.low %v1164, %v1172
        %v1867 = vunpack.c.l.s4 1983009808
        %v1868 = vunpack.c.0.s8 %v1867
        %v1869 = vlaneseq
        %v1870 = vshrl.u32 %v1869, 7
        %v1871 = vsub.s32 %v1868, %v1870
        %v1872 = vrot.slane %v1864, %v1871
        %v1874 = vunpack.c.l.s4 1983009808
        %v1875 = vunpack.c.0.s8 %v1874
        %v1876 = vlaneseq
        %v1877 = vshrl.u32 %v1876, 7
        %v1878 = vsub.s32 %v1875, %v1877
        %v1879 = vrot.slane %v1865, %v1878
        %v1880 = vcombine.low %v1872, %v1879
        %v1882 = vunpack.c.l.s4 1983009808
        %v1883 = vunpack.c.0.s8 %v1882
        %v1884 = vlaneseq
        %v1885 = vshrl.u32 %v1884, 7
        %v1886 = vsub.s32 %v1883, %v1885
        %v1887 = vrot.slane %v1171, %v1886
        %v1888 = vcombine.low %v1173, %v1181
        %v1889 = vcombine.low %v1189, %v1188
        %v1891 = vunpack.c.l.s4 1983009808
        %v1892 = vunpack.c.0.s8 %v1891
        %v1893 = vlaneseq
        %v1894 = vshrl.u32 %v1893, 7
        %v1895 = vsub.s32 %v1892, %v1894
        %v1896 = vrot.slane %v1888, %v1895
        %v1898 = vunpack.c.l.s4 1983009808
        %v1899 = vunpack.c.0.s8 %v1898
        %v1900 = vlaneseq
        %v1901 = vshrl.u32 %v1900, 7
        %v1902 = vsub.s32 %v1899, %v1901
        %v1903 = vrot.slane %v1889, %v1902
        %v1904 = vcombine.low %v1896, %v1903
        %v1905 = vcombine.low %v1190, %v1198
        %v1906 = vcombine.low %v1206, %v1205
        %v1908 = vunpack.c.l.s4 1983009808
        %v1909 = vunpack.c.0.s8 %v1908
        %v1910 = vlaneseq
        %v1911 = vshrl.u32 %v1910, 7
        %v1912 = vsub.s32 %v1909, %v1911
        %v1913 = vrot.slane %v1905, %v1912
        %v1915 = vunpack.c.l.s4 1983009808
        %v1916 = vunpack.c.0.s8 %v1915
        %v1917 = vlaneseq
        %v1918 = vshrl.u32 %v1917, 7
        %v1919 = vsub.s32 %v1916, %v1918
        %v1920 = vrot.slane %v1906, %v1919
        %v1921 = vcombine.low %v1913, %v1920
        %v1923 = vunpack.c.l.s4 1983009808
        %v1924 = vunpack.c.0.s8 %v1923
        %v1925 = vlaneseq
        %v1926 = vshrl.u32 %v1925, 7
        %v1927 = vsub.s32 %v1924, %v1926
        %v1928 = vrot.slane %v1207, %v1927
        %v1929 = vcombine.low %v1215, %v1223
        %v1930 = vcombine.low %v1222, %v1224
        %v1932 = vunpack.c.l.s4 1983009808
        %v1933 = vunpack.c.0.s8 %v1932
        %v1934 = vlaneseq
        %v1935 = vshrl.u32 %v1934, 7
        %v1936 = vsub.s32 %v1933, %v1935
        %v1937 = vrot.slane %v1929, %v1936
        %v1939 = vunpack.c.l.s4 1983009808
        %v1940 = vunpack.c.0.s8 %v1939
        %v1941 = vlaneseq
        %v1942 = vshrl.u32 %v1941, 7
        %v1943 = vsub.s32 %v1940, %v1942
        %v1944 = vrot.slane %v1930, %v1943
        %v1945 = vcombine.low %v1937, %v1944
        %v1946 = vcombine.low %v1232, %v1240
        %v1947 = vcombine.low %v1239, %v1241
        %v1949 = vunpack.c.l.s4 1983009808
        %v1950 = vunpack.c.0.s8 %v1949
        %v1951 = vlaneseq
        %v1952 = vshrl.u32 %v1951, 7
        %v1953 = vsub.s32 %v1950, %v1952
        %v1954 = vrot.slane %v1946, %v1953
        %v1956 = vunpack.c.l.s4 1983009808
        %v1957 = vunpack.c.0.s8 %v1956
        %v1958 = vlaneseq
        %v1959 = vshrl.u32 %v1958, 7
        %v1960 = vsub.s32 %v1957, %v1959
        %v1961 = vrot.slane %v1947, %v1960
        %v1962 = vcombine.low %v1954, %v1961
        %v1964 = vunpack.c.l.s4 1983009808
        %v1965 = vunpack.c.0.s8 %v1964
        %v1966 = vlaneseq
        %v1967 = vshrl.u32 %v1966, 7
        %v1968 = vsub.s32 %v1965, %v1967
        %v1969 = vrot.slane %v1249, %v1968
        %v1970 = vcombine.low %v1257, %v1256
        %v1971 = vcombine.low %v1258, %v1266
        %v1973 = vunpack.c.l.s4 1983009808
        %v1974 = vunpack.c.0.s8 %v1973
        %v1975 = vlaneseq
        %v1976 = vshrl.u32 %v1975, 7
        %v1977 = vsub.s32 %v1974, %v1976
        %v1978 = vrot.slane %v1970, %v1977
        %v1980 = vunpack.c.l.s4 1983009808
        %v1981 = vunpack.c.0.s8 %v1980
        %v1982 = vlaneseq
        %v1983 = vshrl.u32 %v1982, 7
        %v1984 = vsub.s32 %v1981, %v1983
        %v1985 = vrot.slane %v1971, %v1984
        %v1986 = vcombine.low %v1978, %v1985
        %v1987 = vcombine.low %v1274, %v1273
        %v1988 = vcombine.low %v1275, %v1283
        %v1990 = vunpack.c.l.s4 1983009808
        %v1991 = vunpack.c.0.s8 %v1990
        %v1992 = vlaneseq
        %v1993 = vshrl.u32 %v1992, 7
        %v1994 = vsub.s32 %v1991, %v1993
        %v1995 = vrot.slane %v1987, %v1994
        %v1997 = vunpack.c.l.s4 1983009808
        %v1998 = vunpack.c.0.s8 %v1997
        %v1999 = vlaneseq
        %v2000 = vshrl.u32 %v1999, 7
        %v2001 = vsub.s32 %v1998, %v2000
        %v2002 = vrot.slane %v1988, %v2001
        %v2003 = vcombine.low %v1995, %v2002
        %v2005 = vunpack.c.l.s4 1983009808
        %v2006 = vunpack.c.0.s8 %v2005
        %v2007 = vlaneseq
        %v2008 = vshrl.u32 %v2007, 7
        %v2009 = vsub.s32 %v2006, %v2008
        %v2010 = vrot.slane %v1291, %v2009
        %v2011 = vcombine.low %v1290, %v1292
        %v2012 = vcombine.low %v1300, %v1308
        %v2014 = vunpack.c.l.s4 1983009808
        %v2015 = vunpack.c.0.s8 %v2014
        %v2016 = vlaneseq
        %v2017 = vshrl.u32 %v2016, 7
        %v2018 = vsub.s32 %v2015, %v2017
        %v2019 = vrot.slane %v2011, %v2018
        %v2021 = vunpack.c.l.s4 1983009808
        %v2022 = vunpack.c.0.s8 %v2021
        %v2023 = vlaneseq
        %v2024 = vshrl.u32 %v2023, 7
        %v2025 = vsub.s32 %v2022, %v2024
        %v2026 = vrot.slane %v2012, %v2025
        %v2027 = vcombine.low %v2019, %v2026
        %v2028 = vcombine.low %v1307, %v1309
        %v2029 = vcombine.low %v1317, %v1325
        %v2031 = vunpack.c.l.s4 1983009808
        %v2032 = vunpack.c.0.s8 %v2031
        %v2033 = vlaneseq
        %v2034 = vshrl.u32 %v2033, 7
        %v2035 = vsub.s32 %v2032, %v2034
        %v2036 = vrot.slane %v2028, %v2035
        %v2038 = vunpack.c.l.s4 1983009808
        %v2039 = vunpack.c.0.s8 %v2038
        %v2040 = vlaneseq
        %v2041 = vshrl.u32 %v2040, 7
        %v2042 = vsub.s32 %v2039, %v2041
        %v2043 = vrot.slane %v2029, %v2042
        %v2044 = vcombine.low %v2036, %v2043
        %v2046 = vunpack.c.l.s4 1983009808
        %v2047 = vunpack.c.0.s8 %v2046
        %v2048 = vlaneseq
        %v2049 = vshrl.u32 %v2048, 7
        %v2050 = vsub.s32 %v2047, %v2049
        %v2051 = vrot.slane %v1324, %v2050
        %v2052 = vcombine.low %v1326, %v1334
        %v2053 = vcombine.low %v1342, %v1341
        %v2055 = vunpack.c.l.s4 1983009808
        %v2056 = vunpack.c.0.s8 %v2055
        %v2057 = vlaneseq
        %v2058 = vshrl.u32 %v2057, 7
        %v2059 = vsub.s32 %v2056, %v2058
        %v2060 = vrot.slane %v2052, %v2059
        %v2062 = vunpack.c.l.s4 1983009808
        %v2063 = vunpack.c.0.s8 %v2062
        %v2064 = vlaneseq
        %v2065 = vshrl.u32 %v2064, 7
        %v2066 = vsub.s32 %v2063, %v2065
        %v2067 = vrot.slane %v2053, %v2066
        %v2068 = vcombine.low %v2060, %v2067
        %v2069 = vcombine.low %v1343, %v1351
        %v2070 = vcombine.low %v1359, %v1358
        %v2072 = vunpack.c.l.s4 1983009808
        %v2073 = vunpack.c.0.s8 %v2072
        %v2074 = vlaneseq
        %v2075 = vshrl.u32 %v2074, 7
        %v2076 = vsub.s32 %v2073, %v2075
        %v2077 = vrot.slane %v2069, %v2076
        %v2079 = vunpack.c.l.s4 1983009808
        %v2080 = vunpack.c.0.s8 %v2079
        %v2081 = vlaneseq
        %v2082 = vshrl.u32 %v2081, 7
        %v2083 = vsub.s32 %v2080, %v2082
        %v2084 = vrot.slane %v2070, %v2083
        %v2085 = vcombine.low %v2077, %v2084
        %v2087 = vunpack.c.l.s4 1983009808
        %v2088 = vunpack.c.0.s8 %v2087
        %v2089 = vlaneseq
        %v2090 = vshrl.u32 %v2089, 7
        %v2091 = vsub.s32 %v2088, %v2090
        %v2092 = vrot.slane %v1360, %v2091
        %v2093 = vcombine.low %v1368, %v1376
        %v2094 = vcombine.low %v1375, %v1377
        %v2096 = vunpack.c.l.s4 1983009808
        %v2097 = vunpack.c.0.s8 %v2096
        %v2098 = vlaneseq
        %v2099 = vshrl.u32 %v2098, 7
        %v2100 = vsub.s32 %v2097, %v2099
        %v2101 = vrot.slane %v2093, %v2100
        %v2103 = vunpack.c.l.s4 1983009808
        %v2104 = vunpack.c.0.s8 %v2103
        %v2105 = vlaneseq
        %v2106 = vshrl.u32 %v2105, 7
        %v2107 = vsub.s32 %v2104, %v2106
        %v2108 = vrot.slane %v2094, %v2107
        %v2109 = vcombine.low %v2101, %v2108
        %v2110 = vcombine.low %v1385, %v1393
        %v2111 = vcombine.low %v1392, %v1394
        %v2113 = vunpack.c.l.s4 1983009808
        %v2114 = vunpack.c.0.s8 %v2113
        %v2115 = vlaneseq
        %v2116 = vshrl.u32 %v2115, 7
        %v2117 = vsub.s32 %v2114, %v2116
        %v2118 = vrot.slane %v2110, %v2117
        %v2120 = vunpack.c.l.s4 1983009808
        %v2121 = vunpack.c.0.s8 %v2120
        %v2122 = vlaneseq
        %v2123 = vshrl.u32 %v2122, 7
        %v2124 = vsub.s32 %v2121, %v2123
        %v2125 = vrot.slane %v2111, %v2124
        %v2126 = vcombine.low %v2118, %v2125
        %v2128 = vunpack.c.l.s4 1983009808
        %v2129 = vunpack.c.0.s8 %v2128
        %v2130 = vlaneseq
        %v2131 = vshrl.u32 %v2130, 7
        %v2132 = vsub.s32 %v2129, %v2131
        %v2133 = vrot.slane %v1402, %v2132
        %v2134 = vcombine.low %v1410, %v1409
        %v2135 = vcombine.low %v1411, %v1419
        %v2137 = vunpack.c.l.s4 1983009808
        %v2138 = vunpack.c.0.s8 %v2137
        %v2139 = vlaneseq
        %v2140 = vshrl.u32 %v2139, 7
        %v2141 = vsub.s32 %v2138, %v2140
        %v2142 = vrot.slane %v2134, %v2141
        %v2144 = vunpack.c.l.s4 1983009808
        %v2145 = vunpack.c.0.s8 %v2144
        %v2146 = vlaneseq
        %v2147 = vshrl.u32 %v2146, 7
        %v2148 = vsub.s32 %v2145, %v2147
        %v2149 = vrot.slane %v2135, %v2148
        %v2150 = vcombine.low %v2142, %v2149
        %v2151 = vcombine.low %v1427, %v1426
        %v2152 = vcombine.low %v1428, %v1435
        %v2154 = vunpack.c.l.s4 1983009808
        %v2155 = vunpack.c.0.s8 %v2154
        %v2156 = vlaneseq
        %v2157 = vshrl.u32 %v2156, 7
        %v2158 = vsub.s32 %v2155, %v2157
        %v2159 = vrot.slane %v2151, %v2158
        %v2161 = vunpack.c.l.s4 1983009808
        %v2162 = vunpack.c.0.s8 %v2161
        %v2163 = vlaneseq
        %v2164 = vshrl.u32 %v2163, 7
        %v2165 = vsub.s32 %v2162, %v2164
        %v2166 = vrot.slane %v2152, %v2165
        %v2167 = vcombine.low %v2159, %v2166
        %v2169 = vunpack.c.l.s4 1983009808
        %v2170 = vunpack.c.0.s8 %v2169
        %v2171 = vlaneseq
        %v2172 = vshrl.u32 %v2171, 7
        %v2173 = vsub.s32 %v2170, %v2172
        %v2174 = vrot.slane %v1436, %v2173
        %v2229 = vpack.c.bf16 %v1470, %v1453
        %v2230 = vpack.c.bf16 %v1477, %v1477
        %v2231 = vpack.c.bf16 %v1511, %v1494
        %v2232 = vpack.c.bf16 %v1518, %v1518
        %v2233 = vpack.c.bf16 %v1552, %v1535
        %v2234 = vpack.c.bf16 %v1559, %v1559
        %v2235 = vpack.c.bf16 %v1593, %v1576
        %v2236 = vpack.c.bf16 %v1600, %v1600
        %v2237 = vpack.c.bf16 %v1634, %v1617
        %v2238 = vpack.c.bf16 %v1641, %v1641
        %v2239 = vpack.c.bf16 %v1675, %v1658
        %v2240 = vpack.c.bf16 %v1682, %v1682
        %v2241 = vpack.c.bf16 %v1716, %v1699
        %v2242 = vpack.c.bf16 %v1723, %v1723
        %v2243 = vpack.c.bf16 %v1757, %v1740
        %v2244 = vpack.c.bf16 %v1764, %v1764
        %v2245 = vpack.c.bf16 %v1798, %v1781
        %v2246 = vpack.c.bf16 %v1805, %v1805
        %v2247 = vpack.c.bf16 %v1839, %v1822
        %v2248 = vpack.c.bf16 %v1846, %v1846
        %v2249 = vpack.c.bf16 %v1880, %v1863
        %v2250 = vpack.c.bf16 %v1887, %v1887
        %v2251 = vpack.c.bf16 %v1921, %v1904
        %v2252 = vpack.c.bf16 %v1928, %v1928
        %v2253 = vpack.c.bf16 %v1962, %v1945
        %v2254 = vpack.c.bf16 %v1969, %v1969
        %v2255 = vpack.c.bf16 %v2003, %v1986
        %v2256 = vpack.c.bf16 %v2010, %v2010
        %v2257 = vpack.c.bf16 %v2044, %v2027
        %v2258 = vpack.c.bf16 %v2051, %v2051
        %v2259 = vpack.c.bf16 %v2085, %v2068
        %v2260 = vpack.c.bf16 %v2092, %v2092
        %v2261 = vpack.c.bf16 %v2126, %v2109
        %v2262 = vpack.c.bf16 %v2133, %v2133
        %v2263 = vpack.c.bf16 %v2167, %v2150
        %v2264 = vpack.c.bf16 %v2174, %v2174
        %v2301 = vunpack.c.l.b16 %v2229
        %v2302 = vunpack.c.h.b16 %v2229
        %v2303 = vunpack.c.l.b16 %v2230
        %v2304 = vunpack.c.l.b16 %v2231
        %v2305 = vunpack.c.h.b16 %v2231
        %v2306 = vunpack.c.l.b16 %v2232
        %v2307 = vunpack.c.l.b16 %v2233
        %v2308 = vunpack.c.h.b16 %v2233
        %v2309 = vunpack.c.l.b16 %v2234
        %v2310 = vunpack.c.l.b16 %v2235
        %v2311 = vunpack.c.h.b16 %v2235
        %v2312 = vunpack.c.l.b16 %v2236
        %v2313 = vunpack.c.l.b16 %v2237
        %v2314 = vunpack.c.h.b16 %v2237
        %v2315 = vunpack.c.l.b16 %v2238
        %v2316 = vunpack.c.l.b16 %v2239
        %v2317 = vunpack.c.h.b16 %v2239
        %v2318 = vunpack.c.l.b16 %v2240
        %v2319 = vunpack.c.l.b16 %v2241
        %v2320 = vunpack.c.h.b16 %v2241
        %v2321 = vunpack.c.l.b16 %v2242
        %v2322 = vunpack.c.l.b16 %v2243
        %v2323 = vunpack.c.h.b16 %v2243
        %v2324 = vunpack.c.l.b16 %v2244
        %v2325 = vunpack.c.l.b16 %v2245
        %v2326 = vunpack.c.h.b16 %v2245
        %v2327 = vunpack.c.l.b16 %v2246
        %v2328 = vunpack.c.l.b16 %v2247
        %v2329 = vunpack.c.h.b16 %v2247
        %v2330 = vunpack.c.l.b16 %v2248
        %v2331 = vunpack.c.l.b16 %v2249
        %v2332 = vunpack.c.h.b16 %v2249
        %v2333 = vunpack.c.l.b16 %v2250
        %v2334 = vunpack.c.l.b16 %v2251
        %v2335 = vunpack.c.h.b16 %v2251
        %v2336 = vunpack.c.l.b16 %v2252
        %v2337 = vunpack.c.l.b16 %v2253
        %v2338 = vunpack.c.h.b16 %v2253
        %v2339 = vunpack.c.l.b16 %v2254
        %v2340 = vunpack.c.l.b16 %v2255
        %v2341 = vunpack.c.h.b16 %v2255
        %v2342 = vunpack.c.l.b16 %v2256
        %v2343 = vunpack.c.l.b16 %v2257
        %v2344 = vunpack.c.h.b16 %v2257
        %v2345 = vunpack.c.l.b16 %v2258
        %v2346 = vunpack.c.l.b16 %v2259
        %v2347 = vunpack.c.h.b16 %v2259
        %v2348 = vunpack.c.l.b16 %v2260
        %v2349 = vunpack.c.l.b16 %v2261
        %v2350 = vunpack.c.h.b16 %v2261
        %v2351 = vunpack.c.l.b16 %v2262
        %v2352 = vunpack.c.l.b16 %v2263
        %v2353 = vunpack.c.h.b16 %v2263
        %v2354 = vunpack.c.l.b16 %v2264
        %v2355 = vpack.c.b16 %v2301, %v2301
        %v2356 = vpack.c.b16 %v2302, %v2302
        %v2357 = vpack.c.b16 %v2303, %v2303
        %v2358 = vpack.c.b16 %v2304, %v2304
        %v2359 = vpack.c.b16 %v2305, %v2305
        %v2360 = vpack.c.b16 %v2306, %v2306
        %v2361 = vpack.c.b16 %v2307, %v2307
        %v2362 = vpack.c.b16 %v2308, %v2308
        %v2363 = vpack.c.b16 %v2309, %v2309
        %v2364 = vpack.c.b16 %v2310, %v2310
        %v2365 = vpack.c.b16 %v2311, %v2311
        %v2366 = vpack.c.b16 %v2312, %v2312
        %v2367 = vpack.c.b16 %v2313, %v2313
        %v2368 = vpack.c.b16 %v2314, %v2314
        %v2369 = vpack.c.b16 %v2315, %v2315
        %v2370 = vpack.c.b16 %v2316, %v2316
        %v2371 = vpack.c.b16 %v2317, %v2317
        %v2372 = vpack.c.b16 %v2318, %v2318
        %v2373 = vpack.c.b16 %v2319, %v2319
        %v2374 = vpack.c.b16 %v2320, %v2320
        %v2375 = vpack.c.b16 %v2321, %v2321
        %v2376 = vpack.c.b16 %v2322, %v2322
        %v2377 = vpack.c.b16 %v2323, %v2323
        %v2378 = vpack.c.b16 %v2324, %v2324
        %v2379 = vpack.c.b16 %v2325, %v2325
        %v2380 = vpack.c.b16 %v2326, %v2326
        %v2381 = vpack.c.b16 %v2327, %v2327
        %v2382 = vpack.c.b16 %v2328, %v2328
        %v2383 = vpack.c.b16 %v2329, %v2329
        %v2384 = vpack.c.b16 %v2330, %v2330
        %v2385 = vpack.c.b16 %v2331, %v2331
        %v2386 = vpack.c.b16 %v2332, %v2332
        %v2387 = vpack.c.b16 %v2333, %v2333
        %v2388 = vpack.c.b16 %v2334, %v2334
        %v2389 = vpack.c.b16 %v2335, %v2335
        %v2390 = vpack.c.b16 %v2336, %v2336
        %v2391 = vpack.c.b16 %v2337, %v2337
        %v2392 = vpack.c.b16 %v2338, %v2338
        %v2393 = vpack.c.b16 %v2339, %v2339
        %v2394 = vpack.c.b16 %v2340, %v2340
        %v2395 = vpack.c.b16 %v2341, %v2341
        %v2396 = vpack.c.b16 %v2342, %v2342
        %v2397 = vpack.c.b16 %v2343, %v2343
        %v2398 = vpack.c.b16 %v2344, %v2344
        %v2399 = vpack.c.b16 %v2345, %v2345
        %v2400 = vpack.c.b16 %v2346, %v2346
        %v2401 = vpack.c.b16 %v2347, %v2347
        %v2402 = vpack.c.b16 %v2348, %v2348
        %v2403 = vpack.c.b16 %v2349, %v2349
        %v2404 = vpack.c.b16 %v2350, %v2350
        %v2405 = vpack.c.b16 %v2351, %v2351
        %v2406 = vpack.c.b16 %v2352, %v2352
        %v2407 = vpack.c.b16 %v2353, %v2353
        %v2408 = vpack.c.b16 %v2354, %v2354
        %vm2463 = vcmask 60416
        %2464 = vst.msk [vmem:[#allocation2] sm:$0xf] %vm2463, %v2355
        %2465 = vst.msk [vmem:[#allocation2 + $0x4] sm:$0xf] %vm2463, %v2356
        %vm2466 = vcmask 57344
        %2467 = vst.msk [vmem:[#allocation2 + $0x8] sm:$0x1] %vm2466, %v2357
        %2468 = vst.msk [vmem:[#allocation2 + $0xc] sm:$0xf] %vm2463, %v2358
        %2469 = vst.msk [vmem:[#allocation2 + $0x10] sm:$0xf] %vm2463, %v2359
        %2470 = vst.msk [vmem:[#allocation2 + $0x14] sm:$0x1] %vm2466, %v2360
        %2471 = vst.msk [vmem:[#allocation2 + $0x18] sm:$0xf] %vm2463, %v2361
        %2472 = vst.msk [vmem:[#allocation2 + $0x1c] sm:$0xf] %vm2463, %v2362
        %2473 = vst.msk [vmem:[#allocation2 + $0x20] sm:$0x1] %vm2466, %v2363
        %2474 = vst.msk [vmem:[#allocation2 + $0x24] sm:$0xf] %vm2463, %v2364
        %2475 = vst.msk [vmem:[#allocation2 + $0x28] sm:$0xf] %vm2463, %v2365
        %2476 = vst.msk [vmem:[#allocation2 + $0x2c] sm:$0x1] %vm2466, %v2366
        %2477 = vst.msk [vmem:[#allocation2 + $0x30] sm:$0xf] %vm2463, %v2367
        %2478 = vst.msk [vmem:[#allocation2 + $0x34] sm:$0xf] %vm2463, %v2368
        %2479 = vst.msk [vmem:[#allocation2 + $0x38] sm:$0x1] %vm2466, %v2369
        %2480 = vst.msk [vmem:[#allocation2 + $0x3c] sm:$0xf] %vm2463, %v2370
        %2481 = vst.msk [vmem:[#allocation2 + $0x40] sm:$0xf] %vm2463, %v2371
        %2482 = vst.msk [vmem:[#allocation2 + $0x44] sm:$0x1] %vm2466, %v2372
        %2483 = vst.msk [vmem:[#allocation2 + $0x48] sm:$0xf] %vm2463, %v2373
        %2484 = vst.msk [vmem:[#allocation2 + $0x4c] sm:$0xf] %vm2463, %v2374
        %2485 = vst.msk [vmem:[#allocation2 + $0x50] sm:$0x1] %vm2466, %v2375
        %2486 = vst.msk [vmem:[#allocation2 + $0x54] sm:$0xf] %vm2463, %v2376
        %2487 = vst.msk [vmem:[#allocation2 + $0x58] sm:$0xf] %vm2463, %v2377
        %2488 = vst.msk [vmem:[#allocation2 + $0x5c] sm:$0x1] %vm2466, %v2378
        %2489 = vst.msk [vmem:[#allocation2 + $0x60] sm:$0xf] %vm2463, %v2379
        %2490 = vst.msk [vmem:[#allocation2 + $0x64] sm:$0xf] %vm2463, %v2380
        %2491 = vst.msk [vmem:[#allocation2 + $0x68] sm:$0x1] %vm2466, %v2381
        %2492 = vst.msk [vmem:[#allocation2 + $0x6c] sm:$0xf] %vm2463, %v2382
        %2493 = vst.msk [vmem:[#allocation2 + $0x70] sm:$0xf] %vm2463, %v2383
        %2494 = vst.msk [vmem:[#allocation2 + $0x74] sm:$0x1] %vm2466, %v2384
        %2495 = vst.msk [vmem:[#allocation2 + $0x78] sm:$0xf] %vm2463, %v2385
        %2496 = vst.msk [vmem:[#allocation2 + $0x7c] sm:$0xf] %vm2463, %v2386
        %2497 = vst.msk [vmem:[#allocation2 + $0x80] sm:$0x1] %vm2466, %v2387
        %2498 = vst.msk [vmem:[#allocation2 + $0x84] sm:$0xf] %vm2463, %v2388
        %2499 = vst.msk [vmem:[#allocation2 + $0x88] sm:$0xf] %vm2463, %v2389
        %2500 = vst.msk [vmem:[#allocation2 + $0x8c] sm:$0x1] %vm2466, %v2390
        %2501 = vst.msk [vmem:[#allocation2 + $0x90] sm:$0xf] %vm2463, %v2391
        %2502 = vst.msk [vmem:[#allocation2 + $0x94] sm:$0xf] %vm2463, %v2392
        %2503 = vst.msk [vmem:[#allocation2 + $0x98] sm:$0x1] %vm2466, %v2393
        %2504 = vst.msk [vmem:[#allocation2 + $0x9c] sm:$0xf] %vm2463, %v2394
        %2505 = vst.msk [vmem:[#allocation2 + $0xa0] sm:$0xf] %vm2463, %v2395
        %2506 = vst.msk [vmem:[#allocation2 + $0xa4] sm:$0x1] %vm2466, %v2396
        %2507 = vst.msk [vmem:[#allocation2 + $0xa8] sm:$0xf] %vm2463, %v2397
        %2508 = vst.msk [vmem:[#allocation2 + $0xac] sm:$0xf] %vm2463, %v2398
        %2509 = vst.msk [vmem:[#allocation2 + $0xb0] sm:$0x1] %vm2466, %v2399
        %2510 = vst.msk [vmem:[#allocation2 + $0xb4] sm:$0xf] %vm2463, %v2400
        %2511 = vst.msk [vmem:[#allocation2 + $0xb8] sm:$0xf] %vm2463, %v2401
        %2512 = vst.msk [vmem:[#allocation2 + $0xbc] sm:$0x1] %vm2466, %v2402
        %2513 = vst.msk [vmem:[#allocation2 + $0xc0] sm:$0xf] %vm2463, %v2403
        %2514 = vst.msk [vmem:[#allocation2 + $0xc4] sm:$0xf] %vm2463, %v2404
        %2515 = vst.msk [vmem:[#allocation2 + $0xc8] sm:$0x1] %vm2466, %v2405
        %2516 = vst.msk [vmem:[#allocation2 + $0xcc] sm:$0xf] %vm2463, %v2406
        %2517 = vst.msk [vmem:[#allocation2 + $0xd0] sm:$0xf] %vm2463, %v2407
        %2518 = vst.msk [vmem:[#allocation2 + $0xd4] sm:$0x1] %vm2466, %v2408
        %vm2519 = vcmask 57344
        %vm2520 = vsmask.f32 256
        %vm2521 = vmand %vm2519, %vm2520
        %v2522 = vld [vmem:[#allocation2] sm:$0x1]
        %v2523 = vsel %vm2521, 0, %v2522
        %2524 = vst [vmem:[#allocation2] sm:$0x1] %v2523
        %v2525 = vld [vmem:[#allocation2 + $0xc] sm:$0x1]
        %v2526 = vsel %vm2521, 0, %v2525
        %2527 = vst [vmem:[#allocation2 + $0xc] sm:$0x1] %v2526
        %v2528 = vld [vmem:[#allocation2 + $0x18] sm:$0x1]
        %v2529 = vsel %vm2521, 0, %v2528
        %2530 = vst [vmem:[#allocation2 + $0x18] sm:$0x1] %v2529
        %v2531 = vld [vmem:[#allocation2 + $0x24] sm:$0x1]
        %v2532 = vsel %vm2521, 0, %v2531
        %2533 = vst [vmem:[#allocation2 + $0x24] sm:$0x1] %v2532
        %v2534 = vld [vmem:[#allocation2 + $0x30] sm:$0x1]
        %v2535 = vsel %vm2521, 0, %v2534
        %2536 = vst [vmem:[#allocation2 + $0x30] sm:$0x1] %v2535
        %v2537 = vld [vmem:[#allocation2 + $0x3c] sm:$0x1]
        %v2538 = vsel %vm2521, 0, %v2537
        %2539 = vst [vmem:[#allocation2 + $0x3c] sm:$0x1] %v2538
        %v2540 = vld [vmem:[#allocation2 + $0x48] sm:$0x1]
        %v2541 = vsel %vm2521, 0, %v2540
        %2542 = vst [vmem:[#allocation2 + $0x48] sm:$0x1] %v2541
        %v2543 = vld [vmem:[#allocation2 + $0x54] sm:$0x1]
        %v2544 = vsel %vm2521, 0, %v2543
        %2545 = vst [vmem:[#allocation2 + $0x54] sm:$0x1] %v2544
        %v2546 = vld [vmem:[#allocation2 + $0x60] sm:$0x1]
        %v2547 = vsel %vm2521, 0, %v2546
        %2548 = vst [vmem:[#allocation2 + $0x60] sm:$0x1] %v2547
        %v2549 = vld [vmem:[#allocation2 + $0x6c] sm:$0x1]
        %v2550 = vsel %vm2521, 0, %v2549
        %2551 = vst [vmem:[#allocation2 + $0x6c] sm:$0x1] %v2550
        %v2552 = vld [vmem:[#allocation2 + $0x78] sm:$0x1]
        %v2553 = vsel %vm2521, 0, %v2552
        %2554 = vst [vmem:[#allocation2 + $0x78] sm:$0x1] %v2553
        %v2555 = vld [vmem:[#allocation2 + $0x84] sm:$0x1]
        %v2556 = vsel %vm2521, 0, %v2555
        %2557 = vst [vmem:[#allocation2 + $0x84] sm:$0x1] %v2556
        %v2558 = vld [vmem:[#allocation2 + $0x90] sm:$0x1]
        %v2559 = vsel %vm2521, 0, %v2558
        %2560 = vst [vmem:[#allocation2 + $0x90] sm:$0x1] %v2559
        %v2561 = vld [vmem:[#allocation2 + $0x9c] sm:$0x1]
        %v2562 = vsel %vm2521, 0, %v2561
        %2563 = vst [vmem:[#allocation2 + $0x9c] sm:$0x1] %v2562
        %v2564 = vld [vmem:[#allocation2 + $0xa8] sm:$0x1]
        %v2565 = vsel %vm2521, 0, %v2564
        %2566 = vst [vmem:[#allocation2 + $0xa8] sm:$0x1] %v2565
        %v2567 = vld [vmem:[#allocation2 + $0xb4] sm:$0x1]
        %v2568 = vsel %vm2521, 0, %v2567
        %2569 = vst [vmem:[#allocation2 + $0xb4] sm:$0x1] %v2568
        %v2570 = vld [vmem:[#allocation2 + $0xc0] sm:$0x1]
        %v2571 = vsel %vm2521, 0, %v2570
        %2572 = vst [vmem:[#allocation2 + $0xc0] sm:$0x1] %v2571
        %v2573 = vld [vmem:[#allocation2 + $0xcc] sm:$0x1]
        %v2574 = vsel %vm2521, 0, %v2573
        %2575 = vst [vmem:[#allocation2 + $0xcc] sm:$0x1] %v2574
        %vm2576 = vsmask.f32 7938
        %vm2577 = vmand %vm2519, %vm2576
        %v2578 = vld [vmem:[#allocation2 + $0x8] sm:$0x1]
        %v2579 = vsel %vm2577, 0, %v2578
        %2580 = vst [vmem:[#allocation2 + $0x8] sm:$0x1] %v2579
        %v2581 = vld [vmem:[#allocation2 + $0x14] sm:$0x1]
        %v2582 = vsel %vm2577, 0, %v2581
        %2583 = vst [vmem:[#allocation2 + $0x14] sm:$0x1] %v2582
        %v2584 = vld [vmem:[#allocation2 + $0x20] sm:$0x1]
        %v2585 = vsel %vm2577, 0, %v2584
        %2586 = vst [vmem:[#allocation2 + $0x20] sm:$0x1] %v2585
        %v2587 = vld [vmem:[#allocation2 + $0x2c] sm:$0x1]
        %v2588 = vsel %vm2577, 0, %v2587
        %2589 = vst [vmem:[#allocation2 + $0x2c] sm:$0x1] %v2588
        %v2590 = vld [vmem:[#allocation2 + $0x38] sm:$0x1]
        %v2591 = vsel %vm2577, 0, %v2590
        %2592 = vst [vmem:[#allocation2 + $0x38] sm:$0x1] %v2591
        %v2593 = vld [vmem:[#allocation2 + $0x44] sm:$0x1]
        %v2594 = vsel %vm2577, 0, %v2593
        %2595 = vst [vmem:[#allocation2 + $0x44] sm:$0x1] %v2594
        %v2596 = vld [vmem:[#allocation2 + $0x50] sm:$0x1]
        %v2597 = vsel %vm2577, 0, %v2596
        %2598 = vst [vmem:[#allocation2 + $0x50] sm:$0x1] %v2597
        %v2599 = vld [vmem:[#allocation2 + $0x5c] sm:$0x1]
        %v2600 = vsel %vm2577, 0, %v2599
        %2601 = vst [vmem:[#allocation2 + $0x5c] sm:$0x1] %v2600
        %v2602 = vld [vmem:[#allocation2 + $0x68] sm:$0x1]
        %v2603 = vsel %vm2577, 0, %v2602
        %2604 = vst [vmem:[#allocation2 + $0x68] sm:$0x1] %v2603
        %v2605 = vld [vmem:[#allocation2 + $0x74] sm:$0x1]
        %v2606 = vsel %vm2577, 0, %v2605
        %2607 = vst [vmem:[#allocation2 + $0x74] sm:$0x1] %v2606
        %v2608 = vld [vmem:[#allocation2 + $0x80] sm:$0x1]
        %v2609 = vsel %vm2577, 0, %v2608
        %2610 = vst [vmem:[#allocation2 + $0x80] sm:$0x1] %v2609
        %v2611 = vld [vmem:[#allocation2 + $0x8c] sm:$0x1]
        %v2612 = vsel %vm2577, 0, %v2611
        %2613 = vst [vmem:[#allocation2 + $0x8c] sm:$0x1] %v2612
        %v2614 = vld [vmem:[#allocation2 + $0x98] sm:$0x1]
        %v2615 = vsel %vm2577, 0, %v2614
        %2616 = vst [vmem:[#allocation2 + $0x98] sm:$0x1] %v2615
        %v2617 = vld [vmem:[#allocation2 + $0xa4] sm:$0x1]
        %v2618 = vsel %vm2577, 0, %v2617
        %2619 = vst [vmem:[#allocation2 + $0xa4] sm:$0x1] %v2618
        %v2620 = vld [vmem:[#allocation2 + $0xb0] sm:$0x1]
        %v2621 = vsel %vm2577, 0, %v2620
        %2622 = vst [vmem:[#allocation2 + $0xb0] sm:$0x1] %v2621
        %v2623 = vld [vmem:[#allocation2 + $0xbc] sm:$0x1]
        %v2624 = vsel %vm2577, 0, %v2623
        %2625 = vst [vmem:[#allocation2 + $0xbc] sm:$0x1] %v2624
        %v2626 = vld [vmem:[#allocation2 + $0xc8] sm:$0x1]
        %v2627 = vsel %vm2577, 0, %v2626
        %2628 = vst [vmem:[#allocation2 + $0xc8] sm:$0x1] %v2627
        %v2629 = vld [vmem:[#allocation2 + $0xd4] sm:$0x1]
        %v2630 = vsel %vm2577, 0, %v2629
        %2631 = vst [vmem:[#allocation2 + $0xd4] sm:$0x1] %v2630
        %p2632 = scmp.eq.s32.totalorder %s24, 0
        // Predicated region
        $region41: #{tpu_custom_call.1} parent=39 // pred_check
          %p2633 = pneg %p2632
        $region42: #{tpu_custom_call.1} parent=39 // pred_check_branch
          %2635 = sbr.rel (%p2633) target = $region44
        $region43: #{tpu_custom_call.1} parent=39 // pred_region
          %2636 = vst.msk [vmem:[#allocation2] sm:$0xf] %vm2463, 0
          %2637 = vst.msk [vmem:[#allocation2 + $0x4] sm:$0xf] %vm2463, 0
          %2638 = vst.msk [vmem:[#allocation2 + $0x8] sm:$0x1] %vm2466, 0
          %s2639 = scalar_lea.vmem [#allocation2], 204
          %2640 = vst.msk [vmem:[%s2639] sm:$0xf] %vm2463, 0
          %2641 = vst.msk [vmem:[%s2639 + $0x4] sm:$0xf] %vm2463, 0
          %2642 = vst.msk [vmem:[%s2639 + $0x8] sm:$0x1] %vm2466, 0
        $region44: #{tpu_custom_call.1} parent=39 // pred_fallthru
          _
        %v2643 = vld [vmem:[#allocation2] sm:$0xf]
        %v2644 = vld [vmem:[#allocation2 + $0x4] sm:$0xf]
        %v2645 = vld [vmem:[#allocation2 + $0xc] sm:$0xf]
        %v2646 = vld [vmem:[#allocation2 + $0x10] sm:$0xf]
        %v2647 = vld [vmem:[#allocation2 + $0x18] sm:$0xf]
        %v2648 = vld [vmem:[#allocation2 + $0x1c] sm:$0xf]
        %v2649 = vld [vmem:[#allocation2 + $0x24] sm:$0xf]
        %v2650 = vld [vmem:[#allocation2 + $0x28] sm:$0xf]
        %v2651 = vld [vmem:[#allocation2 + $0x30] sm:$0xf]
        %v2652 = vld [vmem:[#allocation2 + $0x34] sm:$0xf]
        %v2653 = vld [vmem:[#allocation2 + $0x3c] sm:$0xf]
        %v2654 = vld [vmem:[#allocation2 + $0x40] sm:$0xf]
        %v2655 = vld [vmem:[#allocation2 + $0x48] sm:$0xf]
        %v2656 = vld [vmem:[#allocation2 + $0x4c] sm:$0xf]
        %v2657 = vld [vmem:[#allocation2 + $0x54] sm:$0xf]
        %v2658 = vld [vmem:[#allocation2 + $0x58] sm:$0xf]
        %v2659 = vld [vmem:[#allocation2 + $0x60] sm:$0xf]
        %v2660 = vld [vmem:[#allocation2 + $0x64] sm:$0xf]
        %v2661 = vld [vmem:[#allocation2 + $0x6c] sm:$0xf]
        %v2662 = vld [vmem:[#allocation2 + $0x70] sm:$0xf]
        %v2663 = vld [vmem:[#allocation2 + $0x78] sm:$0xf]
        %v2664 = vld [vmem:[#allocation2 + $0x7c] sm:$0xf]
        %v2665 = vld [vmem:[#allocation2 + $0x84] sm:$0xf]
        %v2666 = vld [vmem:[#allocation2 + $0x88] sm:$0xf]
        %v2667 = vld [vmem:[#allocation2 + $0x90] sm:$0xf]
        %v2668 = vld [vmem:[#allocation2 + $0x94] sm:$0xf]
        %v2669 = vld [vmem:[#allocation2 + $0x9c] sm:$0xf]
        %v2670 = vld [vmem:[#allocation2 + $0xa0] sm:$0xf]
        %v2671 = vld [vmem:[#allocation2 + $0xa8] sm:$0xf]
        %v2672 = vld [vmem:[#allocation2 + $0xac] sm:$0xf]
        %v2673 = vld [vmem:[#allocation2 + $0xb4] sm:$0xf]
        %v2674 = vld [vmem:[#allocation2 + $0xb8] sm:$0xf]
        %v2707 = vunpack.c.l.b16 %v2643
        %v2708 = vunpack.c.l.b16 %v2644
        %v2709 = vunpack.c.l.b16 %v2645
        %v2710 = vunpack.c.l.b16 %v2646
        %v2711 = vunpack.c.l.b16 %v2647
        %v2712 = vunpack.c.l.b16 %v2648
        %v2713 = vunpack.c.l.b16 %v2649
        %v2714 = vunpack.c.l.b16 %v2650
        %v2715 = vunpack.c.l.b16 %v2651
        %v2716 = vunpack.c.l.b16 %v2652
        %v2717 = vunpack.c.l.b16 %v2653
        %v2718 = vunpack.c.l.b16 %v2654
        %v2719 = vunpack.c.l.b16 %v2655
        %v2720 = vunpack.c.l.b16 %v2656
        %v2721 = vunpack.c.l.b16 %v2657
        %v2722 = vunpack.c.l.b16 %v2658
        %v2723 = vunpack.c.l.b16 %v2659
        %v2724 = vunpack.c.l.b16 %v2660
        %v2725 = vunpack.c.l.b16 %v2661
        %v2726 = vunpack.c.l.b16 %v2662
        %v2727 = vunpack.c.l.b16 %v2663
        %v2728 = vunpack.c.l.b16 %v2664
        %v2729 = vunpack.c.l.b16 %v2665
        %v2730 = vunpack.c.l.b16 %v2666
        %v2731 = vunpack.c.l.b16 %v2667
        %v2732 = vunpack.c.l.b16 %v2668
        %v2733 = vunpack.c.l.b16 %v2669
        %v2734 = vunpack.c.l.b16 %v2670
        %v2735 = vunpack.c.l.b16 %v2671
        %v2736 = vunpack.c.l.b16 %v2672
        %v2737 = vunpack.c.l.b16 %v2673
        %v2738 = vunpack.c.l.b16 %v2674
        %v2739 = vpack.c.b16 %v2708, %v2707
        %v2740 = vpack.c.b16 %v2710, %v2709
        %v2741 = vpack.c.b16 %v2712, %v2711
        %v2742 = vpack.c.b16 %v2714, %v2713
        %v2743 = vpack.c.b16 %v2716, %v2715
        %v2744 = vpack.c.b16 %v2718, %v2717
        %v2745 = vpack.c.b16 %v2720, %v2719
        %v2746 = vpack.c.b16 %v2722, %v2721
        %v2747 = vpack.c.b16 %v2724, %v2723
        %v2748 = vpack.c.b16 %v2726, %v2725
        %v2749 = vpack.c.b16 %v2728, %v2727
        %v2750 = vpack.c.b16 %v2730, %v2729
        %v2751 = vpack.c.b16 %v2732, %v2731
        %v2752 = vpack.c.b16 %v2734, %v2733
        %v2753 = vpack.c.b16 %v2736, %v2735
        %v2754 = vpack.c.b16 %v2738, %v2737
        %vm2771 = vcmask 64512
        %2772 = vst.msk [vmem:[#allocation3] sm:$0xff] %vm2771, %v2739
        %2773 = vst.msk [vmem:[#allocation3 + $0x8] sm:$0xff] %vm2771, %v2740
        %2774 = vst.msk [vmem:[#allocation3 + $0x10] sm:$0xff] %vm2771, %v2741
        %2775 = vst.msk [vmem:[#allocation3 + $0x18] sm:$0xff] %vm2771, %v2742
        %2776 = vst.msk [vmem:[#allocation3 + $0x20] sm:$0xff] %vm2771, %v2743
        %2777 = vst.msk [vmem:[#allocation3 + $0x28] sm:$0xff] %vm2771, %v2744
        %2778 = vst.msk [vmem:[#allocation3 + $0x30] sm:$0xff] %vm2771, %v2745
        %2779 = vst.msk [vmem:[#allocation3 + $0x38] sm:$0xff] %vm2771, %v2746
        %2780 = vst.msk [vmem:[#allocation3 + $0x40] sm:$0xff] %vm2771, %v2747
        %2781 = vst.msk [vmem:[#allocation3 + $0x48] sm:$0xff] %vm2771, %v2748
        %2782 = vst.msk [vmem:[#allocation3 + $0x50] sm:$0xff] %vm2771, %v2749
        %2783 = vst.msk [vmem:[#allocation3 + $0x58] sm:$0xff] %vm2771, %v2750
        %2784 = vst.msk [vmem:[#allocation3 + $0x60] sm:$0xff] %vm2771, %v2751
        %2785 = vst.msk [vmem:[#allocation3 + $0x68] sm:$0xff] %vm2771, %v2752
        %2786 = vst.msk [vmem:[#allocation3 + $0x70] sm:$0xff] %vm2771, %v2753
        %2787 = vst.msk [vmem:[#allocation3 + $0x78] sm:$0xff] %vm2771, %v2754
        %v2788 = vld [vmem:[#allocation2] sm:$0xf]
        %v2789 = vld [vmem:[#allocation2 + $0x4] sm:$0xf]
        %v2790 = vld [vmem:[#allocation2 + $0x8] sm:$0x1]
        %v2791 = vld [vmem:[#allocation2 + $0xc] sm:$0xf]
        %v2792 = vld [vmem:[#allocation2 + $0x10] sm:$0xf]
        %v2793 = vld [vmem:[#allocation2 + $0x14] sm:$0x1]
        %v2794 = vld [vmem:[#allocation2 + $0x18] sm:$0xf]
        %v2795 = vld [vmem:[#allocation2 + $0x1c] sm:$0xf]
        %v2796 = vld [vmem:[#allocation2 + $0x20] sm:$0x1]
        %v2797 = vld [vmem:[#allocation2 + $0x24] sm:$0xf]
        %v2798 = vld [vmem:[#allocation2 + $0x28] sm:$0xf]
        %v2799 = vld [vmem:[#allocation2 + $0x2c] sm:$0x1]
        %v2800 = vld [vmem:[#allocation2 + $0x30] sm:$0xf]
        %v2801 = vld [vmem:[#allocation2 + $0x34] sm:$0xf]
        %v2802 = vld [vmem:[#allocation2 + $0x38] sm:$0x1]
        %v2803 = vld [vmem:[#allocation2 + $0x3c] sm:$0xf]
        %v2804 = vld [vmem:[#allocation2 + $0x40] sm:$0xf]
        %v2805 = vld [vmem:[#allocation2 + $0x44] sm:$0x1]
        %v2806 = vld [vmem:[#allocation2 + $0x48] sm:$0xf]
        %v2807 = vld [vmem:[#allocation2 + $0x4c] sm:$0xf]
        %v2808 = vld [vmem:[#allocation2 + $0x50] sm:$0x1]
        %v2809 = vld [vmem:[#allocation2 + $0x54] sm:$0xf]
        %v2810 = vld [vmem:[#allocation2 + $0x58] sm:$0xf]
        %v2811 = vld [vmem:[#allocation2 + $0x5c] sm:$0x1]
        %v2812 = vld [vmem:[#allocation2 + $0x60] sm:$0xf]
        %v2813 = vld [vmem:[#allocation2 + $0x64] sm:$0xf]
        %v2814 = vld [vmem:[#allocation2 + $0x68] sm:$0x1]
        %v2815 = vld [vmem:[#allocation2 + $0x6c] sm:$0xf]
        %v2816 = vld [vmem:[#allocation2 + $0x70] sm:$0xf]
        %v2817 = vld [vmem:[#allocation2 + $0x74] sm:$0x1]
        %v2818 = vld [vmem:[#allocation2 + $0x78] sm:$0xf]
        %v2819 = vld [vmem:[#allocation2 + $0x7c] sm:$0xf]
        %v2820 = vld [vmem:[#allocation2 + $0x80] sm:$0x1]
        %v2821 = vld [vmem:[#allocation2 + $0x84] sm:$0xf]
        %v2822 = vld [vmem:[#allocation2 + $0x88] sm:$0xf]
        %v2823 = vld [vmem:[#allocation2 + $0x8c] sm:$0x1]
        %v2824 = vld [vmem:[#allocation2 + $0x90] sm:$0xf]
        %v2825 = vld [vmem:[#allocation2 + $0x94] sm:$0xf]
        %v2826 = vld [vmem:[#allocation2 + $0x98] sm:$0x1]
        %v2827 = vld [vmem:[#allocation2 + $0x9c] sm:$0xf]
        %v2828 = vld [vmem:[#allocation2 + $0xa0] sm:$0xf]
        %v2829 = vld [vmem:[#allocation2 + $0xa4] sm:$0x1]
        %v2830 = vld [vmem:[#allocation2 + $0xa8] sm:$0xf]
        %v2831 = vld [vmem:[#allocation2 + $0xac] sm:$0xf]
        %v2832 = vld [vmem:[#allocation2 + $0xb0] sm:$0x1]
        %v2833 = vld [vmem:[#allocation2 + $0xb4] sm:$0xf]
        %v2834 = vld [vmem:[#allocation2 + $0xb8] sm:$0xf]
        %v2835 = vld [vmem:[#allocation2 + $0xbc] sm:$0x1]
        %v2884 = vunpack.c.l.b16 %v2788
        %v2885 = vunpack.c.l.b16 %v2789
        %v2886 = vunpack.c.l.b16 %v2790
        %v2887 = vunpack.c.l.b16 %v2791
        %v2888 = vunpack.c.l.b16 %v2792
        %v2889 = vunpack.c.l.b16 %v2793
        %v2890 = vunpack.c.l.b16 %v2794
        %v2891 = vunpack.c.l.b16 %v2795
        %v2892 = vunpack.c.l.b16 %v2796
        %v2893 = vunpack.c.l.b16 %v2797
        %v2894 = vunpack.c.l.b16 %v2798
        %v2895 = vunpack.c.l.b16 %v2799
        %v2896 = vunpack.c.l.b16 %v2800
        %v2897 = vunpack.c.l.b16 %v2801
        %v2898 = vunpack.c.l.b16 %v2802
        %v2899 = vunpack.c.l.b16 %v2803
        %v2900 = vunpack.c.l.b16 %v2804
        %v2901 = vunpack.c.l.b16 %v2805
        %v2902 = vunpack.c.l.b16 %v2806
        %v2903 = vunpack.c.l.b16 %v2807
        %v2904 = vunpack.c.l.b16 %v2808
        %v2905 = vunpack.c.l.b16 %v2809
        %v2906 = vunpack.c.l.b16 %v2810
        %v2907 = vunpack.c.l.b16 %v2811
        %v2908 = vunpack.c.l.b16 %v2812
        %v2909 = vunpack.c.l.b16 %v2813
        %v2910 = vunpack.c.l.b16 %v2814
        %v2911 = vunpack.c.l.b16 %v2815
        %v2912 = vunpack.c.l.b16 %v2816
        %v2913 = vunpack.c.l.b16 %v2817
        %v2914 = vunpack.c.l.b16 %v2818
        %v2915 = vunpack.c.l.b16 %v2819
        %v2916 = vunpack.c.l.b16 %v2820
        %v2917 = vunpack.c.l.b16 %v2821
        %v2918 = vunpack.c.l.b16 %v2822
        %v2919 = vunpack.c.l.b16 %v2823
        %v2920 = vunpack.c.l.b16 %v2824
        %v2921 = vunpack.c.l.b16 %v2825
        %v2922 = vunpack.c.l.b16 %v2826
        %v2923 = vunpack.c.l.b16 %v2827
        %v2924 = vunpack.c.l.b16 %v2828
        %v2925 = vunpack.c.l.b16 %v2829
        %v2926 = vunpack.c.l.b16 %v2830
        %v2927 = vunpack.c.l.b16 %v2831
        %v2928 = vunpack.c.l.b16 %v2832
        %v2929 = vunpack.c.l.b16 %v2833
        %v2930 = vunpack.c.l.b16 %v2834
        %v2931 = vunpack.c.l.b16 %v2835
        %v2932 = vpack.c.b16 %v2885, %v2884
        %v2933 = vpack.c.b16 %v2886, %v2886
        %v2934 = vpack.c.b16 %v2888, %v2887
        %v2935 = vpack.c.b16 %v2889, %v2889
        %v2936 = vpack.c.b16 %v2891, %v2890
        %v2937 = vpack.c.b16 %v2892, %v2892
        %v2938 = vpack.c.b16 %v2894, %v2893
        %v2939 = vpack.c.b16 %v2895, %v2895
        %v2940 = vpack.c.b16 %v2897, %v2896
        %v2941 = vpack.c.b16 %v2898, %v2898
        %v2942 = vpack.c.b16 %v2900, %v2899
        %v2943 = vpack.c.b16 %v2901, %v2901
        %v2944 = vpack.c.b16 %v2903, %v2902
        %v2945 = vpack.c.b16 %v2904, %v2904
        %v2946 = vpack.c.b16 %v2906, %v2905
        %v2947 = vpack.c.b16 %v2907, %v2907
        %v2948 = vpack.c.b16 %v2909, %v2908
        %v2949 = vpack.c.b16 %v2910, %v2910
        %v2950 = vpack.c.b16 %v2912, %v2911
        %v2951 = vpack.c.b16 %v2913, %v2913
        %v2952 = vpack.c.b16 %v2915, %v2914
        %v2953 = vpack.c.b16 %v2916, %v2916
        %v2954 = vpack.c.b16 %v2918, %v2917
        %v2955 = vpack.c.b16 %v2919, %v2919
        %v2956 = vpack.c.b16 %v2921, %v2920
        %v2957 = vpack.c.b16 %v2922, %v2922
        %v2958 = vpack.c.b16 %v2924, %v2923
        %v2959 = vpack.c.b16 %v2925, %v2925
        %v2960 = vpack.c.b16 %v2927, %v2926
        %v2961 = vpack.c.b16 %v2928, %v2928
        %v2962 = vpack.c.b16 %v2930, %v2929
        %v2963 = vpack.c.b16 %v2931, %v2931
        %vm2964 = vsmask.f32 7424
        %v2966 = vshrl.u32 %v2932, 16
        %v2968 = vshll.u32 %v2932, 16
        %v2970 = vrot.slane %v2968, 1
        %v2971 = vor.u32 %v2966, %v2970
        %v2973 = vshll.u32 %v2933, 16
        %v2975 = vrot.slane %v2973, 1
        %v2976 = vsel %vm2964, %v2971, %v2975
        %v2978 = vshrl.u32 %v2934, 16
        %v2980 = vshll.u32 %v2934, 16
        %v2982 = vrot.slane %v2980, 1
        %v2983 = vor.u32 %v2978, %v2982
        %v2985 = vshll.u32 %v2935, 16
        %v2987 = vrot.slane %v2985, 1
        %v2988 = vsel %vm2964, %v2983, %v2987
        %v2990 = vshrl.u32 %v2936, 16
        %v2992 = vshll.u32 %v2936, 16
        %v2994 = vrot.slane %v2992, 1
        %v2995 = vor.u32 %v2990, %v2994
        %v2997 = vshll.u32 %v2937, 16
        %v2999 = vrot.slane %v2997, 1
        %v3000 = vsel %vm2964, %v2995, %v2999
        %v3002 = vshrl.u32 %v2938, 16
        %v3004 = vshll.u32 %v2938, 16
        %v3006 = vrot.slane %v3004, 1
        %v3007 = vor.u32 %v3002, %v3006
        %v3009 = vshll.u32 %v2939, 16
        %v3011 = vrot.slane %v3009, 1
        %v3012 = vsel %vm2964, %v3007, %v3011
        %v3014 = vshrl.u32 %v2940, 16
        %v3016 = vshll.u32 %v2940, 16
        %v3018 = vrot.slane %v3016, 1
        %v3019 = vor.u32 %v3014, %v3018
        %v3021 = vshll.u32 %v2941, 16
        %v3023 = vrot.slane %v3021, 1
        %v3024 = vsel %vm2964, %v3019, %v3023
        %v3026 = vshrl.u32 %v2942, 16
        %v3028 = vshll.u32 %v2942, 16
        %v3030 = vrot.slane %v3028, 1
        %v3031 = vor.u32 %v3026, %v3030
        %v3033 = vshll.u32 %v2943, 16
        %v3035 = vrot.slane %v3033, 1
        %v3036 = vsel %vm2964, %v3031, %v3035
        %v3038 = vshrl.u32 %v2944, 16
        %v3040 = vshll.u32 %v2944, 16
        %v3042 = vrot.slane %v3040, 1
        %v3043 = vor.u32 %v3038, %v3042
        %v3045 = vshll.u32 %v2945, 16
        %v3047 = vrot.slane %v3045, 1
        %v3048 = vsel %vm2964, %v3043, %v3047
        %v3050 = vshrl.u32 %v2946, 16
        %v3052 = vshll.u32 %v2946, 16
        %v3054 = vrot.slane %v3052, 1
        %v3055 = vor.u32 %v3050, %v3054
        %v3057 = vshll.u32 %v2947, 16
        %v3059 = vrot.slane %v3057, 1
        %v3060 = vsel %vm2964, %v3055, %v3059
        %v3062 = vshrl.u32 %v2948, 16
        %v3064 = vshll.u32 %v2948, 16
        %v3066 = vrot.slane %v3064, 1
        %v3067 = vor.u32 %v3062, %v3066
        %v3069 = vshll.u32 %v2949, 16
        %v3071 = vrot.slane %v3069, 1
        %v3072 = vsel %vm2964, %v3067, %v3071
        %v3074 = vshrl.u32 %v2950, 16
        %v3076 = vshll.u32 %v2950, 16
        %v3078 = vrot.slane %v3076, 1
        %v3079 = vor.u32 %v3074, %v3078
        %v3081 = vshll.u32 %v2951, 16
        %v3083 = vrot.slane %v3081, 1
        %v3084 = vsel %vm2964, %v3079, %v3083
        %v3086 = vshrl.u32 %v2952, 16
        %v3088 = vshll.u32 %v2952, 16
        %v3090 = vrot.slane %v3088, 1
        %v3091 = vor.u32 %v3086, %v3090
        %v3093 = vshll.u32 %v2953, 16
        %v3095 = vrot.slane %v3093, 1
        %v3096 = vsel %vm2964, %v3091, %v3095
        %v3098 = vshrl.u32 %v2954, 16
        %v3100 = vshll.u32 %v2954, 16
        %v3102 = vrot.slane %v3100, 1
        %v3103 = vor.u32 %v3098, %v3102
        %v3105 = vshll.u32 %v2955, 16
        %v3107 = vrot.slane %v3105, 1
        %v3108 = vsel %vm2964, %v3103, %v3107
        %v3110 = vshrl.u32 %v2956, 16
        %v3112 = vshll.u32 %v2956, 16
        %v3114 = vrot.slane %v3112, 1
        %v3115 = vor.u32 %v3110, %v3114
        %v3117 = vshll.u32 %v2957, 16
        %v3119 = vrot.slane %v3117, 1
        %v3120 = vsel %vm2964, %v3115, %v3119
        %v3122 = vshrl.u32 %v2958, 16
        %v3124 = vshll.u32 %v2958, 16
        %v3126 = vrot.slane %v3124, 1
        %v3127 = vor.u32 %v3122, %v3126
        %v3129 = vshll.u32 %v2959, 16
        %v3131 = vrot.slane %v3129, 1
        %v3132 = vsel %vm2964, %v3127, %v3131
        %v3134 = vshrl.u32 %v2960, 16
        %v3136 = vshll.u32 %v2960, 16
        %v3138 = vrot.slane %v3136, 1
        %v3139 = vor.u32 %v3134, %v3138
        %v3141 = vshll.u32 %v2961, 16
        %v3143 = vrot.slane %v3141, 1
        %v3144 = vsel %vm2964, %v3139, %v3143
        %v3146 = vshrl.u32 %v2962, 16
        %v3148 = vshll.u32 %v2962, 16
        %v3150 = vrot.slane %v3148, 1
        %v3151 = vor.u32 %v3146, %v3150
        %v3153 = vshll.u32 %v2963, 16
        %v3155 = vrot.slane %v3153, 1
        %v3156 = vsel %vm2964, %v3151, %v3155
        %3157 = vrot.lane.b32.xlu0 %v2976, 8
        %v3158 = vpop.permute.xlu0 %3157
        %3159 = vrot.lane.b32.xlu0 %v2988, 8
        %v3160 = vpop.permute.xlu0 %3159
        %3161 = vrot.lane.b32.xlu0 %v3000, 8
        %v3162 = vpop.permute.xlu0 %3161
        %3163 = vrot.lane.b32.xlu0 %v3012, 8
        %v3164 = vpop.permute.xlu0 %3163
        %3165 = vrot.lane.b32.xlu0 %v3024, 8
        %v3166 = vpop.permute.xlu0 %3165
        %3167 = vrot.lane.b32.xlu0 %v3036, 8
        %v3168 = vpop.permute.xlu0 %3167
        %3169 = vrot.lane.b32.xlu0 %v3048, 8
        %v3170 = vpop.permute.xlu0 %3169
        %3171 = vrot.lane.b32.xlu0 %v3060, 8
        %v3172 = vpop.permute.xlu0 %3171
        %3173 = vrot.lane.b32.xlu0 %v3072, 8
        %v3174 = vpop.permute.xlu0 %3173
        %3175 = vrot.lane.b32.xlu0 %v3084, 8
        %v3176 = vpop.permute.xlu0 %3175
        %3177 = vrot.lane.b32.xlu0 %v3096, 8
        %v3178 = vpop.permute.xlu0 %3177
        %3179 = vrot.lane.b32.xlu0 %v3108, 8
        %v3180 = vpop.permute.xlu0 %3179
        %3181 = vrot.lane.b32.xlu0 %v3120, 8
        %v3182 = vpop.permute.xlu0 %3181
        %3183 = vrot.lane.b32.xlu0 %v3132, 8
        %v3184 = vpop.permute.xlu0 %3183
        %3185 = vrot.lane.b32.xlu0 %v3144, 8
        %v3186 = vpop.permute.xlu0 %3185
        %3187 = vrot.lane.b32.xlu0 %v3156, 8
        %v3188 = vpop.permute.xlu0 %3187
        %vm3205 = vcmask 130112
        %3206 = vst.msk [vmem:[#allocation3] sm:$0xff] %vm3205, %v3158
        %3207 = vst.msk [vmem:[#allocation3 + $0x8] sm:$0xff] %vm3205, %v3160
        %3208 = vst.msk [vmem:[#allocation3 + $0x10] sm:$0xff] %vm3205, %v3162
        %3209 = vst.msk [vmem:[#allocation3 + $0x18] sm:$0xff] %vm3205, %v3164
        %3210 = vst.msk [vmem:[#allocation3 + $0x20] sm:$0xff] %vm3205, %v3166
        %3211 = vst.msk [vmem:[#allocation3 + $0x28] sm:$0xff] %vm3205, %v3168
        %3212 = vst.msk [vmem:[#allocation3 + $0x30] sm:$0xff] %vm3205, %v3170
        %3213 = vst.msk [vmem:[#allocation3 + $0x38] sm:$0xff] %vm3205, %v3172
        %3214 = vst.msk [vmem:[#allocation3 + $0x40] sm:$0xff] %vm3205, %v3174
        %3215 = vst.msk [vmem:[#allocation3 + $0x48] sm:$0xff] %vm3205, %v3176
        %3216 = vst.msk [vmem:[#allocation3 + $0x50] sm:$0xff] %vm3205, %v3178
        %3217 = vst.msk [vmem:[#allocation3 + $0x58] sm:$0xff] %vm3205, %v3180
        %3218 = vst.msk [vmem:[#allocation3 + $0x60] sm:$0xff] %vm3205, %v3182
        %3219 = vst.msk [vmem:[#allocation3 + $0x68] sm:$0xff] %vm3205, %v3184
        %3220 = vst.msk [vmem:[#allocation3 + $0x70] sm:$0xff] %vm3205, %v3186
        %3221 = vst.msk [vmem:[#allocation3 + $0x78] sm:$0xff] %vm3205, %v3188
        %v3222 = vld [vmem:[#allocation2] sm:$0xe]
        %v3223 = vld [vmem:[#allocation2 + $0x4] sm:$0xf]
        %v3224 = vld [vmem:[#allocation2 + $0x8] sm:$0x1]
        %v3225 = vld [vmem:[#allocation2 + $0xc] sm:$0xe]
        %v3226 = vld [vmem:[#allocation2 + $0x10] sm:$0xf]
        %v3227 = vld [vmem:[#allocation2 + $0x14] sm:$0x1]
        %v3228 = vld [vmem:[#allocation2 + $0x18] sm:$0xe]
        %v3229 = vld [vmem:[#allocation2 + $0x1c] sm:$0xf]
        %v3230 = vld [vmem:[#allocation2 + $0x20] sm:$0x1]
        %v3231 = vld [vmem:[#allocation2 + $0x24] sm:$0xe]
        %v3232 = vld [vmem:[#allocation2 + $0x28] sm:$0xf]
        %v3233 = vld [vmem:[#allocation2 + $0x2c] sm:$0x1]
        %v3234 = vld [vmem:[#allocation2 + $0x30] sm:$0xe]
        %v3235 = vld [vmem:[#allocation2 + $0x34] sm:$0xf]
        %v3236 = vld [vmem:[#allocation2 + $0x38] sm:$0x1]
        %v3237 = vld [vmem:[#allocation2 + $0x3c] sm:$0xe]
        %v3238 = vld [vmem:[#allocation2 + $0x40] sm:$0xf]
        %v3239 = vld [vmem:[#allocation2 + $0x44] sm:$0x1]
        %v3240 = vld [vmem:[#allocation2 + $0x48] sm:$0xe]
        %v3241 = vld [vmem:[#allocation2 + $0x4c] sm:$0xf]
        %v3242 = vld [vmem:[#allocation2 + $0x50] sm:$0x1]
        %v3243 = vld [vmem:[#allocation2 + $0x54] sm:$0xe]
        %v3244 = vld [vmem:[#allocation2 + $0x58] sm:$0xf]
        %v3245 = vld [vmem:[#allocation2 + $0x5c] sm:$0x1]
        %v3246 = vld [vmem:[#allocation2 + $0x60] sm:$0xe]
        %v3247 = vld [vmem:[#allocation2 + $0x64] sm:$0xf]
        %v3248 = vld [vmem:[#allocation2 + $0x68] sm:$0x1]
        %v3249 = vld [vmem:[#allocation2 + $0x6c] sm:$0xe]
        %v3250 = vld [vmem:[#allocation2 + $0x70] sm:$0xf]
        %v3251 = vld [vmem:[#allocation2 + $0x74] sm:$0x1]
        %v3252 = vld [vmem:[#allocation2 + $0x78] sm:$0xe]
        %v3253 = vld [vmem:[#allocation2 + $0x7c] sm:$0xf]
        %v3254 = vld [vmem:[#allocation2 + $0x80] sm:$0x1]
        %v3255 = vld [vmem:[#allocation2 + $0x84] sm:$0xe]
        %v3256 = vld [vmem:[#allocation2 + $0x88] sm:$0xf]
        %v3257 = vld [vmem:[#allocation2 + $0x8c] sm:$0x1]
        %v3258 = vld [vmem:[#allocation2 + $0x90] sm:$0xe]
        %v3259 = vld [vmem:[#allocation2 + $0x94] sm:$0xf]
        %v3260 = vld [vmem:[#allocation2 + $0x98] sm:$0x1]
        %v3261 = vld [vmem:[#allocation2 + $0x9c] sm:$0xe]
        %v3262 = vld [vmem:[#allocation2 + $0xa0] sm:$0xf]
        %v3263 = vld [vmem:[#allocation2 + $0xa4] sm:$0x1]
        %v3264 = vld [vmem:[#allocation2 + $0xa8] sm:$0xe]
        %v3265 = vld [vmem:[#allocation2 + $0xac] sm:$0xf]
        %v3266 = vld [vmem:[#allocation2 + $0xb0] sm:$0x1]
        %v3267 = vld [vmem:[#allocation2 + $0xb4] sm:$0xe]
        %v3268 = vld [vmem:[#allocation2 + $0xb8] sm:$0xf]
        %v3269 = vld [vmem:[#allocation2 + $0xbc] sm:$0x1]
        %v3318 = vunpack.c.l.b16 %v3222
        %v3319 = vunpack.c.l.b16 %v3223
        %v3320 = vunpack.c.l.b16 %v3224
        %v3321 = vunpack.c.l.b16 %v3225
        %v3322 = vunpack.c.l.b16 %v3226
        %v3323 = vunpack.c.l.b16 %v3227
        %v3324 = vunpack.c.l.b16 %v3228
        %v3325 = vunpack.c.l.b16 %v3229
        %v3326 = vunpack.c.l.b16 %v3230
        %v3327 = vunpack.c.l.b16 %v3231
        %v3328 = vunpack.c.l.b16 %v3232
        %v3329 = vunpack.c.l.b16 %v3233
        %v3330 = vunpack.c.l.b16 %v3234
        %v3331 = vunpack.c.l.b16 %v3235
        %v3332 = vunpack.c.l.b16 %v3236
        %v3333 = vunpack.c.l.b16 %v3237
        %v3334 = vunpack.c.l.b16 %v3238
        %v3335 = vunpack.c.l.b16 %v3239
        %v3336 = vunpack.c.l.b16 %v3240
        %v3337 = vunpack.c.l.b16 %v3241
        %v3338 = vunpack.c.l.b16 %v3242
        %v3339 = vunpack.c.l.b16 %v3243
        %v3340 = vunpack.c.l.b16 %v3244
        %v3341 = vunpack.c.l.b16 %v3245
        %v3342 = vunpack.c.l.b16 %v3246
        %v3343 = vunpack.c.l.b16 %v3247
        %v3344 = vunpack.c.l.b16 %v3248
        %v3345 = vunpack.c.l.b16 %v3249
        %v3346 = vunpack.c.l.b16 %v3250
        %v3347 = vunpack.c.l.b16 %v3251
        %v3348 = vunpack.c.l.b16 %v3252
        %v3349 = vunpack.c.l.b16 %v3253
        %v3350 = vunpack.c.l.b16 %v3254
        %v3351 = vunpack.c.l.b16 %v3255
        %v3352 = vunpack.c.l.b16 %v3256
        %v3353 = vunpack.c.l.b16 %v3257
        %v3354 = vunpack.c.l.b16 %v3258
        %v3355 = vunpack.c.l.b16 %v3259
        %v3356 = vunpack.c.l.b16 %v3260
        %v3357 = vunpack.c.l.b16 %v3261
        %v3358 = vunpack.c.l.b16 %v3262
        %v3359 = vunpack.c.l.b16 %v3263
        %v3360 = vunpack.c.l.b16 %v3264
        %v3361 = vunpack.c.l.b16 %v3265
        %v3362 = vunpack.c.l.b16 %v3266
        %v3363 = vunpack.c.l.b16 %v3267
        %v3364 = vunpack.c.l.b16 %v3268
        %v3365 = vunpack.c.l.b16 %v3269
        %v3366 = vpack.c.b16 %v3319, %v3318
        %v3367 = vpack.c.b16 %v3320, %v3320
        %v3368 = vpack.c.b16 %v3322, %v3321
        %v3369 = vpack.c.b16 %v3323, %v3323
        %v3370 = vpack.c.b16 %v3325, %v3324
        %v3371 = vpack.c.b16 %v3326, %v3326
        %v3372 = vpack.c.b16 %v3328, %v3327
        %v3373 = vpack.c.b16 %v3329, %v3329
        %v3374 = vpack.c.b16 %v3331, %v3330
        %v3375 = vpack.c.b16 %v3332, %v3332
        %v3376 = vpack.c.b16 %v3334, %v3333
        %v3377 = vpack.c.b16 %v3335, %v3335
        %v3378 = vpack.c.b16 %v3337, %v3336
        %v3379 = vpack.c.b16 %v3338, %v3338
        %v3380 = vpack.c.b16 %v3340, %v3339
        %v3381 = vpack.c.b16 %v3341, %v3341
        %v3382 = vpack.c.b16 %v3343, %v3342
        %v3383 = vpack.c.b16 %v3344, %v3344
        %v3384 = vpack.c.b16 %v3346, %v3345
        %v3385 = vpack.c.b16 %v3347, %v3347
        %v3386 = vpack.c.b16 %v3349, %v3348
        %v3387 = vpack.c.b16 %v3350, %v3350
        %v3388 = vpack.c.b16 %v3352, %v3351
        %v3389 = vpack.c.b16 %v3353, %v3353
        %v3390 = vpack.c.b16 %v3355, %v3354
        %v3391 = vpack.c.b16 %v3356, %v3356
        %v3392 = vpack.c.b16 %v3358, %v3357
        %v3393 = vpack.c.b16 %v3359, %v3359
        %v3394 = vpack.c.b16 %v3361, %v3360
        %v3395 = vpack.c.b16 %v3362, %v3362
        %v3396 = vpack.c.b16 %v3364, %v3363
        %v3397 = vpack.c.b16 %v3365, %v3365
        %vm3398 = vcmask 1046528
        %v3399 = vrot.slane %v3366, 1
        %v3400 = vrot.slane %v3367, 1
        %v3401 = vsel %vm3398, %v3399, %v3400
        %v3402 = vrot.slane %v3368, 1
        %v3403 = vrot.slane %v3369, 1
        %v3404 = vsel %vm3398, %v3402, %v3403
        %v3405 = vrot.slane %v3370, 1
        %v3406 = vrot.slane %v3371, 1
        %v3407 = vsel %vm3398, %v3405, %v3406
        %v3408 = vrot.slane %v3372, 1
        %v3409 = vrot.slane %v3373, 1
        %v3410 = vsel %vm3398, %v3408, %v3409
        %v3411 = vrot.slane %v3374, 1
        %v3412 = vrot.slane %v3375, 1
        %v3413 = vsel %vm3398, %v3411, %v3412
        %v3414 = vrot.slane %v3376, 1
        %v3415 = vrot.slane %v3377, 1
        %v3416 = vsel %vm3398, %v3414, %v3415
        %v3417 = vrot.slane %v3378, 1
        %v3418 = vrot.slane %v3379, 1
        %v3419 = vsel %vm3398, %v3417, %v3418
        %v3420 = vrot.slane %v3380, 1
        %v3421 = vrot.slane %v3381, 1
        %v3422 = vsel %vm3398, %v3420, %v3421
        %v3423 = vrot.slane %v3382, 1
        %v3424 = vrot.slane %v3383, 1
        %v3425 = vsel %vm3398, %v3423, %v3424
        %v3426 = vrot.slane %v3384, 1
        %v3427 = vrot.slane %v3385, 1
        %v3428 = vsel %vm3398, %v3426, %v3427
        %v3429 = vrot.slane %v3386, 1
        %v3430 = vrot.slane %v3387, 1
        %v3431 = vsel %vm3398, %v3429, %v3430
        %v3432 = vrot.slane %v3388, 1
        %v3433 = vrot.slane %v3389, 1
        %v3434 = vsel %vm3398, %v3432, %v3433
        %v3435 = vrot.slane %v3390, 1
        %v3436 = vrot.slane %v3391, 1
        %v3437 = vsel %vm3398, %v3435, %v3436
        %v3438 = vrot.slane %v3392, 1
        %v3439 = vrot.slane %v3393, 1
        %v3440 = vsel %vm3398, %v3438, %v3439
        %v3441 = vrot.slane %v3394, 1
        %v3442 = vrot.slane %v3395, 1
        %v3443 = vsel %vm3398, %v3441, %v3442
        %v3444 = vrot.slane %v3396, 1
        %v3445 = vrot.slane %v3397, 1
        %v3446 = vsel %vm3398, %v3444, %v3445
        %3447 = vrot.lane.b32.xlu0 %v3401, 16
        %v3448 = vpop.permute.xlu0 %3447
        %3449 = vrot.lane.b32.xlu0 %v3404, 16
        %v3450 = vpop.permute.xlu0 %3449
        %3451 = vrot.lane.b32.xlu0 %v3407, 16
        %v3452 = vpop.permute.xlu0 %3451
        %3453 = vrot.lane.b32.xlu0 %v3410, 16
        %v3454 = vpop.permute.xlu0 %3453
        %3455 = vrot.lane.b32.xlu0 %v3413, 16
        %v3456 = vpop.permute.xlu0 %3455
        %3457 = vrot.lane.b32.xlu0 %v3416, 16
        %v3458 = vpop.permute.xlu0 %3457
        %3459 = vrot.lane.b32.xlu0 %v3419, 16
        %v3460 = vpop.permute.xlu0 %3459
        %3461 = vrot.lane.b32.xlu0 %v3422, 16
        %v3462 = vpop.permute.xlu0 %3461
        %3463 = vrot.lane.b32.xlu0 %v3425, 16
        %v3464 = vpop.permute.xlu0 %3463
        %3465 = vrot.lane.b32.xlu0 %v3428, 16
        %v3466 = vpop.permute.xlu0 %3465
        %3467 = vrot.lane.b32.xlu0 %v3431, 16
        %v3468 = vpop.permute.xlu0 %3467
        %3469 = vrot.lane.b32.xlu0 %v3434, 16
        %v3470 = vpop.permute.xlu0 %3469
        %3471 = vrot.lane.b32.xlu0 %v3437, 16
        %v3472 = vpop.permute.xlu0 %3471
        %3473 = vrot.lane.b32.xlu0 %v3440, 16
        %v3474 = vpop.permute.xlu0 %3473
        %3475 = vrot.lane.b32.xlu0 %v3443, 16
        %v3476 = vpop.permute.xlu0 %3475
        %3477 = vrot.lane.b32.xlu0 %v3446, 16
        %v3478 = vpop.permute.xlu0 %3477
        %vm3495 = vcmask 195712
        %3496 = vst.msk [vmem:[#allocation3] sm:$0xff] %vm3495, %v3448
        %3497 = vst.msk [vmem:[#allocation3 + $0x8] sm:$0xff] %vm3495, %v3450
        %3498 = vst.msk [vmem:[#allocation3 + $0x10] sm:$0xff] %vm3495, %v3452
        %3499 = vst.msk [vmem:[#allocation3 + $0x18] sm:$0xff] %vm3495, %v3454
        %3500 = vst.msk [vmem:[#allocation3 + $0x20] sm:$0xff] %vm3495, %v3456
        %3501 = vst.msk [vmem:[#allocation3 + $0x28] sm:$0xff] %vm3495, %v3458
        %3502 = vst.msk [vmem:[#allocation3 + $0x30] sm:$0xff] %vm3495, %v3460
        %3503 = vst.msk [vmem:[#allocation3 + $0x38] sm:$0xff] %vm3495, %v3462
        %3504 = vst.msk [vmem:[#allocation3 + $0x40] sm:$0xff] %vm3495, %v3464
        %3505 = vst.msk [vmem:[#allocation3 + $0x48] sm:$0xff] %vm3495, %v3466
        %3506 = vst.msk [vmem:[#allocation3 + $0x50] sm:$0xff] %vm3495, %v3468
        %3507 = vst.msk [vmem:[#allocation3 + $0x58] sm:$0xff] %vm3495, %v3470
        %3508 = vst.msk [vmem:[#allocation3 + $0x60] sm:$0xff] %vm3495, %v3472
        %3509 = vst.msk [vmem:[#allocation3 + $0x68] sm:$0xff] %vm3495, %v3474
        %3510 = vst.msk [vmem:[#allocation3 + $0x70] sm:$0xff] %vm3495, %v3476
        %3511 = vst.msk [vmem:[#allocation3 + $0x78] sm:$0xff] %vm3495, %v3478
        %s3512 = scalar_lea.vmem [#allocation2], 12
        %v3513 = vld [vmem:[%s3512] sm:$0xf]
        %v3514 = vld [vmem:[%s3512 + $0x4] sm:$0xf]
        %v3515 = vld [vmem:[%s3512 + $0xc] sm:$0xf]
        %v3516 = vld [vmem:[%s3512 + $0x10] sm:$0xf]
        %v3517 = vld [vmem:[%s3512 + $0x18] sm:$0xf]
        %v3518 = vld [vmem:[%s3512 + $0x1c] sm:$0xf]
        %v3519 = vld [vmem:[%s3512 + $0x24] sm:$0xf]
        %v3520 = vld [vmem:[%s3512 + $0x28] sm:$0xf]
        %v3521 = vld [vmem:[%s3512 + $0x30] sm:$0xf]
        %v3522 = vld [vmem:[%s3512 + $0x34] sm:$0xf]
        %v3523 = vld [vmem:[%s3512 + $0x3c] sm:$0xf]
        %v3524 = vld [vmem:[%s3512 + $0x40] sm:$0xf]
        %v3525 = vld [vmem:[%s3512 + $0x48] sm:$0xf]
        %v3526 = vld [vmem:[%s3512 + $0x4c] sm:$0xf]
        %v3527 = vld [vmem:[%s3512 + $0x54] sm:$0xf]
        %v3528 = vld [vmem:[%s3512 + $0x58] sm:$0xf]
        %v3529 = vld [vmem:[%s3512 + $0x60] sm:$0xf]
        %v3530 = vld [vmem:[%s3512 + $0x64] sm:$0xf]
        %v3531 = vld [vmem:[%s3512 + $0x6c] sm:$0xf]
        %v3532 = vld [vmem:[%s3512 + $0x70] sm:$0xf]
        %v3533 = vld [vmem:[%s3512 + $0x78] sm:$0xf]
        %v3534 = vld [vmem:[%s3512 + $0x7c] sm:$0xf]
        %v3535 = vld [vmem:[%s3512 + $0x84] sm:$0xf]
        %v3536 = vld [vmem:[%s3512 + $0x88] sm:$0xf]
        %v3537 = vld [vmem:[%s3512 + $0x90] sm:$0xf]
        %v3538 = vld [vmem:[%s3512 + $0x94] sm:$0xf]
        %v3539 = vld [vmem:[%s3512 + $0x9c] sm:$0xf]
        %v3540 = vld [vmem:[%s3512 + $0xa0] sm:$0xf]
        %v3541 = vld [vmem:[%s3512 + $0xa8] sm:$0xf]
        %v3542 = vld [vmem:[%s3512 + $0xac] sm:$0xf]
        %v3543 = vld [vmem:[%s3512 + $0xb4] sm:$0xf]
        %v3544 = vld [vmem:[%s3512 + $0xb8] sm:$0xf]
        %v3577 = vunpack.c.l.b16 %v3513
        %v3578 = vunpack.c.l.b16 %v3514
        %v3579 = vunpack.c.l.b16 %v3515
        %v3580 = vunpack.c.l.b16 %v3516
        %v3581 = vunpack.c.l.b16 %v3517
        %v3582 = vunpack.c.l.b16 %v3518
        %v3583 = vunpack.c.l.b16 %v3519
        %v3584 = vunpack.c.l.b16 %v3520
        %v3585 = vunpack.c.l.b16 %v3521
        %v3586 = vunpack.c.l.b16 %v3522
        %v3587 = vunpack.c.l.b16 %v3523
        %v3588 = vunpack.c.l.b16 %v3524
        %v3589 = vunpack.c.l.b16 %v3525
        %v3590 = vunpack.c.l.b16 %v3526
        %v3591 = vunpack.c.l.b16 %v3527
        %v3592 = vunpack.c.l.b16 %v3528
        %v3593 = vunpack.c.l.b16 %v3529
        %v3594 = vunpack.c.l.b16 %v3530
        %v3595 = vunpack.c.l.b16 %v3531
        %v3596 = vunpack.c.l.b16 %v3532
        %v3597 = vunpack.c.l.b16 %v3533
        %v3598 = vunpack.c.l.b16 %v3534
        %v3599 = vunpack.c.l.b16 %v3535
        %v3600 = vunpack.c.l.b16 %v3536
        %v3601 = vunpack.c.l.b16 %v3537
        %v3602 = vunpack.c.l.b16 %v3538
        %v3603 = vunpack.c.l.b16 %v3539
        %v3604 = vunpack.c.l.b16 %v3540
        %v3605 = vunpack.c.l.b16 %v3541
        %v3606 = vunpack.c.l.b16 %v3542
        %v3607 = vunpack.c.l.b16 %v3543
        %v3608 = vunpack.c.l.b16 %v3544
        %v3609 = vpack.c.b16 %v3578, %v3577
        %v3610 = vpack.c.b16 %v3580, %v3579
        %v3611 = vpack.c.b16 %v3582, %v3581
        %v3612 = vpack.c.b16 %v3584, %v3583
        %v3613 = vpack.c.b16 %v3586, %v3585
        %v3614 = vpack.c.b16 %v3588, %v3587
        %v3615 = vpack.c.b16 %v3590, %v3589
        %v3616 = vpack.c.b16 %v3592, %v3591
        %v3617 = vpack.c.b16 %v3594, %v3593
        %v3618 = vpack.c.b16 %v3596, %v3595
        %v3619 = vpack.c.b16 %v3598, %v3597
        %v3620 = vpack.c.b16 %v3600, %v3599
        %v3621 = vpack.c.b16 %v3602, %v3601
        %v3622 = vpack.c.b16 %v3604, %v3603
        %v3623 = vpack.c.b16 %v3606, %v3605
        %v3624 = vpack.c.b16 %v3608, %v3607
        %3625 = vrot.lane.b32.xlu0 %v3609, 24
        %v3626 = vpop.permute.xlu0 %3625
        %3627 = vrot.lane.b32.xlu0 %v3610, 24
        %v3628 = vpop.permute.xlu0 %3627
        %3629 = vrot.lane.b32.xlu0 %v3611, 24
        %v3630 = vpop.permute.xlu0 %3629
        %3631 = vrot.lane.b32.xlu0 %v3612, 24
        %v3632 = vpop.permute.xlu0 %3631
        %3633 = vrot.lane.b32.xlu0 %v3613, 24
        %v3634 = vpop.permute.xlu0 %3633
        %3635 = vrot.lane.b32.xlu0 %v3614, 24
        %v3636 = vpop.permute.xlu0 %3635
        %3637 = vrot.lane.b32.xlu0 %v3615, 24
        %v3638 = vpop.permute.xlu0 %3637
        %3639 = vrot.lane.b32.xlu0 %v3616, 24
        %v3640 = vpop.permute.xlu0 %3639
        %3641 = vrot.lane.b32.xlu0 %v3617, 24
        %v3642 = vpop.permute.xlu0 %3641
        %3643 = vrot.lane.b32.xlu0 %v3618, 24
        %v3644 = vpop.permute.xlu0 %3643
        %3645 = vrot.lane.b32.xlu0 %v3619, 24
        %v3646 = vpop.permute.xlu0 %3645
        %3647 = vrot.lane.b32.xlu0 %v3620, 24
        %v3648 = vpop.permute.xlu0 %3647
        %3649 = vrot.lane.b32.xlu0 %v3621, 24
        %v3650 = vpop.permute.xlu0 %3649
        %3651 = vrot.lane.b32.xlu0 %v3622, 24
        %v3652 = vpop.permute.xlu0 %3651
        %3653 = vrot.lane.b32.xlu0 %v3623, 24
        %v3654 = vpop.permute.xlu0 %3653
        %3655 = vrot.lane.b32.xlu0 %v3624, 24
        %v3656 = vpop.permute.xlu0 %3655
        %vm3673 = vcmask 261312
        %3674 = vst.msk [vmem:[#allocation3] sm:$0xff] %vm3673, %v3626
        %3675 = vst.msk [vmem:[#allocation3 + $0x8] sm:$0xff] %vm3673, %v3628
        %3676 = vst.msk [vmem:[#allocation3 + $0x10] sm:$0xff] %vm3673, %v3630
        %3677 = vst.msk [vmem:[#allocation3 + $0x18] sm:$0xff] %vm3673, %v3632
        %3678 = vst.msk [vmem:[#allocation3 + $0x20] sm:$0xff] %vm3673, %v3634
        %3679 = vst.msk [vmem:[#allocation3 + $0x28] sm:$0xff] %vm3673, %v3636
        %3680 = vst.msk [vmem:[#allocation3 + $0x30] sm:$0xff] %vm3673, %v3638
        %3681 = vst.msk [vmem:[#allocation3 + $0x38] sm:$0xff] %vm3673, %v3640
        %3682 = vst.msk [vmem:[#allocation3 + $0x40] sm:$0xff] %vm3673, %v3642
        %3683 = vst.msk [vmem:[#allocation3 + $0x48] sm:$0xff] %vm3673, %v3644
        %3684 = vst.msk [vmem:[#allocation3 + $0x50] sm:$0xff] %vm3673, %v3646
        %3685 = vst.msk [vmem:[#allocation3 + $0x58] sm:$0xff] %vm3673, %v3648
        %3686 = vst.msk [vmem:[#allocation3 + $0x60] sm:$0xff] %vm3673, %v3650
        %3687 = vst.msk [vmem:[#allocation3 + $0x68] sm:$0xff] %vm3673, %v3652
        %3688 = vst.msk [vmem:[#allocation3 + $0x70] sm:$0xff] %vm3673, %v3654
        %3689 = vst.msk [vmem:[#allocation3 + $0x78] sm:$0xff] %vm3673, %v3656
        %v3690 = vld [vmem:[%s3512] sm:$0xf]
        %v3691 = vld [vmem:[%s3512 + $0x4] sm:$0xf]
        %v3692 = vld [vmem:[%s3512 + $0x8] sm:$0x1]
        %v3693 = vld [vmem:[%s3512 + $0xc] sm:$0xf]
        %v3694 = vld [vmem:[%s3512 + $0x10] sm:$0xf]
        %v3695 = vld [vmem:[%s3512 + $0x14] sm:$0x1]
        %v3696 = vld [vmem:[%s3512 + $0x18] sm:$0xf]
        %v3697 = vld [vmem:[%s3512 + $0x1c] sm:$0xf]
        %v3698 = vld [vmem:[%s3512 + $0x20] sm:$0x1]
        %v3699 = vld [vmem:[%s3512 + $0x24] sm:$0xf]
        %v3700 = vld [vmem:[%s3512 + $0x28] sm:$0xf]
        %v3701 = vld [vmem:[%s3512 + $0x2c] sm:$0x1]
        %v3702 = vld [vmem:[%s3512 + $0x30] sm:$0xf]
        %v3703 = vld [vmem:[%s3512 + $0x34] sm:$0xf]
        %v3704 = vld [vmem:[%s3512 + $0x38] sm:$0x1]
        %v3705 = vld [vmem:[%s3512 + $0x3c] sm:$0xf]
        %v3706 = vld [vmem:[%s3512 + $0x40] sm:$0xf]
        %v3707 = vld [vmem:[%s3512 + $0x44] sm:$0x1]
        %v3708 = vld [vmem:[%s3512 + $0x48] sm:$0xf]
        %v3709 = vld [vmem:[%s3512 + $0x4c] sm:$0xf]
        %v3710 = vld [vmem:[%s3512 + $0x50] sm:$0x1]
        %v3711 = vld [vmem:[%s3512 + $0x54] sm:$0xf]
        %v3712 = vld [vmem:[%s3512 + $0x58] sm:$0xf]
        %v3713 = vld [vmem:[%s3512 + $0x5c] sm:$0x1]
        %v3714 = vld [vmem:[%s3512 + $0x60] sm:$0xf]
        %v3715 = vld [vmem:[%s3512 + $0x64] sm:$0xf]
        %v3716 = vld [vmem:[%s3512 + $0x68] sm:$0x1]
        %v3717 = vld [vmem:[%s3512 + $0x6c] sm:$0xf]
        %v3718 = vld [vmem:[%s3512 + $0x70] sm:$0xf]
        %v3719 = vld [vmem:[%s3512 + $0x74] sm:$0x1]
        %v3720 = vld [vmem:[%s3512 + $0x78] sm:$0xf]
        %v3721 = vld [vmem:[%s3512 + $0x7c] sm:$0xf]
        %v3722 = vld [vmem:[%s3512 + $0x80] sm:$0x1]
        %v3723 = vld [vmem:[%s3512 + $0x84] sm:$0xf]
        %v3724 = vld [vmem:[%s3512 + $0x88] sm:$0xf]
        %v3725 = vld [vmem:[%s3512 + $0x8c] sm:$0x1]
        %v3726 = vld [vmem:[%s3512 + $0x90] sm:$0xf]
        %v3727 = vld [vmem:[%s3512 + $0x94] sm:$0xf]
        %v3728 = vld [vmem:[%s3512 + $0x98] sm:$0x1]
        %v3729 = vld [vmem:[%s3512 + $0x9c] sm:$0xf]
        %v3730 = vld [vmem:[%s3512 + $0xa0] sm:$0xf]
        %v3731 = vld [vmem:[%s3512 + $0xa4] sm:$0x1]
        %v3732 = vld [vmem:[%s3512 + $0xa8] sm:$0xf]
        %v3733 = vld [vmem:[%s3512 + $0xac] sm:$0xf]
        %v3734 = vld [vmem:[%s3512 + $0xb0] sm:$0x1]
        %v3735 = vld [vmem:[%s3512 + $0xb4] sm:$0xf]
        %v3736 = vld [vmem:[%s3512 + $0xb8] sm:$0xf]
        %v3737 = vld [vmem:[%s3512 + $0xbc] sm:$0x1]
        %v3786 = vunpack.c.l.b16 %v3690
        %v3787 = vunpack.c.l.b16 %v3691
        %v3788 = vunpack.c.l.b16 %v3692
        %v3789 = vunpack.c.l.b16 %v3693
        %v3790 = vunpack.c.l.b16 %v3694
        %v3791 = vunpack.c.l.b16 %v3695
        %v3792 = vunpack.c.l.b16 %v3696
        %v3793 = vunpack.c.l.b16 %v3697
        %v3794 = vunpack.c.l.b16 %v3698
        %v3795 = vunpack.c.l.b16 %v3699
        %v3796 = vunpack.c.l.b16 %v3700
        %v3797 = vunpack.c.l.b16 %v3701
        %v3798 = vunpack.c.l.b16 %v3702
        %v3799 = vunpack.c.l.b16 %v3703
        %v3800 = vunpack.c.l.b16 %v3704
        %v3801 = vunpack.c.l.b16 %v3705
        %v3802 = vunpack.c.l.b16 %v3706
        %v3803 = vunpack.c.l.b16 %v3707
        %v3804 = vunpack.c.l.b16 %v3708
        %v3805 = vunpack.c.l.b16 %v3709
        %v3806 = vunpack.c.l.b16 %v3710
        %v3807 = vunpack.c.l.b16 %v3711
        %v3808 = vunpack.c.l.b16 %v3712
        %v3809 = vunpack.c.l.b16 %v3713
        %v3810 = vunpack.c.l.b16 %v3714
        %v3811 = vunpack.c.l.b16 %v3715
        %v3812 = vunpack.c.l.b16 %v3716
        %v3813 = vunpack.c.l.b16 %v3717
        %v3814 = vunpack.c.l.b16 %v3718
        %v3815 = vunpack.c.l.b16 %v3719
        %v3816 = vunpack.c.l.b16 %v3720
        %v3817 = vunpack.c.l.b16 %v3721
        %v3818 = vunpack.c.l.b16 %v3722
        %v3819 = vunpack.c.l.b16 %v3723
        %v3820 = vunpack.c.l.b16 %v3724
        %v3821 = vunpack.c.l.b16 %v3725
        %v3822 = vunpack.c.l.b16 %v3726
        %v3823 = vunpack.c.l.b16 %v3727
        %v3824 = vunpack.c.l.b16 %v3728
        %v3825 = vunpack.c.l.b16 %v3729
        %v3826 = vunpack.c.l.b16 %v3730
        %v3827 = vunpack.c.l.b16 %v3731
        %v3828 = vunpack.c.l.b16 %v3732
        %v3829 = vunpack.c.l.b16 %v3733
        %v3830 = vunpack.c.l.b16 %v3734
        %v3831 = vunpack.c.l.b16 %v3735
        %v3832 = vunpack.c.l.b16 %v3736
        %v3833 = vunpack.c.l.b16 %v3737
        %v3834 = vpack.c.b16 %v3787, %v3786
        %v3835 = vpack.c.b16 %v3788, %v3788
        %v3836 = vpack.c.b16 %v3790, %v3789
        %v3837 = vpack.c.b16 %v3791, %v3791
        %v3838 = vpack.c.b16 %v3793, %v3792
        %v3839 = vpack.c.b16 %v3794, %v3794
        %v3840 = vpack.c.b16 %v3796, %v3795
        %v3841 = vpack.c.b16 %v3797, %v3797
        %v3842 = vpack.c.b16 %v3799, %v3798
        %v3843 = vpack.c.b16 %v3800, %v3800
        %v3844 = vpack.c.b16 %v3802, %v3801
        %v3845 = vpack.c.b16 %v3803, %v3803
        %v3846 = vpack.c.b16 %v3805, %v3804
        %v3847 = vpack.c.b16 %v3806, %v3806
        %v3848 = vpack.c.b16 %v3808, %v3807
        %v3849 = vpack.c.b16 %v3809, %v3809
        %v3850 = vpack.c.b16 %v3811, %v3810
        %v3851 = vpack.c.b16 %v3812, %v3812
        %v3852 = vpack.c.b16 %v3814, %v3813
        %v3853 = vpack.c.b16 %v3815, %v3815
        %v3854 = vpack.c.b16 %v3817, %v3816
        %v3855 = vpack.c.b16 %v3818, %v3818
        %v3856 = vpack.c.b16 %v3820, %v3819
        %v3857 = vpack.c.b16 %v3821, %v3821
        %v3858 = vpack.c.b16 %v3823, %v3822
        %v3859 = vpack.c.b16 %v3824, %v3824
        %v3860 = vpack.c.b16 %v3826, %v3825
        %v3861 = vpack.c.b16 %v3827, %v3827
        %v3862 = vpack.c.b16 %v3829, %v3828
        %v3863 = vpack.c.b16 %v3830, %v3830
        %v3864 = vpack.c.b16 %v3832, %v3831
        %v3865 = vpack.c.b16 %v3833, %v3833
        %v3867 = vshrl.u32 %v3834, 16
        %v3869 = vshll.u32 %v3834, 16
        %v3871 = vrot.slane %v3869, 1
        %v3872 = vor.u32 %v3867, %v3871
        %v3874 = vshll.u32 %v3835, 16
        %v3876 = vrot.slane %v3874, 1
        %v3877 = vsel %vm2964, %v3872, %v3876
        %v3879 = vshrl.u32 %v3836, 16
        %v3881 = vshll.u32 %v3836, 16
        %v3883 = vrot.slane %v3881, 1
        %v3884 = vor.u32 %v3879, %v3883
        %v3886 = vshll.u32 %v3837, 16
        %v3888 = vrot.slane %v3886, 1
        %v3889 = vsel %vm2964, %v3884, %v3888
        %v3891 = vshrl.u32 %v3838, 16
        %v3893 = vshll.u32 %v3838, 16
        %v3895 = vrot.slane %v3893, 1
        %v3896 = vor.u32 %v3891, %v3895
        %v3898 = vshll.u32 %v3839, 16
        %v3900 = vrot.slane %v3898, 1
        %v3901 = vsel %vm2964, %v3896, %v3900
        %v3903 = vshrl.u32 %v3840, 16
        %v3905 = vshll.u32 %v3840, 16
        %v3907 = vrot.slane %v3905, 1
        %v3908 = vor.u32 %v3903, %v3907
        %v3910 = vshll.u32 %v3841, 16
        %v3912 = vrot.slane %v3910, 1
        %v3913 = vsel %vm2964, %v3908, %v3912
        %v3915 = vshrl.u32 %v3842, 16
        %v3917 = vshll.u32 %v3842, 16
        %v3919 = vrot.slane %v3917, 1
        %v3920 = vor.u32 %v3915, %v3919
        %v3922 = vshll.u32 %v3843, 16
        %v3924 = vrot.slane %v3922, 1
        %v3925 = vsel %vm2964, %v3920, %v3924
        %v3927 = vshrl.u32 %v3844, 16
        %v3929 = vshll.u32 %v3844, 16
        %v3931 = vrot.slane %v3929, 1
        %v3932 = vor.u32 %v3927, %v3931
        %v3934 = vshll.u32 %v3845, 16
        %v3936 = vrot.slane %v3934, 1
        %v3937 = vsel %vm2964, %v3932, %v3936
        %v3939 = vshrl.u32 %v3846, 16
        %v3941 = vshll.u32 %v3846, 16
        %v3943 = vrot.slane %v3941, 1
        %v3944 = vor.u32 %v3939, %v3943
        %v3946 = vshll.u32 %v3847, 16
        %v3948 = vrot.slane %v3946, 1
        %v3949 = vsel %vm2964, %v3944, %v3948
        %v3951 = vshrl.u32 %v3848, 16
        %v3953 = vshll.u32 %v3848, 16
        %v3955 = vrot.slane %v3953, 1
        %v3956 = vor.u32 %v3951, %v3955
        %v3958 = vshll.u32 %v3849, 16
        %v3960 = vrot.slane %v3958, 1
        %v3961 = vsel %vm2964, %v3956, %v3960
        %v3963 = vshrl.u32 %v3850, 16
        %v3965 = vshll.u32 %v3850, 16
        %v3967 = vrot.slane %v3965, 1
        %v3968 = vor.u32 %v3963, %v3967
        %v3970 = vshll.u32 %v3851, 16
        %v3972 = vrot.slane %v3970, 1
        %v3973 = vsel %vm2964, %v3968, %v3972
        %v3975 = vshrl.u32 %v3852, 16
        %v3977 = vshll.u32 %v3852, 16
        %v3979 = vrot.slane %v3977, 1
        %v3980 = vor.u32 %v3975, %v3979
        %v3982 = vshll.u32 %v3853, 16
        %v3984 = vrot.slane %v3982, 1
        %v3985 = vsel %vm2964, %v3980, %v3984
        %v3987 = vshrl.u32 %v3854, 16
        %v3989 = vshll.u32 %v3854, 16
        %v3991 = vrot.slane %v3989, 1
        %v3992 = vor.u32 %v3987, %v3991
        %v3994 = vshll.u32 %v3855, 16
        %v3996 = vrot.slane %v3994, 1
        %v3997 = vsel %vm2964, %v3992, %v3996
        %v3999 = vshrl.u32 %v3856, 16
        %v4001 = vshll.u32 %v3856, 16
        %v4003 = vrot.slane %v4001, 1
        %v4004 = vor.u32 %v3999, %v4003
        %v4006 = vshll.u32 %v3857, 16
        %v4008 = vrot.slane %v4006, 1
        %v4009 = vsel %vm2964, %v4004, %v4008
        %v4011 = vshrl.u32 %v3858, 16
        %v4013 = vshll.u32 %v3858, 16
        %v4015 = vrot.slane %v4013, 1
        %v4016 = vor.u32 %v4011, %v4015
        %v4018 = vshll.u32 %v3859, 16
        %v4020 = vrot.slane %v4018, 1
        %v4021 = vsel %vm2964, %v4016, %v4020
        %v4023 = vshrl.u32 %v3860, 16
        %v4025 = vshll.u32 %v3860, 16
        %v4027 = vrot.slane %v4025, 1
        %v4028 = vor.u32 %v4023, %v4027
        %v4030 = vshll.u32 %v3861, 16
        %v4032 = vrot.slane %v4030, 1
        %v4033 = vsel %vm2964, %v4028, %v4032
        %v4035 = vshrl.u32 %v3862, 16
        %v4037 = vshll.u32 %v3862, 16
        %v4039 = vrot.slane %v4037, 1
        %v4040 = vor.u32 %v4035, %v4039
        %v4042 = vshll.u32 %v3863, 16
        %v4044 = vrot.slane %v4042, 1
        %v4045 = vsel %vm2964, %v4040, %v4044
        %v4047 = vshrl.u32 %v3864, 16
        %v4049 = vshll.u32 %v3864, 16
        %v4051 = vrot.slane %v4049, 1
        %v4052 = vor.u32 %v4047, %v4051
        %v4054 = vshll.u32 %v3865, 16
        %v4056 = vrot.slane %v4054, 1
        %v4057 = vsel %vm2964, %v4052, %v4056
        %4058 = vrot.lane.b32.xlu0 %v3877, 32
        %v4059 = vpop.permute.xlu0 %4058
        %4060 = vrot.lane.b32.xlu0 %v3889, 32
        %v4061 = vpop.permute.xlu0 %4060
        %4062 = vrot.lane.b32.xlu0 %v3901, 32
        %v4063 = vpop.permute.xlu0 %4062
        %4064 = vrot.lane.b32.xlu0 %v3913, 32
        %v4065 = vpop.permute.xlu0 %4064
        %4066 = vrot.lane.b32.xlu0 %v3925, 32
        %v4067 = vpop.permute.xlu0 %4066
        %4068 = vrot.lane.b32.xlu0 %v3937, 32
        %v4069 = vpop.permute.xlu0 %4068
        %4070 = vrot.lane.b32.xlu0 %v3949, 32
        %v4071 = vpop.permute.xlu0 %4070
        %4072 = vrot.lane.b32.xlu0 %v3961, 32
        %v4073 = vpop.permute.xlu0 %4072
        %4074 = vrot.lane.b32.xlu0 %v3973, 32
        %v4075 = vpop.permute.xlu0 %4074
        %4076 = vrot.lane.b32.xlu0 %v3985, 32
        %v4077 = vpop.permute.xlu0 %4076
        %4078 = vrot.lane.b32.xlu0 %v3997, 32
        %v4079 = vpop.permute.xlu0 %4078
        %4080 = vrot.lane.b32.xlu0 %v4009, 32
        %v4081 = vpop.permute.xlu0 %4080
        %4082 = vrot.lane.b32.xlu0 %v4021, 32
        %v4083 = vpop.permute.xlu0 %4082
        %4084 = vrot.lane.b32.xlu0 %v4033, 32
        %v4085 = vpop.permute.xlu0 %4084
        %4086 = vrot.lane.b32.xlu0 %v4045, 32
        %v4087 = vpop.permute.xlu0 %4086
        %4088 = vrot.lane.b32.xlu0 %v4057, 32
        %v4089 = vpop.permute.xlu0 %4088
        %vm4106 = vcmask 326912
        %4107 = vst.msk [vmem:[#allocation3] sm:$0xff] %vm4106, %v4059
        %4108 = vst.msk [vmem:[#allocation3 + $0x8] sm:$0xff] %vm4106, %v4061
        %4109 = vst.msk [vmem:[#allocation3 + $0x10] sm:$0xff] %vm4106, %v4063
        %4110 = vst.msk [vmem:[#allocation3 + $0x18] sm:$0xff] %vm4106, %v4065
        %4111 = vst.msk [vmem:[#allocation3 + $0x20] sm:$0xff] %vm4106, %v4067
        %4112 = vst.msk [vmem:[#allocation3 + $0x28] sm:$0xff] %vm4106, %v4069
        %4113 = vst.msk [vmem:[#allocation3 + $0x30] sm:$0xff] %vm4106, %v4071
        %4114 = vst.msk [vmem:[#allocation3 + $0x38] sm:$0xff] %vm4106, %v4073
        %4115 = vst.msk [vmem:[#allocation3 + $0x40] sm:$0xff] %vm4106, %v4075
        %4116 = vst.msk [vmem:[#allocation3 + $0x48] sm:$0xff] %vm4106, %v4077
        %4117 = vst.msk [vmem:[#allocation3 + $0x50] sm:$0xff] %vm4106, %v4079
        %4118 = vst.msk [vmem:[#allocation3 + $0x58] sm:$0xff] %vm4106, %v4081
        %4119 = vst.msk [vmem:[#allocation3 + $0x60] sm:$0xff] %vm4106, %v4083
        %4120 = vst.msk [vmem:[#allocation3 + $0x68] sm:$0xff] %vm4106, %v4085
        %4121 = vst.msk [vmem:[#allocation3 + $0x70] sm:$0xff] %vm4106, %v4087
        %4122 = vst.msk [vmem:[#allocation3 + $0x78] sm:$0xff] %vm4106, %v4089
        %v4123 = vld [vmem:[%s3512] sm:$0xe]
        %v4124 = vld [vmem:[%s3512 + $0x4] sm:$0xf]
        %v4125 = vld [vmem:[%s3512 + $0x8] sm:$0x1]
        %v4126 = vld [vmem:[%s3512 + $0xc] sm:$0xe]
        %v4127 = vld [vmem:[%s3512 + $0x10] sm:$0xf]
        %v4128 = vld [vmem:[%s3512 + $0x14] sm:$0x1]
        %v4129 = vld [vmem:[%s3512 + $0x18] sm:$0xe]
        %v4130 = vld [vmem:[%s3512 + $0x1c] sm:$0xf]
        %v4131 = vld [vmem:[%s3512 + $0x20] sm:$0x1]
        %v4132 = vld [vmem:[%s3512 + $0x24] sm:$0xe]
        %v4133 = vld [vmem:[%s3512 + $0x28] sm:$0xf]
        %v4134 = vld [vmem:[%s3512 + $0x2c] sm:$0x1]
        %v4135 = vld [vmem:[%s3512 + $0x30] sm:$0xe]
        %v4136 = vld [vmem:[%s3512 + $0x34] sm:$0xf]
        %v4137 = vld [vmem:[%s3512 + $0x38] sm:$0x1]
        %v4138 = vld [vmem:[%s3512 + $0x3c] sm:$0xe]
        %v4139 = vld [vmem:[%s3512 + $0x40] sm:$0xf]
        %v4140 = vld [vmem:[%s3512 + $0x44] sm:$0x1]
        %v4141 = vld [vmem:[%s3512 + $0x48] sm:$0xe]
        %v4142 = vld [vmem:[%s3512 + $0x4c] sm:$0xf]
        %v4143 = vld [vmem:[%s3512 + $0x50] sm:$0x1]
        %v4144 = vld [vmem:[%s3512 + $0x54] sm:$0xe]
        %v4145 = vld [vmem:[%s3512 + $0x58] sm:$0xf]
        %v4146 = vld [vmem:[%s3512 + $0x5c] sm:$0x1]
        %v4147 = vld [vmem:[%s3512 + $0x60] sm:$0xe]
        %v4148 = vld [vmem:[%s3512 + $0x64] sm:$0xf]
        %v4149 = vld [vmem:[%s3512 + $0x68] sm:$0x1]
        %v4150 = vld [vmem:[%s3512 + $0x6c] sm:$0xe]
        %v4151 = vld [vmem:[%s3512 + $0x70] sm:$0xf]
        %v4152 = vld [vmem:[%s3512 + $0x74] sm:$0x1]
        %v4153 = vld [vmem:[%s3512 + $0x78] sm:$0xe]
        %v4154 = vld [vmem:[%s3512 + $0x7c] sm:$0xf]
        %v4155 = vld [vmem:[%s3512 + $0x80] sm:$0x1]
        %v4156 = vld [vmem:[%s3512 + $0x84] sm:$0xe]
        %v4157 = vld [vmem:[%s3512 + $0x88] sm:$0xf]
        %v4158 = vld [vmem:[%s3512 + $0x8c] sm:$0x1]
        %v4159 = vld [vmem:[%s3512 + $0x90] sm:$0xe]
        %v4160 = vld [vmem:[%s3512 + $0x94] sm:$0xf]
        %v4161 = vld [vmem:[%s3512 + $0x98] sm:$0x1]
        %v4162 = vld [vmem:[%s3512 + $0x9c] sm:$0xe]
        %v4163 = vld [vmem:[%s3512 + $0xa0] sm:$0xf]
        %v4164 = vld [vmem:[%s3512 + $0xa4] sm:$0x1]
        %v4165 = vld [vmem:[%s3512 + $0xa8] sm:$0xe]
        %v4166 = vld [vmem:[%s3512 + $0xac] sm:$0xf]
        %v4167 = vld [vmem:[%s3512 + $0xb0] sm:$0x1]
        %v4168 = vld [vmem:[%s3512 + $0xb4] sm:$0xe]
        %v4169 = vld [vmem:[%s3512 + $0xb8] sm:$0xf]
        %v4170 = vld [vmem:[%s3512 + $0xbc] sm:$0x1]
        %v4219 = vunpack.c.l.b16 %v4123
        %v4220 = vunpack.c.l.b16 %v4124
        %v4221 = vunpack.c.l.b16 %v4125
        %v4222 = vunpack.c.l.b16 %v4126
        %v4223 = vunpack.c.l.b16 %v4127
        %v4224 = vunpack.c.l.b16 %v4128
        %v4225 = vunpack.c.l.b16 %v4129
        %v4226 = vunpack.c.l.b16 %v4130
        %v4227 = vunpack.c.l.b16 %v4131
        %v4228 = vunpack.c.l.b16 %v4132
        %v4229 = vunpack.c.l.b16 %v4133
        %v4230 = vunpack.c.l.b16 %v4134
        %v4231 = vunpack.c.l.b16 %v4135
        %v4232 = vunpack.c.l.b16 %v4136
        %v4233 = vunpack.c.l.b16 %v4137
        %v4234 = vunpack.c.l.b16 %v4138
        %v4235 = vunpack.c.l.b16 %v4139
        %v4236 = vunpack.c.l.b16 %v4140
        %v4237 = vunpack.c.l.b16 %v4141
        %v4238 = vunpack.c.l.b16 %v4142
        %v4239 = vunpack.c.l.b16 %v4143
        %v4240 = vunpack.c.l.b16 %v4144
        %v4241 = vunpack.c.l.b16 %v4145
        %v4242 = vunpack.c.l.b16 %v4146
        %v4243 = vunpack.c.l.b16 %v4147
        %v4244 = vunpack.c.l.b16 %v4148
        %v4245 = vunpack.c.l.b16 %v4149
        %v4246 = vunpack.c.l.b16 %v4150
        %v4247 = vunpack.c.l.b16 %v4151
        %v4248 = vunpack.c.l.b16 %v4152
        %v4249 = vunpack.c.l.b16 %v4153
        %v4250 = vunpack.c.l.b16 %v4154
        %v4251 = vunpack.c.l.b16 %v4155
        %v4252 = vunpack.c.l.b16 %v4156
        %v4253 = vunpack.c.l.b16 %v4157
        %v4254 = vunpack.c.l.b16 %v4158
        %v4255 = vunpack.c.l.b16 %v4159
        %v4256 = vunpack.c.l.b16 %v4160
        %v4257 = vunpack.c.l.b16 %v4161
        %v4258 = vunpack.c.l.b16 %v4162
        %v4259 = vunpack.c.l.b16 %v4163
        %v4260 = vunpack.c.l.b16 %v4164
        %v4261 = vunpack.c.l.b16 %v4165
        %v4262 = vunpack.c.l.b16 %v4166
        %v4263 = vunpack.c.l.b16 %v4167
        %v4264 = vunpack.c.l.b16 %v4168
        %v4265 = vunpack.c.l.b16 %v4169
        %v4266 = vunpack.c.l.b16 %v4170
        %v4267 = vpack.c.b16 %v4220, %v4219
        %v4268 = vpack.c.b16 %v4221, %v4221
        %v4269 = vpack.c.b16 %v4223, %v4222
        %v4270 = vpack.c.b16 %v4224, %v4224
        %v4271 = vpack.c.b16 %v4226, %v4225
        %v4272 = vpack.c.b16 %v4227, %v4227
        %v4273 = vpack.c.b16 %v4229, %v4228
        %v4274 = vpack.c.b16 %v4230, %v4230
        %v4275 = vpack.c.b16 %v4232, %v4231
        %v4276 = vpack.c.b16 %v4233, %v4233
        %v4277 = vpack.c.b16 %v4235, %v4234
        %v4278 = vpack.c.b16 %v4236, %v4236
        %v4279 = vpack.c.b16 %v4238, %v4237
        %v4280 = vpack.c.b16 %v4239, %v4239
        %v4281 = vpack.c.b16 %v4241, %v4240
        %v4282 = vpack.c.b16 %v4242, %v4242
        %v4283 = vpack.c.b16 %v4244, %v4243
        %v4284 = vpack.c.b16 %v4245, %v4245
        %v4285 = vpack.c.b16 %v4247, %v4246
        %v4286 = vpack.c.b16 %v4248, %v4248
        %v4287 = vpack.c.b16 %v4250, %v4249
        %v4288 = vpack.c.b16 %v4251, %v4251
        %v4289 = vpack.c.b16 %v4253, %v4252
        %v4290 = vpack.c.b16 %v4254, %v4254
        %v4291 = vpack.c.b16 %v4256, %v4255
        %v4292 = vpack.c.b16 %v4257, %v4257
        %v4293 = vpack.c.b16 %v4259, %v4258
        %v4294 = vpack.c.b16 %v4260, %v4260
        %v4295 = vpack.c.b16 %v4262, %v4261
        %v4296 = vpack.c.b16 %v4263, %v4263
        %v4297 = vpack.c.b16 %v4265, %v4264
        %v4298 = vpack.c.b16 %v4266, %v4266
        %v4299 = vrot.slane %v4267, 1
        %v4300 = vrot.slane %v4268, 1
        %v4301 = vsel %vm3398, %v4299, %v4300
        %v4302 = vrot.slane %v4269, 1
        %v4303 = vrot.slane %v4270, 1
        %v4304 = vsel %vm3398, %v4302, %v4303
        %v4305 = vrot.slane %v4271, 1
        %v4306 = vrot.slane %v4272, 1
        %v4307 = vsel %vm3398, %v4305, %v4306
        %v4308 = vrot.slane %v4273, 1
        %v4309 = vrot.slane %v4274, 1
        %v4310 = vsel %vm3398, %v4308, %v4309
        %v4311 = vrot.slane %v4275, 1
        %v4312 = vrot.slane %v4276, 1
        %v4313 = vsel %vm3398, %v4311, %v4312
        %v4314 = vrot.slane %v4277, 1
        %v4315 = vrot.slane %v4278, 1
        %v4316 = vsel %vm3398, %v4314, %v4315
        %v4317 = vrot.slane %v4279, 1
        %v4318 = vrot.slane %v4280, 1
        %v4319 = vsel %vm3398, %v4317, %v4318
        %v4320 = vrot.slane %v4281, 1
        %v4321 = vrot.slane %v4282, 1
        %v4322 = vsel %vm3398, %v4320, %v4321
        %v4323 = vrot.slane %v4283, 1
        %v4324 = vrot.slane %v4284, 1
        %v4325 = vsel %vm3398, %v4323, %v4324
        %v4326 = vrot.slane %v4285, 1
        %v4327 = vrot.slane %v4286, 1
        %v4328 = vsel %vm3398, %v4326, %v4327
        %v4329 = vrot.slane %v4287, 1
        %v4330 = vrot.slane %v4288, 1
        %v4331 = vsel %vm3398, %v4329, %v4330
        %v4332 = vrot.slane %v4289, 1
        %v4333 = vrot.slane %v4290, 1
        %v4334 = vsel %vm3398, %v4332, %v4333
        %v4335 = vrot.slane %v4291, 1
        %v4336 = vrot.slane %v4292, 1
        %v4337 = vsel %vm3398, %v4335, %v4336
        %v4338 = vrot.slane %v4293, 1
        %v4339 = vrot.slane %v4294, 1
        %v4340 = vsel %vm3398, %v4338, %v4339
        %v4341 = vrot.slane %v4295, 1
        %v4342 = vrot.slane %v4296, 1
        %v4343 = vsel %vm3398, %v4341, %v4342
        %v4344 = vrot.slane %v4297, 1
        %v4345 = vrot.slane %v4298, 1
        %v4346 = vsel %vm3398, %v4344, %v4345
        %4347 = vrot.lane.b32.xlu0 %v4301, 40
        %v4348 = vpop.permute.xlu0 %4347
        %4349 = vrot.lane.b32.xlu0 %v4304, 40
        %v4350 = vpop.permute.xlu0 %4349
        %4351 = vrot.lane.b32.xlu0 %v4307, 40
        %v4352 = vpop.permute.xlu0 %4351
        %4353 = vrot.lane.b32.xlu0 %v4310, 40
        %v4354 = vpop.permute.xlu0 %4353
        %4355 = vrot.lane.b32.xlu0 %v4313, 40
        %v4356 = vpop.permute.xlu0 %4355
        %4357 = vrot.lane.b32.xlu0 %v4316, 40
        %v4358 = vpop.permute.xlu0 %4357
        %4359 = vrot.lane.b32.xlu0 %v4319, 40
        %v4360 = vpop.permute.xlu0 %4359
        %4361 = vrot.lane.b32.xlu0 %v4322, 40
        %v4362 = vpop.permute.xlu0 %4361
        %4363 = vrot.lane.b32.xlu0 %v4325, 40
        %v4364 = vpop.permute.xlu0 %4363
        %4365 = vrot.lane.b32.xlu0 %v4328, 40
        %v4366 = vpop.permute.xlu0 %4365
        %4367 = vrot.lane.b32.xlu0 %v4331, 40
        %v4368 = vpop.permute.xlu0 %4367
        %4369 = vrot.lane.b32.xlu0 %v4334, 40
        %v4370 = vpop.permute.xlu0 %4369
        %4371 = vrot.lane.b32.xlu0 %v4337, 40
        %v4372 = vpop.permute.xlu0 %4371
        %4373 = vrot.lane.b32.xlu0 %v4340, 40
        %v4374 = vpop.permute.xlu0 %4373
        %4375 = vrot.lane.b32.xlu0 %v4343, 40
        %v4376 = vpop.permute.xlu0 %4375
        %4377 = vrot.lane.b32.xlu0 %v4346, 40
        %v4378 = vpop.permute.xlu0 %4377
        %vm4395 = vcmask 392512
        %4396 = vst.msk [vmem:[#allocation3] sm:$0xff] %vm4395, %v4348
        %4397 = vst.msk [vmem:[#allocation3 + $0x8] sm:$0xff] %vm4395, %v4350
        %4398 = vst.msk [vmem:[#allocation3 + $0x10] sm:$0xff] %vm4395, %v4352
        %4399 = vst.msk [vmem:[#allocation3 + $0x18] sm:$0xff] %vm4395, %v4354
        %4400 = vst.msk [vmem:[#allocation3 + $0x20] sm:$0xff] %vm4395, %v4356
        %4401 = vst.msk [vmem:[#allocation3 + $0x28] sm:$0xff] %vm4395, %v4358
        %4402 = vst.msk [vmem:[#allocation3 + $0x30] sm:$0xff] %vm4395, %v4360
        %4403 = vst.msk [vmem:[#allocation3 + $0x38] sm:$0xff] %vm4395, %v4362
        %4404 = vst.msk [vmem:[#allocation3 + $0x40] sm:$0xff] %vm4395, %v4364
        %4405 = vst.msk [vmem:[#allocation3 + $0x48] sm:$0xff] %vm4395, %v4366
        %4406 = vst.msk [vmem:[#allocation3 + $0x50] sm:$0xff] %vm4395, %v4368
        %4407 = vst.msk [vmem:[#allocation3 + $0x58] sm:$0xff] %vm4395, %v4370
        %4408 = vst.msk [vmem:[#allocation3 + $0x60] sm:$0xff] %vm4395, %v4372
        %4409 = vst.msk [vmem:[#allocation3 + $0x68] sm:$0xff] %vm4395, %v4374
        %4410 = vst.msk [vmem:[#allocation3 + $0x70] sm:$0xff] %vm4395, %v4376
        %4411 = vst.msk [vmem:[#allocation3 + $0x78] sm:$0xff] %vm4395, %v4378
        %s4412 = scalar_lea.vmem [#allocation2], 24
        %v4413 = vld [vmem:[%s4412] sm:$0xf]
        %v4414 = vld [vmem:[%s4412 + $0x4] sm:$0xf]
        %v4415 = vld [vmem:[%s4412 + $0xc] sm:$0xf]
        %v4416 = vld [vmem:[%s4412 + $0x10] sm:$0xf]
        %v4417 = vld [vmem:[%s4412 + $0x18] sm:$0xf]
        %v4418 = vld [vmem:[%s4412 + $0x1c] sm:$0xf]
        %v4419 = vld [vmem:[%s4412 + $0x24] sm:$0xf]
        %v4420 = vld [vmem:[%s4412 + $0x28] sm:$0xf]
        %v4421 = vld [vmem:[%s4412 + $0x30] sm:$0xf]
        %v4422 = vld [vmem:[%s4412 + $0x34] sm:$0xf]
        %v4423 = vld [vmem:[%s4412 + $0x3c] sm:$0xf]
        %v4424 = vld [vmem:[%s4412 + $0x40] sm:$0xf]
        %v4425 = vld [vmem:[%s4412 + $0x48] sm:$0xf]
        %v4426 = vld [vmem:[%s4412 + $0x4c] sm:$0xf]
        %v4427 = vld [vmem:[%s4412 + $0x54] sm:$0xf]
        %v4428 = vld [vmem:[%s4412 + $0x58] sm:$0xf]
        %v4429 = vld [vmem:[%s4412 + $0x60] sm:$0xf]
        %v4430 = vld [vmem:[%s4412 + $0x64] sm:$0xf]
        %v4431 = vld [vmem:[%s4412 + $0x6c] sm:$0xf]
        %v4432 = vld [vmem:[%s4412 + $0x70] sm:$0xf]
        %v4433 = vld [vmem:[%s4412 + $0x78] sm:$0xf]
        %v4434 = vld [vmem:[%s4412 + $0x7c] sm:$0xf]
        %v4435 = vld [vmem:[%s4412 + $0x84] sm:$0xf]
        %v4436 = vld [vmem:[%s4412 + $0x88] sm:$0xf]
        %v4437 = vld [vmem:[%s4412 + $0x90] sm:$0xf]
        %v4438 = vld [vmem:[%s4412 + $0x94] sm:$0xf]
        %v4439 = vld [vmem:[%s4412 + $0x9c] sm:$0xf]
        %v4440 = vld [vmem:[%s4412 + $0xa0] sm:$0xf]
        %v4441 = vld [vmem:[%s4412 + $0xa8] sm:$0xf]
        %v4442 = vld [vmem:[%s4412 + $0xac] sm:$0xf]
        %v4443 = vld [vmem:[%s4412 + $0xb4] sm:$0xf]
        %v4444 = vld [vmem:[%s4412 + $0xb8] sm:$0xf]
        %v4477 = vunpack.c.l.b16 %v4413
        %v4478 = vunpack.c.l.b16 %v4414
        %v4479 = vunpack.c.l.b16 %v4415
        %v4480 = vunpack.c.l.b16 %v4416
        %v4481 = vunpack.c.l.b16 %v4417
        %v4482 = vunpack.c.l.b16 %v4418
        %v4483 = vunpack.c.l.b16 %v4419
        %v4484 = vunpack.c.l.b16 %v4420
        %v4485 = vunpack.c.l.b16 %v4421
        %v4486 = vunpack.c.l.b16 %v4422
        %v4487 = vunpack.c.l.b16 %v4423
        %v4488 = vunpack.c.l.b16 %v4424
        %v4489 = vunpack.c.l.b16 %v4425
        %v4490 = vunpack.c.l.b16 %v4426
        %v4491 = vunpack.c.l.b16 %v4427
        %v4492 = vunpack.c.l.b16 %v4428
        %v4493 = vunpack.c.l.b16 %v4429
        %v4494 = vunpack.c.l.b16 %v4430
        %v4495 = vunpack.c.l.b16 %v4431
        %v4496 = vunpack.c.l.b16 %v4432
        %v4497 = vunpack.c.l.b16 %v4433
        %v4498 = vunpack.c.l.b16 %v4434
        %v4499 = vunpack.c.l.b16 %v4435
        %v4500 = vunpack.c.l.b16 %v4436
        %v4501 = vunpack.c.l.b16 %v4437
        %v4502 = vunpack.c.l.b16 %v4438
        %v4503 = vunpack.c.l.b16 %v4439
        %v4504 = vunpack.c.l.b16 %v4440
        %v4505 = vunpack.c.l.b16 %v4441
        %v4506 = vunpack.c.l.b16 %v4442
        %v4507 = vunpack.c.l.b16 %v4443
        %v4508 = vunpack.c.l.b16 %v4444
        %v4509 = vpack.c.b16 %v4478, %v4477
        %v4510 = vpack.c.b16 %v4480, %v4479
        %v4511 = vpack.c.b16 %v4482, %v4481
        %v4512 = vpack.c.b16 %v4484, %v4483
        %v4513 = vpack.c.b16 %v4486, %v4485
        %v4514 = vpack.c.b16 %v4488, %v4487
        %v4515 = vpack.c.b16 %v4490, %v4489
        %v4516 = vpack.c.b16 %v4492, %v4491
        %v4517 = vpack.c.b16 %v4494, %v4493
        %v4518 = vpack.c.b16 %v4496, %v4495
        %v4519 = vpack.c.b16 %v4498, %v4497
        %v4520 = vpack.c.b16 %v4500, %v4499
        %v4521 = vpack.c.b16 %v4502, %v4501
        %v4522 = vpack.c.b16 %v4504, %v4503
        %v4523 = vpack.c.b16 %v4506, %v4505
        %v4524 = vpack.c.b16 %v4508, %v4507
        %4525 = vrot.lane.b32.xlu0 %v4509, 48
        %v4526 = vpop.permute.xlu0 %4525
        %4527 = vrot.lane.b32.xlu0 %v4510, 48
        %v4528 = vpop.permute.xlu0 %4527
        %4529 = vrot.lane.b32.xlu0 %v4511, 48
        %v4530 = vpop.permute.xlu0 %4529
        %4531 = vrot.lane.b32.xlu0 %v4512, 48
        %v4532 = vpop.permute.xlu0 %4531
        %4533 = vrot.lane.b32.xlu0 %v4513, 48
        %v4534 = vpop.permute.xlu0 %4533
        %4535 = vrot.lane.b32.xlu0 %v4514, 48
        %v4536 = vpop.permute.xlu0 %4535
        %4537 = vrot.lane.b32.xlu0 %v4515, 48
        %v4538 = vpop.permute.xlu0 %4537
        %4539 = vrot.lane.b32.xlu0 %v4516, 48
        %v4540 = vpop.permute.xlu0 %4539
        %4541 = vrot.lane.b32.xlu0 %v4517, 48
        %v4542 = vpop.permute.xlu0 %4541
        %4543 = vrot.lane.b32.xlu0 %v4518, 48
        %v4544 = vpop.permute.xlu0 %4543
        %4545 = vrot.lane.b32.xlu0 %v4519, 48
        %v4546 = vpop.permute.xlu0 %4545
        %4547 = vrot.lane.b32.xlu0 %v4520, 48
        %v4548 = vpop.permute.xlu0 %4547
        %4549 = vrot.lane.b32.xlu0 %v4521, 48
        %v4550 = vpop.permute.xlu0 %4549
        %4551 = vrot.lane.b32.xlu0 %v4522, 48
        %v4552 = vpop.permute.xlu0 %4551
        %4553 = vrot.lane.b32.xlu0 %v4523, 48
        %v4554 = vpop.permute.xlu0 %4553
        %4555 = vrot.lane.b32.xlu0 %v4524, 48
        %v4556 = vpop.permute.xlu0 %4555
        %vm4573 = vcmask 458112
        %4574 = vst.msk [vmem:[#allocation3] sm:$0xff] %vm4573, %v4526
        %4575 = vst.msk [vmem:[#allocation3 + $0x8] sm:$0xff] %vm4573, %v4528
        %4576 = vst.msk [vmem:[#allocation3 + $0x10] sm:$0xff] %vm4573, %v4530
        %4577 = vst.msk [vmem:[#allocation3 + $0x18] sm:$0xff] %vm4573, %v4532
        %4578 = vst.msk [vmem:[#allocation3 + $0x20] sm:$0xff] %vm4573, %v4534
        %4579 = vst.msk [vmem:[#allocation3 + $0x28] sm:$0xff] %vm4573, %v4536
        %4580 = vst.msk [vmem:[#allocation3 + $0x30] sm:$0xff] %vm4573, %v4538
        %4581 = vst.msk [vmem:[#allocation3 + $0x38] sm:$0xff] %vm4573, %v4540
        %4582 = vst.msk [vmem:[#allocation3 + $0x40] sm:$0xff] %vm4573, %v4542
        %4583 = vst.msk [vmem:[#allocation3 + $0x48] sm:$0xff] %vm4573, %v4544
        %4584 = vst.msk [vmem:[#allocation3 + $0x50] sm:$0xff] %vm4573, %v4546
        %4585 = vst.msk [vmem:[#allocation3 + $0x58] sm:$0xff] %vm4573, %v4548
        %4586 = vst.msk [vmem:[#allocation3 + $0x60] sm:$0xff] %vm4573, %v4550
        %4587 = vst.msk [vmem:[#allocation3 + $0x68] sm:$0xff] %vm4573, %v4552
        %4588 = vst.msk [vmem:[#allocation3 + $0x70] sm:$0xff] %vm4573, %v4554
        %4589 = vst.msk [vmem:[#allocation3 + $0x78] sm:$0xff] %vm4573, %v4556
        %v4590 = vld [vmem:[%s4412] sm:$0xf]
        %v4591 = vld [vmem:[%s4412 + $0x4] sm:$0xf]
        %v4592 = vld [vmem:[%s4412 + $0x8] sm:$0x1]
        %v4593 = vld [vmem:[%s4412 + $0xc] sm:$0xf]
        %v4594 = vld [vmem:[%s4412 + $0x10] sm:$0xf]
        %v4595 = vld [vmem:[%s4412 + $0x14] sm:$0x1]
        %v4596 = vld [vmem:[%s4412 + $0x18] sm:$0xf]
        %v4597 = vld [vmem:[%s4412 + $0x1c] sm:$0xf]
        %v4598 = vld [vmem:[%s4412 + $0x20] sm:$0x1]
        %v4599 = vld [vmem:[%s4412 + $0x24] sm:$0xf]
        %v4600 = vld [vmem:[%s4412 + $0x28] sm:$0xf]
        %v4601 = vld [vmem:[%s4412 + $0x2c] sm:$0x1]
        %v4602 = vld [vmem:[%s4412 + $0x30] sm:$0xf]
        %v4603 = vld [vmem:[%s4412 + $0x34] sm:$0xf]
        %v4604 = vld [vmem:[%s4412 + $0x38] sm:$0x1]
        %v4605 = vld [vmem:[%s4412 + $0x3c] sm:$0xf]
        %v4606 = vld [vmem:[%s4412 + $0x40] sm:$0xf]
        %v4607 = vld [vmem:[%s4412 + $0x44] sm:$0x1]
        %v4608 = vld [vmem:[%s4412 + $0x48] sm:$0xf]
        %v4609 = vld [vmem:[%s4412 + $0x4c] sm:$0xf]
        %v4610 = vld [vmem:[%s4412 + $0x50] sm:$0x1]
        %v4611 = vld [vmem:[%s4412 + $0x54] sm:$0xf]
        %v4612 = vld [vmem:[%s4412 + $0x58] sm:$0xf]
        %v4613 = vld [vmem:[%s4412 + $0x5c] sm:$0x1]
        %v4614 = vld [vmem:[%s4412 + $0x60] sm:$0xf]
        %v4615 = vld [vmem:[%s4412 + $0x64] sm:$0xf]
        %v4616 = vld [vmem:[%s4412 + $0x68] sm:$0x1]
        %v4617 = vld [vmem:[%s4412 + $0x6c] sm:$0xf]
        %v4618 = vld [vmem:[%s4412 + $0x70] sm:$0xf]
        %v4619 = vld [vmem:[%s4412 + $0x74] sm:$0x1]
        %v4620 = vld [vmem:[%s4412 + $0x78] sm:$0xf]
        %v4621 = vld [vmem:[%s4412 + $0x7c] sm:$0xf]
        %v4622 = vld [vmem:[%s4412 + $0x80] sm:$0x1]
        %v4623 = vld [vmem:[%s4412 + $0x84] sm:$0xf]
        %v4624 = vld [vmem:[%s4412 + $0x88] sm:$0xf]
        %v4625 = vld [vmem:[%s4412 + $0x8c] sm:$0x1]
        %v4626 = vld [vmem:[%s4412 + $0x90] sm:$0xf]
        %v4627 = vld [vmem:[%s4412 + $0x94] sm:$0xf]
        %v4628 = vld [vmem:[%s4412 + $0x98] sm:$0x1]
        %v4629 = vld [vmem:[%s4412 + $0x9c] sm:$0xf]
        %v4630 = vld [vmem:[%s4412 + $0xa0] sm:$0xf]
        %v4631 = vld [vmem:[%s4412 + $0xa4] sm:$0x1]
        %v4632 = vld [vmem:[%s4412 + $0xa8] sm:$0xf]
        %v4633 = vld [vmem:[%s4412 + $0xac] sm:$0xf]
        %v4634 = vld [vmem:[%s4412 + $0xb0] sm:$0x1]
        %v4635 = vld [vmem:[%s4412 + $0xb4] sm:$0xf]
        %v4636 = vld [vmem:[%s4412 + $0xb8] sm:$0xf]
        %v4637 = vld [vmem:[%s4412 + $0xbc] sm:$0x1]
        %v4686 = vunpack.c.l.b16 %v4590
        %v4687 = vunpack.c.l.b16 %v4591
        %v4688 = vunpack.c.l.b16 %v4592
        %v4689 = vunpack.c.l.b16 %v4593
        %v4690 = vunpack.c.l.b16 %v4594
        %v4691 = vunpack.c.l.b16 %v4595
        %v4692 = vunpack.c.l.b16 %v4596
        %v4693 = vunpack.c.l.b16 %v4597
        %v4694 = vunpack.c.l.b16 %v4598
        %v4695 = vunpack.c.l.b16 %v4599
        %v4696 = vunpack.c.l.b16 %v4600
        %v4697 = vunpack.c.l.b16 %v4601
        %v4698 = vunpack.c.l.b16 %v4602
        %v4699 = vunpack.c.l.b16 %v4603
        %v4700 = vunpack.c.l.b16 %v4604
        %v4701 = vunpack.c.l.b16 %v4605
        %v4702 = vunpack.c.l.b16 %v4606
        %v4703 = vunpack.c.l.b16 %v4607
        %v4704 = vunpack.c.l.b16 %v4608
        %v4705 = vunpack.c.l.b16 %v4609
        %v4706 = vunpack.c.l.b16 %v4610
        %v4707 = vunpack.c.l.b16 %v4611
        %v4708 = vunpack.c.l.b16 %v4612
        %v4709 = vunpack.c.l.b16 %v4613
        %v4710 = vunpack.c.l.b16 %v4614
        %v4711 = vunpack.c.l.b16 %v4615
        %v4712 = vunpack.c.l.b16 %v4616
        %v4713 = vunpack.c.l.b16 %v4617
        %v4714 = vunpack.c.l.b16 %v4618
        %v4715 = vunpack.c.l.b16 %v4619
        %v4716 = vunpack.c.l.b16 %v4620
        %v4717 = vunpack.c.l.b16 %v4621
        %v4718 = vunpack.c.l.b16 %v4622
        %v4719 = vunpack.c.l.b16 %v4623
        %v4720 = vunpack.c.l.b16 %v4624
        %v4721 = vunpack.c.l.b16 %v4625
        %v4722 = vunpack.c.l.b16 %v4626
        %v4723 = vunpack.c.l.b16 %v4627
        %v4724 = vunpack.c.l.b16 %v4628
        %v4725 = vunpack.c.l.b16 %v4629
        %v4726 = vunpack.c.l.b16 %v4630
        %v4727 = vunpack.c.l.b16 %v4631
        %v4728 = vunpack.c.l.b16 %v4632
        %v4729 = vunpack.c.l.b16 %v4633
        %v4730 = vunpack.c.l.b16 %v4634
        %v4731 = vunpack.c.l.b16 %v4635
        %v4732 = vunpack.c.l.b16 %v4636
        %v4733 = vunpack.c.l.b16 %v4637
        %v4734 = vpack.c.b16 %v4687, %v4686
        %v4735 = vpack.c.b16 %v4688, %v4688
        %v4736 = vpack.c.b16 %v4690, %v4689
        %v4737 = vpack.c.b16 %v4691, %v4691
        %v4738 = vpack.c.b16 %v4693, %v4692
        %v4739 = vpack.c.b16 %v4694, %v4694
        %v4740 = vpack.c.b16 %v4696, %v4695
        %v4741 = vpack.c.b16 %v4697, %v4697
        %v4742 = vpack.c.b16 %v4699, %v4698
        %v4743 = vpack.c.b16 %v4700, %v4700
        %v4744 = vpack.c.b16 %v4702, %v4701
        %v4745 = vpack.c.b16 %v4703, %v4703
        %v4746 = vpack.c.b16 %v4705, %v4704
        %v4747 = vpack.c.b16 %v4706, %v4706
        %v4748 = vpack.c.b16 %v4708, %v4707
        %v4749 = vpack.c.b16 %v4709, %v4709
        %v4750 = vpack.c.b16 %v4711, %v4710
        %v4751 = vpack.c.b16 %v4712, %v4712
        %v4752 = vpack.c.b16 %v4714, %v4713
        %v4753 = vpack.c.b16 %v4715, %v4715
        %v4754 = vpack.c.b16 %v4717, %v4716
        %v4755 = vpack.c.b16 %v4718, %v4718
        %v4756 = vpack.c.b16 %v4720, %v4719
        %v4757 = vpack.c.b16 %v4721, %v4721
        %v4758 = vpack.c.b16 %v4723, %v4722
        %v4759 = vpack.c.b16 %v4724, %v4724
        %v4760 = vpack.c.b16 %v4726, %v4725
        %v4761 = vpack.c.b16 %v4727, %v4727
        %v4762 = vpack.c.b16 %v4729, %v4728
        %v4763 = vpack.c.b16 %v4730, %v4730
        %v4764 = vpack.c.b16 %v4732, %v4731
        %v4765 = vpack.c.b16 %v4733, %v4733
        %v4767 = vshrl.u32 %v4734, 16
        %v4769 = vshll.u32 %v4734, 16
        %v4771 = vrot.slane %v4769, 1
        %v4772 = vor.u32 %v4767, %v4771
        %v4774 = vshll.u32 %v4735, 16
        %v4776 = vrot.slane %v4774, 1
        %v4777 = vsel %vm2964, %v4772, %v4776
        %v4779 = vshrl.u32 %v4736, 16
        %v4781 = vshll.u32 %v4736, 16
        %v4783 = vrot.slane %v4781, 1
        %v4784 = vor.u32 %v4779, %v4783
        %v4786 = vshll.u32 %v4737, 16
        %v4788 = vrot.slane %v4786, 1
        %v4789 = vsel %vm2964, %v4784, %v4788
        %v4791 = vshrl.u32 %v4738, 16
        %v4793 = vshll.u32 %v4738, 16
        %v4795 = vrot.slane %v4793, 1
        %v4796 = vor.u32 %v4791, %v4795
        %v4798 = vshll.u32 %v4739, 16
        %v4800 = vrot.slane %v4798, 1
        %v4801 = vsel %vm2964, %v4796, %v4800
        %v4803 = vshrl.u32 %v4740, 16
        %v4805 = vshll.u32 %v4740, 16
        %v4807 = vrot.slane %v4805, 1
        %v4808 = vor.u32 %v4803, %v4807
        %v4810 = vshll.u32 %v4741, 16
        %v4812 = vrot.slane %v4810, 1
        %v4813 = vsel %vm2964, %v4808, %v4812
        %v4815 = vshrl.u32 %v4742, 16
        %v4817 = vshll.u32 %v4742, 16
        %v4819 = vrot.slane %v4817, 1
        %v4820 = vor.u32 %v4815, %v4819
        %v4822 = vshll.u32 %v4743, 16
        %v4824 = vrot.slane %v4822, 1
        %v4825 = vsel %vm2964, %v4820, %v4824
        %v4827 = vshrl.u32 %v4744, 16
        %v4829 = vshll.u32 %v4744, 16
        %v4831 = vrot.slane %v4829, 1
        %v4832 = vor.u32 %v4827, %v4831
        %v4834 = vshll.u32 %v4745, 16
        %v4836 = vrot.slane %v4834, 1
        %v4837 = vsel %vm2964, %v4832, %v4836
        %v4839 = vshrl.u32 %v4746, 16
        %v4841 = vshll.u32 %v4746, 16
        %v4843 = vrot.slane %v4841, 1
        %v4844 = vor.u32 %v4839, %v4843
        %v4846 = vshll.u32 %v4747, 16
        %v4848 = vrot.slane %v4846, 1
        %v4849 = vsel %vm2964, %v4844, %v4848
        %v4851 = vshrl.u32 %v4748, 16
        %v4853 = vshll.u32 %v4748, 16
        %v4855 = vrot.slane %v4853, 1
        %v4856 = vor.u32 %v4851, %v4855
        %v4858 = vshll.u32 %v4749, 16
        %v4860 = vrot.slane %v4858, 1
        %v4861 = vsel %vm2964, %v4856, %v4860
        %v4863 = vshrl.u32 %v4750, 16
        %v4865 = vshll.u32 %v4750, 16
        %v4867 = vrot.slane %v4865, 1
        %v4868 = vor.u32 %v4863, %v4867
        %v4870 = vshll.u32 %v4751, 16
        %v4872 = vrot.slane %v4870, 1
        %v4873 = vsel %vm2964, %v4868, %v4872
        %v4875 = vshrl.u32 %v4752, 16
        %v4877 = vshll.u32 %v4752, 16
        %v4879 = vrot.slane %v4877, 1
        %v4880 = vor.u32 %v4875, %v4879
        %v4882 = vshll.u32 %v4753, 16
        %v4884 = vrot.slane %v4882, 1
        %v4885 = vsel %vm2964, %v4880, %v4884
        %v4887 = vshrl.u32 %v4754, 16
        %v4889 = vshll.u32 %v4754, 16
        %v4891 = vrot.slane %v4889, 1
        %v4892 = vor.u32 %v4887, %v4891
        %v4894 = vshll.u32 %v4755, 16
        %v4896 = vrot.slane %v4894, 1
        %v4897 = vsel %vm2964, %v4892, %v4896
        %v4899 = vshrl.u32 %v4756, 16
        %v4901 = vshll.u32 %v4756, 16
        %v4903 = vrot.slane %v4901, 1
        %v4904 = vor.u32 %v4899, %v4903
        %v4906 = vshll.u32 %v4757, 16
        %v4908 = vrot.slane %v4906, 1
        %v4909 = vsel %vm2964, %v4904, %v4908
        %v4911 = vshrl.u32 %v4758, 16
        %v4913 = vshll.u32 %v4758, 16
        %v4915 = vrot.slane %v4913, 1
        %v4916 = vor.u32 %v4911, %v4915
        %v4918 = vshll.u32 %v4759, 16
        %v4920 = vrot.slane %v4918, 1
        %v4921 = vsel %vm2964, %v4916, %v4920
        %v4923 = vshrl.u32 %v4760, 16
        %v4925 = vshll.u32 %v4760, 16
        %v4927 = vrot.slane %v4925, 1
        %v4928 = vor.u32 %v4923, %v4927
        %v4930 = vshll.u32 %v4761, 16
        %v4932 = vrot.slane %v4930, 1
        %v4933 = vsel %vm2964, %v4928, %v4932
        %v4935 = vshrl.u32 %v4762, 16
        %v4937 = vshll.u32 %v4762, 16
        %v4939 = vrot.slane %v4937, 1
        %v4940 = vor.u32 %v4935, %v4939
        %v4942 = vshll.u32 %v4763, 16
        %v4944 = vrot.slane %v4942, 1
        %v4945 = vsel %vm2964, %v4940, %v4944
        %v4947 = vshrl.u32 %v4764, 16
        %v4949 = vshll.u32 %v4764, 16
        %v4951 = vrot.slane %v4949, 1
        %v4952 = vor.u32 %v4947, %v4951
        %v4954 = vshll.u32 %v4765, 16
        %v4956 = vrot.slane %v4954, 1
        %v4957 = vsel %vm2964, %v4952, %v4956
        %4958 = vrot.lane.b32.xlu0 %v4777, 56
        %v4959 = vpop.permute.xlu0 %4958
        %4960 = vrot.lane.b32.xlu0 %v4789, 56
        %v4961 = vpop.permute.xlu0 %4960
        %4962 = vrot.lane.b32.xlu0 %v4801, 56
        %v4963 = vpop.permute.xlu0 %4962
        %4964 = vrot.lane.b32.xlu0 %v4813, 56
        %v4965 = vpop.permute.xlu0 %4964
        %4966 = vrot.lane.b32.xlu0 %v4825, 56
        %v4967 = vpop.permute.xlu0 %4966
        %4968 = vrot.lane.b32.xlu0 %v4837, 56
        %v4969 = vpop.permute.xlu0 %4968
        %4970 = vrot.lane.b32.xlu0 %v4849, 56
        %v4971 = vpop.permute.xlu0 %4970
        %4972 = vrot.lane.b32.xlu0 %v4861, 56
        %v4973 = vpop.permute.xlu0 %4972
        %4974 = vrot.lane.b32.xlu0 %v4873, 56
        %v4975 = vpop.permute.xlu0 %4974
        %4976 = vrot.lane.b32.xlu0 %v4885, 56
        %v4977 = vpop.permute.xlu0 %4976
        %4978 = vrot.lane.b32.xlu0 %v4897, 56
        %v4979 = vpop.permute.xlu0 %4978
        %4980 = vrot.lane.b32.xlu0 %v4909, 56
        %v4981 = vpop.permute.xlu0 %4980
        %4982 = vrot.lane.b32.xlu0 %v4921, 56
        %v4983 = vpop.permute.xlu0 %4982
        %4984 = vrot.lane.b32.xlu0 %v4933, 56
        %v4985 = vpop.permute.xlu0 %4984
        %4986 = vrot.lane.b32.xlu0 %v4945, 56
        %v4987 = vpop.permute.xlu0 %4986
        %4988 = vrot.lane.b32.xlu0 %v4957, 56
        %v4989 = vpop.permute.xlu0 %4988
        %vm5006 = vcmask 523712
        %5007 = vst.msk [vmem:[#allocation3] sm:$0xff] %vm5006, %v4959
        %5008 = vst.msk [vmem:[#allocation3 + $0x8] sm:$0xff] %vm5006, %v4961
        %5009 = vst.msk [vmem:[#allocation3 + $0x10] sm:$0xff] %vm5006, %v4963
        %5010 = vst.msk [vmem:[#allocation3 + $0x18] sm:$0xff] %vm5006, %v4965
        %5011 = vst.msk [vmem:[#allocation3 + $0x20] sm:$0xff] %vm5006, %v4967
        %5012 = vst.msk [vmem:[#allocation3 + $0x28] sm:$0xff] %vm5006, %v4969
        %5013 = vst.msk [vmem:[#allocation3 + $0x30] sm:$0xff] %vm5006, %v4971
        %5014 = vst.msk [vmem:[#allocation3 + $0x38] sm:$0xff] %vm5006, %v4973
        %5015 = vst.msk [vmem:[#allocation3 + $0x40] sm:$0xff] %vm5006, %v4975
        %5016 = vst.msk [vmem:[#allocation3 + $0x48] sm:$0xff] %vm5006, %v4977
        %5017 = vst.msk [vmem:[#allocation3 + $0x50] sm:$0xff] %vm5006, %v4979
        %5018 = vst.msk [vmem:[#allocation3 + $0x58] sm:$0xff] %vm5006, %v4981
        %5019 = vst.msk [vmem:[#allocation3 + $0x60] sm:$0xff] %vm5006, %v4983
        %5020 = vst.msk [vmem:[#allocation3 + $0x68] sm:$0xff] %vm5006, %v4985
        %5021 = vst.msk [vmem:[#allocation3 + $0x70] sm:$0xff] %vm5006, %v4987
        %5022 = vst.msk [vmem:[#allocation3 + $0x78] sm:$0xff] %vm5006, %v4989
        %v5023 = vld [vmem:[%s4412] sm:$0xe]
        %v5024 = vld [vmem:[%s4412 + $0x4] sm:$0xf]
        %v5025 = vld [vmem:[%s4412 + $0x8] sm:$0x1]
        %v5026 = vld [vmem:[%s4412 + $0xc] sm:$0xe]
        %v5027 = vld [vmem:[%s4412 + $0x10] sm:$0xf]
        %v5028 = vld [vmem:[%s4412 + $0x14] sm:$0x1]
        %v5029 = vld [vmem:[%s4412 + $0x18] sm:$0xe]
        %v5030 = vld [vmem:[%s4412 + $0x1c] sm:$0xf]
        %v5031 = vld [vmem:[%s4412 + $0x20] sm:$0x1]
        %v5032 = vld [vmem:[%s4412 + $0x24] sm:$0xe]
        %v5033 = vld [vmem:[%s4412 + $0x28] sm:$0xf]
        %v5034 = vld [vmem:[%s4412 + $0x2c] sm:$0x1]
        %v5035 = vld [vmem:[%s4412 + $0x30] sm:$0xe]
        %v5036 = vld [vmem:[%s4412 + $0x34] sm:$0xf]
        %v5037 = vld [vmem:[%s4412 + $0x38] sm:$0x1]
        %v5038 = vld [vmem:[%s4412 + $0x3c] sm:$0xe]
        %v5039 = vld [vmem:[%s4412 + $0x40] sm:$0xf]
        %v5040 = vld [vmem:[%s4412 + $0x44] sm:$0x1]
        %v5041 = vld [vmem:[%s4412 + $0x48] sm:$0xe]
        %v5042 = vld [vmem:[%s4412 + $0x4c] sm:$0xf]
        %v5043 = vld [vmem:[%s4412 + $0x50] sm:$0x1]
        %v5044 = vld [vmem:[%s4412 + $0x54] sm:$0xe]
        %v5045 = vld [vmem:[%s4412 + $0x58] sm:$0xf]
        %v5046 = vld [vmem:[%s4412 + $0x5c] sm:$0x1]
        %v5047 = vld [vmem:[%s4412 + $0x60] sm:$0xe]
        %v5048 = vld [vmem:[%s4412 + $0x64] sm:$0xf]
        %v5049 = vld [vmem:[%s4412 + $0x68] sm:$0x1]
        %v5050 = vld [vmem:[%s4412 + $0x6c] sm:$0xe]
        %v5051 = vld [vmem:[%s4412 + $0x70] sm:$0xf]
        %v5052 = vld [vmem:[%s4412 + $0x74] sm:$0x1]
        %v5053 = vld [vmem:[%s4412 + $0x78] sm:$0xe]
        %v5054 = vld [vmem:[%s4412 + $0x7c] sm:$0xf]
        %v5055 = vld [vmem:[%s4412 + $0x80] sm:$0x1]
        %v5056 = vld [vmem:[%s4412 + $0x84] sm:$0xe]
        %v5057 = vld [vmem:[%s4412 + $0x88] sm:$0xf]
        %v5058 = vld [vmem:[%s4412 + $0x8c] sm:$0x1]
        %v5059 = vld [vmem:[%s4412 + $0x90] sm:$0xe]
        %v5060 = vld [vmem:[%s4412 + $0x94] sm:$0xf]
        %v5061 = vld [vmem:[%s4412 + $0x98] sm:$0x1]
        %v5062 = vld [vmem:[%s4412 + $0x9c] sm:$0xe]
        %v5063 = vld [vmem:[%s4412 + $0xa0] sm:$0xf]
        %v5064 = vld [vmem:[%s4412 + $0xa4] sm:$0x1]
        %v5065 = vld [vmem:[%s4412 + $0xa8] sm:$0xe]
        %v5066 = vld [vmem:[%s4412 + $0xac] sm:$0xf]
        %v5067 = vld [vmem:[%s4412 + $0xb0] sm:$0x1]
        %v5068 = vld [vmem:[%s4412 + $0xb4] sm:$0xe]
        %v5069 = vld [vmem:[%s4412 + $0xb8] sm:$0xf]
        %v5070 = vld [vmem:[%s4412 + $0xbc] sm:$0x1]
        %v5119 = vunpack.c.l.b16 %v5023
        %v5120 = vunpack.c.l.b16 %v5024
        %v5121 = vunpack.c.l.b16 %v5025
        %v5122 = vunpack.c.l.b16 %v5026
        %v5123 = vunpack.c.l.b16 %v5027
        %v5124 = vunpack.c.l.b16 %v5028
        %v5125 = vunpack.c.l.b16 %v5029
        %v5126 = vunpack.c.l.b16 %v5030
        %v5127 = vunpack.c.l.b16 %v5031
        %v5128 = vunpack.c.l.b16 %v5032
        %v5129 = vunpack.c.l.b16 %v5033
        %v5130 = vunpack.c.l.b16 %v5034
        %v5131 = vunpack.c.l.b16 %v5035
        %v5132 = vunpack.c.l.b16 %v5036
        %v5133 = vunpack.c.l.b16 %v5037
        %v5134 = vunpack.c.l.b16 %v5038
        %v5135 = vunpack.c.l.b16 %v5039
        %v5136 = vunpack.c.l.b16 %v5040
        %v5137 = vunpack.c.l.b16 %v5041
        %v5138 = vunpack.c.l.b16 %v5042
        %v5139 = vunpack.c.l.b16 %v5043
        %v5140 = vunpack.c.l.b16 %v5044
        %v5141 = vunpack.c.l.b16 %v5045
        %v5142 = vunpack.c.l.b16 %v5046
        %v5143 = vunpack.c.l.b16 %v5047
        %v5144 = vunpack.c.l.b16 %v5048
        %v5145 = vunpack.c.l.b16 %v5049
        %v5146 = vunpack.c.l.b16 %v5050
        %v5147 = vunpack.c.l.b16 %v5051
        %v5148 = vunpack.c.l.b16 %v5052
        %v5149 = vunpack.c.l.b16 %v5053
        %v5150 = vunpack.c.l.b16 %v5054
        %v5151 = vunpack.c.l.b16 %v5055
        %v5152 = vunpack.c.l.b16 %v5056
        %v5153 = vunpack.c.l.b16 %v5057
        %v5154 = vunpack.c.l.b16 %v5058
        %v5155 = vunpack.c.l.b16 %v5059
        %v5156 = vunpack.c.l.b16 %v5060
        %v5157 = vunpack.c.l.b16 %v5061
        %v5158 = vunpack.c.l.b16 %v5062
        %v5159 = vunpack.c.l.b16 %v5063
        %v5160 = vunpack.c.l.b16 %v5064
        %v5161 = vunpack.c.l.b16 %v5065
        %v5162 = vunpack.c.l.b16 %v5066
        %v5163 = vunpack.c.l.b16 %v5067
        %v5164 = vunpack.c.l.b16 %v5068
        %v5165 = vunpack.c.l.b16 %v5069
        %v5166 = vunpack.c.l.b16 %v5070
        %v5167 = vpack.c.b16 %v5120, %v5119
        %v5168 = vpack.c.b16 %v5121, %v5121
        %v5169 = vpack.c.b16 %v5123, %v5122
        %v5170 = vpack.c.b16 %v5124, %v5124
        %v5171 = vpack.c.b16 %v5126, %v5125
        %v5172 = vpack.c.b16 %v5127, %v5127
        %v5173 = vpack.c.b16 %v5129, %v5128
        %v5174 = vpack.c.b16 %v5130, %v5130
        %v5175 = vpack.c.b16 %v5132, %v5131
        %v5176 = vpack.c.b16 %v5133, %v5133
        %v5177 = vpack.c.b16 %v5135, %v5134
        %v5178 = vpack.c.b16 %v5136, %v5136
        %v5179 = vpack.c.b16 %v5138, %v5137
        %v5180 = vpack.c.b16 %v5139, %v5139
        %v5181 = vpack.c.b16 %v5141, %v5140
        %v5182 = vpack.c.b16 %v5142, %v5142
        %v5183 = vpack.c.b16 %v5144, %v5143
        %v5184 = vpack.c.b16 %v5145, %v5145
        %v5185 = vpack.c.b16 %v5147, %v5146
        %v5186 = vpack.c.b16 %v5148, %v5148
        %v5187 = vpack.c.b16 %v5150, %v5149
        %v5188 = vpack.c.b16 %v5151, %v5151
        %v5189 = vpack.c.b16 %v5153, %v5152
        %v5190 = vpack.c.b16 %v5154, %v5154
        %v5191 = vpack.c.b16 %v5156, %v5155
        %v5192 = vpack.c.b16 %v5157, %v5157
        %v5193 = vpack.c.b16 %v5159, %v5158
        %v5194 = vpack.c.b16 %v5160, %v5160
        %v5195 = vpack.c.b16 %v5162, %v5161
        %v5196 = vpack.c.b16 %v5163, %v5163
        %v5197 = vpack.c.b16 %v5165, %v5164
        %v5198 = vpack.c.b16 %v5166, %v5166
        %v5199 = vrot.slane %v5167, 1
        %v5200 = vrot.slane %v5168, 1
        %v5201 = vsel %vm3398, %v5199, %v5200
        %v5202 = vrot.slane %v5169, 1
        %v5203 = vrot.slane %v5170, 1
        %v5204 = vsel %vm3398, %v5202, %v5203
        %v5205 = vrot.slane %v5171, 1
        %v5206 = vrot.slane %v5172, 1
        %v5207 = vsel %vm3398, %v5205, %v5206
        %v5208 = vrot.slane %v5173, 1
        %v5209 = vrot.slane %v5174, 1
        %v5210 = vsel %vm3398, %v5208, %v5209
        %v5211 = vrot.slane %v5175, 1
        %v5212 = vrot.slane %v5176, 1
        %v5213 = vsel %vm3398, %v5211, %v5212
        %v5214 = vrot.slane %v5177, 1
        %v5215 = vrot.slane %v5178, 1
        %v5216 = vsel %vm3398, %v5214, %v5215
        %v5217 = vrot.slane %v5179, 1
        %v5218 = vrot.slane %v5180, 1
        %v5219 = vsel %vm3398, %v5217, %v5218
        %v5220 = vrot.slane %v5181, 1
        %v5221 = vrot.slane %v5182, 1
        %v5222 = vsel %vm3398, %v5220, %v5221
        %v5223 = vrot.slane %v5183, 1
        %v5224 = vrot.slane %v5184, 1
        %v5225 = vsel %vm3398, %v5223, %v5224
        %v5226 = vrot.slane %v5185, 1
        %v5227 = vrot.slane %v5186, 1
        %v5228 = vsel %vm3398, %v5226, %v5227
        %v5229 = vrot.slane %v5187, 1
        %v5230 = vrot.slane %v5188, 1
        %v5231 = vsel %vm3398, %v5229, %v5230
        %v5232 = vrot.slane %v5189, 1
        %v5233 = vrot.slane %v5190, 1
        %v5234 = vsel %vm3398, %v5232, %v5233
        %v5235 = vrot.slane %v5191, 1
        %v5236 = vrot.slane %v5192, 1
        %v5237 = vsel %vm3398, %v5235, %v5236
        %v5238 = vrot.slane %v5193, 1
        %v5239 = vrot.slane %v5194, 1
        %v5240 = vsel %vm3398, %v5238, %v5239
        %v5241 = vrot.slane %v5195, 1
        %v5242 = vrot.slane %v5196, 1
        %v5243 = vsel %vm3398, %v5241, %v5242
        %v5244 = vrot.slane %v5197, 1
        %v5245 = vrot.slane %v5198, 1
        %v5246 = vsel %vm3398, %v5244, %v5245
        %5247 = vrot.lane.b32.xlu0 %v5201, 64
        %v5248 = vpop.permute.xlu0 %5247
        %5249 = vrot.lane.b32.xlu0 %v5204, 64
        %v5250 = vpop.permute.xlu0 %5249
        %5251 = vrot.lane.b32.xlu0 %v5207, 64
        %v5252 = vpop.permute.xlu0 %5251
        %5253 = vrot.lane.b32.xlu0 %v5210, 64
        %v5254 = vpop.permute.xlu0 %5253
        %5255 = vrot.lane.b32.xlu0 %v5213, 64
        %v5256 = vpop.permute.xlu0 %5255
        %5257 = vrot.lane.b32.xlu0 %v5216, 64
        %v5258 = vpop.permute.xlu0 %5257
        %5259 = vrot.lane.b32.xlu0 %v5219, 64
        %v5260 = vpop.permute.xlu0 %5259
        %5261 = vrot.lane.b32.xlu0 %v5222, 64
        %v5262 = vpop.permute.xlu0 %5261
        %5263 = vrot.lane.b32.xlu0 %v5225, 64
        %v5264 = vpop.permute.xlu0 %5263
        %5265 = vrot.lane.b32.xlu0 %v5228, 64
        %v5266 = vpop.permute.xlu0 %5265
        %5267 = vrot.lane.b32.xlu0 %v5231, 64
        %v5268 = vpop.permute.xlu0 %5267
        %5269 = vrot.lane.b32.xlu0 %v5234, 64
        %v5270 = vpop.permute.xlu0 %5269
        %5271 = vrot.lane.b32.xlu0 %v5237, 64
        %v5272 = vpop.permute.xlu0 %5271
        %5273 = vrot.lane.b32.xlu0 %v5240, 64
        %v5274 = vpop.permute.xlu0 %5273
        %5275 = vrot.lane.b32.xlu0 %v5243, 64
        %v5276 = vpop.permute.xlu0 %5275
        %5277 = vrot.lane.b32.xlu0 %v5246, 64
        %v5278 = vpop.permute.xlu0 %5277
        %vm5295 = vcmask 589312
        %5296 = vst.msk [vmem:[#allocation3] sm:$0xff] %vm5295, %v5248
        %5297 = vst.msk [vmem:[#allocation3 + $0x8] sm:$0xff] %vm5295, %v5250
        %5298 = vst.msk [vmem:[#allocation3 + $0x10] sm:$0xff] %vm5295, %v5252
        %5299 = vst.msk [vmem:[#allocation3 + $0x18] sm:$0xff] %vm5295, %v5254
        %5300 = vst.msk [vmem:[#allocation3 + $0x20] sm:$0xff] %vm5295, %v5256
        %5301 = vst.msk [vmem:[#allocation3 + $0x28] sm:$0xff] %vm5295, %v5258
        %5302 = vst.msk [vmem:[#allocation3 + $0x30] sm:$0xff] %vm5295, %v5260
        %5303 = vst.msk [vmem:[#allocation3 + $0x38] sm:$0xff] %vm5295, %v5262
        %5304 = vst.msk [vmem:[#allocation3 + $0x40] sm:$0xff] %vm5295, %v5264
        %5305 = vst.msk [vmem:[#allocation3 + $0x48] sm:$0xff] %vm5295, %v5266
        %5306 = vst.msk [vmem:[#allocation3 + $0x50] sm:$0xff] %vm5295, %v5268
        %5307 = vst.msk [vmem:[#allocation3 + $0x58] sm:$0xff] %vm5295, %v5270
        %5308 = vst.msk [vmem:[#allocation3 + $0x60] sm:$0xff] %vm5295, %v5272
        %5309 = vst.msk [vmem:[#allocation3 + $0x68] sm:$0xff] %vm5295, %v5274
        %5310 = vst.msk [vmem:[#allocation3 + $0x70] sm:$0xff] %vm5295, %v5276
        %5311 = vst.msk [vmem:[#allocation3 + $0x78] sm:$0xff] %vm5295, %v5278
        %v5312 = vld [vmem:[#allocation3] sm:$0xff]
        %v5313 = vld [vmem:[#allocation3 + $0x8] sm:$0xff]
        %v5314 = vld [vmem:[#allocation3 + $0x10] sm:$0xff]
        %v5315 = vld [vmem:[#allocation3 + $0x18] sm:$0xff]
        %v5316 = vld [vmem:[#allocation3 + $0x20] sm:$0xff]
        %v5317 = vld [vmem:[#allocation3 + $0x28] sm:$0xff]
        %v5318 = vld [vmem:[#allocation3 + $0x30] sm:$0xff]
        %v5319 = vld [vmem:[#allocation3 + $0x38] sm:$0xff]
        %v5320 = vld [vmem:[#allocation3 + $0x40] sm:$0xff]
        %v5321 = vld [vmem:[#allocation3 + $0x48] sm:$0xff]
        %v5322 = vld [vmem:[#allocation3 + $0x50] sm:$0xff]
        %v5323 = vld [vmem:[#allocation3 + $0x58] sm:$0xff]
        %v5324 = vld [vmem:[#allocation3 + $0x60] sm:$0xff]
        %v5325 = vld [vmem:[#allocation3 + $0x68] sm:$0xff]
        %v5326 = vld [vmem:[#allocation3 + $0x70] sm:$0xff]
        %v5327 = vld [vmem:[#allocation3 + $0x78] sm:$0xff]
        %v5328 = vld [vmem:[%s3] sm:$0xf]
        %v5329 = vld [vmem:[%s3 + $0x4] sm:$0xf]
        %v5330 = vld [vmem:[%s3 + $0x8] sm:$0xf]
        %v5331 = vld [vmem:[%s3 + $0xc] sm:$0xf]
        %v5332 = vld [vmem:[%s3 + $0x10] sm:$0xf]
        %v5333 = vld [vmem:[%s3 + $0x14] sm:$0xf]
        %v5334 = vld [vmem:[%s3 + $0x18] sm:$0xf]
        %v5335 = vld [vmem:[%s3 + $0x1c] sm:$0xf]
        %v5336 = vld [vmem:[%s3 + $0x20] sm:$0xf]
        %v5337 = vld [vmem:[%s4] sm:$0x1]
        %v5339 = vlaneseq
        %v5340 = vshrl.u32 %v5339, 7
        %v5341 = vsub.s32 0, %v5340
        %v5342 = vrot.slane %v5337, %v5341
        %v5353 = vunpack.c.l.b16 %v5328
        %v5354 = vunpack.c.l.b16 %v5329
        %v5355 = vunpack.c.l.b16 %v5330
        %v5356 = vunpack.c.l.b16 %v5331
        %v5357 = vunpack.c.l.b16 %v5332
        %v5358 = vunpack.c.l.b16 %v5333
        %v5359 = vunpack.c.l.b16 %v5334
        %v5360 = vunpack.c.l.b16 %v5335
        %v5361 = vunpack.c.l.b16 %v5336
        %v5362 = vpack.c.b16 %v5354, %v5353
        %v5363 = vpack.c.b16 %v5356, %v5355
        %v5364 = vpack.c.b16 %v5358, %v5357
        %v5365 = vpack.c.b16 %v5360, %v5359
        %v5366 = vpack.c.b16 %v5361, %v5361
        %vm5371 = vcmask 588800
        %v5373 = vsel %vm5371, %v5312, 0
        %v5376 = vsel %vm5371, %v5313, 0
        %v5379 = vsel %vm5371, %v5314, 0
        %v5382 = vsel %vm5371, %v5315, 0
        %v5385 = vsel %vm5371, %v5316, 0
        %v5388 = vsel %vm5371, %v5317, 0
        %v5391 = vsel %vm5371, %v5318, 0
        %v5394 = vsel %vm5371, %v5319, 0
        %v5397 = vsel %vm5371, %v5320, 0
        %v5400 = vsel %vm5371, %v5321, 0
        %v5403 = vsel %vm5371, %v5322, 0
        %v5406 = vsel %vm5371, %v5323, 0
        %v5409 = vsel %vm5371, %v5324, 0
        %v5412 = vsel %vm5371, %v5325, 0
        %v5415 = vsel %vm5371, %v5326, 0
        %v5418 = vsel %vm5371, %v5327, 0
        %vm5420 = vcmask 1043456
        %v5422 = vsel %vm5420, %v5366, 0
        %5424 = vmatprep.subr.bf16.mxu0 0
        %5425 = vmatpush1.bf16.msra.mxu0 %v5362
        %5426 = vmatprep.subr.bf16.mxu0 0
        %5427 = vmatpush1.bf16.msra.mxu0 %v5363
        %5428 = vmatprep.subr.bf16.mxu0 0
        %5429 = vmatpush1.bf16.msra.mxu0 %v5364
        %5430 = vmatprep.subr.bf16.mxu0 0
        %5431 = vmatpush1.bf16.msra.mxu0 %v5365
        %5432 = vmatprep.subr.bf16.mxu0 0
        %5433 = vmatpush1.bf16.msra.mxu0 %v5422
        %5434 = vmatprep.subr.bf16.mxu0 0
        %5435 = vmatpush1.bf16.msra.mxu0 0
        %5436 = vmatprep.subr.bf16.mxu0 0
        %5437 = vmatpush1.bf16.msra.mxu0 0
        %5438 = vmatprep.subr.bf16.mxu0 0
        %5439 = vmatpush1.bf16.msra.mxu0 0
        %5440 = vmatprep.subr.bf16.mxu0 0
        %5441 = vmatpush1.bf16.msra.mxu0 0
        %5442 = vmatprep.subr.bf16.mxu0 0
        %5443 = vmatpush1.bf16.msra.mxu0 0
        %5444 = vmatprep.subr.bf16.mxu0 0
        %5445 = vmatpush1.bf16.msra.mxu0 0
        %5446 = vmatprep.subr.bf16.mxu0 0
        %5447 = vmatpush1.bf16.msra.mxu0 0
        %5448 = vmatprep.subr.bf16.mxu0 0
        %5449 = vmatpush1.bf16.msra.mxu0 0
        %5450 = vmatprep.subr.bf16.mxu0 0
        %5451 = vmatpush1.bf16.msra.mxu0 0
        %5452 = vmatprep.subr.bf16.mxu0 0
        %5453 = vmatpush1.bf16.msra.mxu0 0
        %5454 = vmatprep.subr.bf16.mxu0 0
        %5455 = vmatpush1.bf16.msra.mxu0 0
        %5456 = vmatprep.mubr.bf16.mxu0 0
        %5457 = vmatmul.mubr.bf16.gmra.mrb[0].mxu0 %v5373
        %v5458 = vpop.f32.mrb[0].mxu0
        %v5459 = vadd.f32 %v5342, %v5458
        %v5460 = vpop.f32.mrb[0].mxu0
        %v5461 = vpop.f32.mrb[0].mxu0
        %v5462 = vadd.f32 %v5342, %v5461
        %v5463 = vpop.f32.mrb[0].mxu0
        %5464 = vmatprep.mubr.bf16.mxu0 0
        %5465 = vmatmul.mubr.bf16.gmra.mrb[0].mxu0 %v5376
        %v5466 = vpop.f32.mrb[0].mxu0
        %v5467 = vadd.f32 %v5342, %v5466
        %v5468 = vpop.f32.mrb[0].mxu0
        %v5469 = vpop.f32.mrb[0].mxu0
        %v5470 = vadd.f32 %v5342, %v5469
        %v5471 = vpop.f32.mrb[0].mxu0
        %5472 = vmatprep.mubr.bf16.mxu0 0
        %5473 = vmatmul.mubr.bf16.gmra.mrb[0].mxu0 %v5379
        %v5474 = vpop.f32.mrb[0].mxu0
        %v5475 = vadd.f32 %v5342, %v5474
        %v5476 = vpop.f32.mrb[0].mxu0
        %v5477 = vpop.f32.mrb[0].mxu0
        %v5478 = vadd.f32 %v5342, %v5477
        %v5479 = vpop.f32.mrb[0].mxu0
        %5480 = vmatprep.mubr.bf16.mxu0 0
        %5481 = vmatmul.mubr.bf16.gmra.mrb[0].mxu0 %v5382
        %v5482 = vpop.f32.mrb[0].mxu0
        %v5483 = vadd.f32 %v5342, %v5482
        %v5484 = vpop.f32.mrb[0].mxu0
        %v5485 = vpop.f32.mrb[0].mxu0
        %v5486 = vadd.f32 %v5342, %v5485
        %v5487 = vpop.f32.mrb[0].mxu0
        %5488 = vmatprep.mubr.bf16.mxu0 0
        %5489 = vmatmul.mubr.bf16.gmra.mrb[0].mxu0 %v5385
        %v5490 = vpop.f32.mrb[0].mxu0
        %v5491 = vadd.f32 %v5342, %v5490
        %v5492 = vpop.f32.mrb[0].mxu0
        %v5493 = vpop.f32.mrb[0].mxu0
        %v5494 = vadd.f32 %v5342, %v5493
        %v5495 = vpop.f32.mrb[0].mxu0
        %5496 = vmatprep.mubr.bf16.mxu0 0
        %5497 = vmatmul.mubr.bf16.gmra.mrb[0].mxu0 %v5388
        %v5498 = vpop.f32.mrb[0].mxu0
        %v5499 = vadd.f32 %v5342, %v5498
        %v5500 = vpop.f32.mrb[0].mxu0
        %v5501 = vpop.f32.mrb[0].mxu0
        %v5502 = vadd.f32 %v5342, %v5501
        %v5503 = vpop.f32.mrb[0].mxu0
        %5504 = vmatprep.mubr.bf16.mxu0 0
        %5505 = vmatmul.mubr.bf16.gmra.mrb[0].mxu0 %v5391
        %v5506 = vpop.f32.mrb[0].mxu0
        %v5507 = vadd.f32 %v5342, %v5506
        %v5508 = vpop.f32.mrb[0].mxu0
        %v5509 = vpop.f32.mrb[0].mxu0
        %v5510 = vadd.f32 %v5342, %v5509
        %v5511 = vpop.f32.mrb[0].mxu0
        %5512 = vmatprep.mubr.bf16.mxu0 0
        %5513 = vmatmul.mubr.bf16.gmra.mrb[0].mxu0 %v5394
        %v5514 = vpop.f32.mrb[0].mxu0
        %v5515 = vadd.f32 %v5342, %v5514
        %v5516 = vpop.f32.mrb[0].mxu0
        %v5517 = vpop.f32.mrb[0].mxu0
        %v5518 = vadd.f32 %v5342, %v5517
        %v5519 = vpop.f32.mrb[0].mxu0
        %5520 = vmatprep.mubr.bf16.mxu0 0
        %5521 = vmatmul.mubr.bf16.gmra.mrb[0].mxu0 %v5397
        %v5522 = vpop.f32.mrb[0].mxu0
        %v5523 = vadd.f32 %v5342, %v5522
        %v5524 = vpop.f32.mrb[0].mxu0
        %v5525 = vpop.f32.mrb[0].mxu0
        %v5526 = vadd.f32 %v5342, %v5525
        %v5527 = vpop.f32.mrb[0].mxu0
        %5528 = vmatprep.mubr.bf16.mxu0 0
        %5529 = vmatmul.mubr.bf16.gmra.mrb[0].mxu0 %v5400
        %v5530 = vpop.f32.mrb[0].mxu0
        %v5531 = vadd.f32 %v5342, %v5530
        %v5532 = vpop.f32.mrb[0].mxu0
        %v5533 = vpop.f32.mrb[0].mxu0
        %v5534 = vadd.f32 %v5342, %v5533
        %v5535 = vpop.f32.mrb[0].mxu0
        %5536 = vmatprep.mubr.bf16.mxu0 0
        %5537 = vmatmul.mubr.bf16.gmra.mrb[0].mxu0 %v5403
        %v5538 = vpop.f32.mrb[0].mxu0
        %v5539 = vadd.f32 %v5342, %v5538
        %v5540 = vpop.f32.mrb[0].mxu0
        %v5541 = vpop.f32.mrb[0].mxu0
        %v5542 = vadd.f32 %v5342, %v5541
        %v5543 = vpop.f32.mrb[0].mxu0
        %5544 = vmatprep.mubr.bf16.mxu0 0
        %5545 = vmatmul.mubr.bf16.gmra.mrb[0].mxu0 %v5406
        %v5546 = vpop.f32.mrb[0].mxu0
        %v5547 = vadd.f32 %v5342, %v5546
        %v5548 = vpop.f32.mrb[0].mxu0
        %v5549 = vpop.f32.mrb[0].mxu0
        %v5550 = vadd.f32 %v5342, %v5549
        %v5551 = vpop.f32.mrb[0].mxu0
        %5552 = vmatprep.mubr.bf16.mxu0 0
        %5553 = vmatmul.mubr.bf16.gmra.mrb[0].mxu0 %v5409
        %v5554 = vpop.f32.mrb[0].mxu0
        %v5555 = vadd.f32 %v5342, %v5554
        %v5556 = vpop.f32.mrb[0].mxu0
        %v5557 = vpop.f32.mrb[0].mxu0
        %v5558 = vadd.f32 %v5342, %v5557
        %v5559 = vpop.f32.mrb[0].mxu0
        %5560 = vmatprep.mubr.bf16.mxu0 0
        %5561 = vmatmul.mubr.bf16.gmra.mrb[0].mxu0 %v5412
        %v5562 = vpop.f32.mrb[0].mxu0
        %v5563 = vadd.f32 %v5342, %v5562
        %v5564 = vpop.f32.mrb[0].mxu0
        %v5565 = vpop.f32.mrb[0].mxu0
        %v5566 = vadd.f32 %v5342, %v5565
        %v5567 = vpop.f32.mrb[0].mxu0
        %5568 = vmatprep.mubr.bf16.mxu0 0
        %5569 = vmatmul.mubr.bf16.gmra.mrb[0].mxu0 %v5415
        %v5570 = vpop.f32.mrb[0].mxu0
        %v5571 = vadd.f32 %v5342, %v5570
        %v5572 = vpop.f32.mrb[0].mxu0
        %v5573 = vpop.f32.mrb[0].mxu0
        %v5574 = vadd.f32 %v5342, %v5573
        %v5575 = vpop.f32.mrb[0].mxu0
        %5576 = vmatprep.mubr.bf16.mxu0 0
        %5577 = vmatmul.mubr.bf16.gmra.mrb[0].mxu0 %v5418
        %v5578 = vpop.f32.mrb[0].mxu0
        %v5579 = vadd.f32 %v5342, %v5578
        %v5580 = vpop.f32.mrb[0].mxu0
        %v5581 = vpop.f32.mrb[0].mxu0
        %v5582 = vadd.f32 %v5342, %v5581
        %v5583 = vpop.f32.mrb[0].mxu0
        %5584 = vdwg.mxu0
        %5585 = vst [vmem:[%s231] sm:$0xff] %v5459
        %5586 = vst [vmem:[%s231 + $0x8] sm:$0xff] %v5462
        %5587 = vst [vmem:[%s231 + $0x10] sm:$0xff] %v5467
        %5588 = vst [vmem:[%s231 + $0x18] sm:$0xff] %v5470
        %5589 = vst [vmem:[%s231 + $0x20] sm:$0xff] %v5475
        %5590 = vst [vmem:[%s231 + $0x28] sm:$0xff] %v5478
        %5591 = vst [vmem:[%s231 + $0x30] sm:$0xff] %v5483
        %5592 = vst [vmem:[%s231 + $0x38] sm:$0xff] %v5486
        %5593 = vst [vmem:[%s231 + $0x40] sm:$0xff] %v5491
        %5594 = vst [vmem:[%s231 + $0x48] sm:$0xff] %v5494
        %5595 = vst [vmem:[%s231 + $0x50] sm:$0xff] %v5499
        %5596 = vst [vmem:[%s231 + $0x58] sm:$0xff] %v5502
        %5597 = vst [vmem:[%s231 + $0x60] sm:$0xff] %v5507
        %5598 = vst [vmem:[%s231 + $0x68] sm:$0xff] %v5510
        %5599 = vst [vmem:[%s231 + $0x70] sm:$0xff] %v5515
        %5600 = vst [vmem:[%s231 + $0x78] sm:$0xff] %v5518
        %5601 = vst [vmem:[%s231 + $0x80] sm:$0xff] %v5523
        %5602 = vst [vmem:[%s231 + $0x88] sm:$0xff] %v5526
        %5603 = vst [vmem:[%s231 + $0x90] sm:$0xff] %v5531
        %5604 = vst [vmem:[%s231 + $0x98] sm:$0xff] %v5534
        %5605 = vst [vmem:[%s231 + $0xa0] sm:$0xff] %v5539
        %5606 = vst [vmem:[%s231 + $0xa8] sm:$0xff] %v5542
        %5607 = vst [vmem:[%s231 + $0xb0] sm:$0xff] %v5547
        %5608 = vst [vmem:[%s231 + $0xb8] sm:$0xff] %v5550
        %5609 = vst [vmem:[%s231 + $0xc0] sm:$0xff] %v5555
        %5610 = vst [vmem:[%s231 + $0xc8] sm:$0xff] %v5558
        %5611 = vst [vmem:[%s231 + $0xd0] sm:$0xff] %v5563
        %5612 = vst [vmem:[%s231 + $0xd8] sm:$0xff] %v5566
        %5613 = vst [vmem:[%s231 + $0xe0] sm:$0xff] %v5571
        %5614 = vst [vmem:[%s231 + $0xe8] sm:$0xff] %v5574
        %5615 = vst [vmem:[%s231 + $0xf0] sm:$0xff] %v5579
        %5616 = vst [vmem:[%s231 + $0xf8] sm:$0xff] %v5582
        %s5617 = sand.u32 %s151, 1
        %s5618 = scalar_lea.sflag [#allocation5], %s5617
        %s5619 = sand.u32 %s151, 1
        %s5620 = smul.addr %s5619, 256
        %s5621 = scalar_lea.vmem [#allocation4], %s5620
        // Predicated region
        $region45: #{tpu_custom_call.1} parent=39 // pred_check
          %p5622 = pneg %p161
        $region46: #{tpu_custom_call.1} parent=39 // pred_check_branch
          %5624 = sbr.rel (%p5622) target = $region48
        $region47: #{tpu_custom_call.1} parent=39 // pred_region
          %s5625 = smul.u32 32, %s24
          %s5627 = ssub.s32 4096, 4096
          %5628 = vsyncadd %s5618, %s5627
          %s5629 = smul.addr %s23, 32
          %s5630 = sadd.s32 %s5625, %s5629
          %s5631 = smul.addr %s5630, 128
          %s5632 = scalar_lea.hbm %s5, %s5631
          %s5633 = sshll.u32 %s5621, 4
          %s5634 = int_to_ptr.vmem [resolvable:$true] %s5633
          %5639 = dma.vmem_to_hbm [thread:$0]  %s5634, 4096, %s5632, %s5618, 128, 128, 8
        $region48: #{tpu_custom_call.1} parent=39 // pred_fallthru
          _
      $region40: #{tpu_custom_call.1} parent=5 // pred_fallthru
        _
      %p5640 = scmp.le.s32.totalorder 2, %s14
      // Predicated region
      $region49: #{tpu_custom_call.1} parent=5 // pred_check
        %p5641 = pneg %p5640
      $region50: #{tpu_custom_call.1} parent=5 // pred_check_branch
        %5643 = sbr.rel (%p5641) target = $region52
      $region51: #{tpu_custom_call.1} parent=5 // pred_region
        %s5644 = ssub.s32 %s14, 2
        // Predicated region
        $region53: #{tpu_custom_call.1} parent=51 // pred_check
          %p5645 = pneg %p167
        $region54: #{tpu_custom_call.1} parent=51 // pred_check_branch
          %5647 = sbr.rel (%p5645) target = $region56
        $region55: #{tpu_custom_call.1} parent=51 // pred_region
          %s5648 = sand.u32 %s152, 1
          %s5649 = scalar_lea.sflag [#allocation5], %s5648
          %s5650 = sand.u32 %s152, 1
          %s5651 = smul.addr %s5650, 256
          %s5652 = scalar_lea.vmem [#allocation4], %s5651
          %5653 = dma.done %s5649, 4096
        $region56: #{tpu_custom_call.1} parent=51 // pred_fallthru
          _
      $region52: #{tpu_custom_call.1} parent=5 // pred_fallthru
        _
    $region6: #{tpu_custom_call.1} parent=1 // loop_footer
      %s18 = sadd.s32 1, %s14
    $region7: #{tpu_custom_call.1} parent=1 // loop_footer_branch
      %13 = sbr.rel target = $region3
    $region8: #{tpu_custom_call.1} parent=1 // loop_exit
      _
    %5654 = vsyncpa [#allocation5], 1
    %s5655 = scalar_lea.sflag [#allocation5], 1
    %5656 = vsyncpa %s5655, 1

</llo_original>
